<compile_context>
chip_gen: v7x
topology: tpu7x:2x2x1
jax: 0.10.0
libtpu: 0.0.40
codegen_flags: <defaults>
</compile_context>

<pallas_src>
import functools

import jax
import jax.numpy as jnp
from jax.experimental import pallas as pl
from jax.experimental.pallas import tpu as pltpu

# Deterministic "submodule" parameters (erate_fn / T_fn / model scaling).
ERATE0 = 1.0e-3
ERATE1 = 5.0e-4
T0 = 300.0
T1 = 10.0
T_SCALE = 500.0

_HIGHEST = jax.lax.Precision.HIGHEST


def strain_model_kernel(t_ref, y_ref, wt_ref, msel_ref, v_ref,
                        ydot_ref, jflat_ref):
    t = t_ref[...]                         # (TB, 1)
    y = y_ref[...]                         # (TB, NS)
    WT = wt_ref[...]                       # (NS, NS), WT[j, i] = W[i, j]
    M_sel = msel_ref[...]                  # (NS, NS*NS), M_sel[k, i*NS+j] = W[i,j]*[k==j]
    v = v_ref[...]                         # (1, NS)

    # erate_fn(t), T_fn(t)
    erate = ERATE0 + ERATE1 * t            # (TB, 1)
    T = T0 + T1 * t                        # (TB, 1)
    gT = pl.reciprocal(1.0 + T * (1.0 / T_SCALE))   # (TB, 1); exact

    # Flow rate: tanh (EUP) + MXU matmul with f32 accumulation.
    s = jnp.tanh(y)                        # (TB, NS)
    lin = jax.lax.dot_general(s, WT, (((1,), (0,)), ((), ())),
                              preferred_element_type=jnp.float32,
                              precision=_HIGHEST)        # (TB, NS)
    ydot_ref[...] = (lin * gT + v * erate).astype(ydot_ref.dtype)

    # Analytic Jacobian d ydot / d y as one MXU matmul (no tile / big temporary):
    #   J_flat[b, i*NS+j] = sum_k scaled[b,k] * M_sel[k, i*NS+j]
    #                     = (1 - s[b,j]^2) * gT[b] * W[i,j]
    scaled = (1.0 - s * s) * gT            # (TB, NS)
    jflat_ref[...] = jax.lax.dot_general(
        scaled, M_sel, (((1,), (0,)), ((), ())),
        preferred_element_type=jnp.float32,
        precision=_HIGHEST).astype(jflat_ref.dtype)


def _vmem_budget_bytes():
    """Scoped-VMEM limit to request: half the physical capacity, capped at 64 MiB."""
    try:
        cap = int(pltpu.get_tpu_info().vmem_capacity_bytes)
    except Exception:
        cap = 64 << 20          # conservative (v7x physical)
    return int(min(cap // 2, 64 << 20))   # 64 MiB v5e/v6e, 32 MiB v7x


def _min_grid_steps():
    """>= 2 grid steps per TensorCore so 'parallel' can shard across v7x's 2 TCs."""
    try:
        kind = jax.devices()[0].device_kind.lower()
    except Exception:
        kind = ""
    ntc = 2 if "v7" in kind else 1
    return 2 * ntc


def _pick_tile_b(nb, ns, *, vmem_budget_bytes, min_steps=1, out_itemsize=4,
                 max_j_slab_bytes=12 << 20):
    """Largest batch tile whose full double-buffered footprint fits the budget."""
    invariant = 4 * (ns * ns + ns * ns * ns + ns)          # WT + M_sel + v (f32)

    def fits(tb):
        per_step = (out_itemsize * tb * ns * ns            # J flat block
                    + out_itemsize * tb * ns               # ydot block
                    + 4 * tb * ns                          # y block
                    + 4 * tb)                              # t block
        j_slab = 2 * out_itemsize * tb * ns * ns           # double-buffered J
        return (2 * per_step + invariant <= int(0.8 * vmem_budget_bytes)
                and j_slab <= max_j_slab_bytes)

    cands = [d for d in range(1, nb + 1)
             if nb % d == 0 and (d % 8 == 0 or d == nb)]
    good = [d for d in cands if fits(d) and nb // d >= min_steps]
    if good:
        return max(good)
    ok = [d for d in cands if fits(d)]
    return max(ok) if ok else min(cands)


def strain_based_model(t, y, W, v, *, tile_b=None, out_dtype=jnp.float32):
    """t: (NB,), y: (NB,NS), W: (NS,NS), v: (NS,) -> (ydot (NB,NS), J (NB,NS,NS))."""
    nb, ns = y.shape
    out_itemsize = jnp.dtype(out_dtype).itemsize
    vmem_budget = _vmem_budget_bytes()
    if tile_b is None:
        tile_b = _pick_tile_b(nb, ns, vmem_budget_bytes=vmem_budget,
                              min_steps=_min_grid_steps(),
                              out_itemsize=out_itemsize)
    assert nb % tile_b == 0, (nb, tile_b)

    t2d = t.reshape(nb, 1).astype(jnp.float32)
    y32 = y.astype(jnp.float32)
    W32 = W.astype(jnp.float32)
    WT = W32.T                                  # hoisted: kernel contracts (1,0)
    # Expansion matrix for the Jacobian matmul: M_sel[k, i*NS+j] = W[i,j]*[k==j].
    eye = jnp.eye(ns, dtype=jnp.float32)
    M_sel = (eye[:, None, :] * W32[None, :, :]).reshape(ns, ns * ns)
    v2d = v.reshape(1, ns).astype(jnp.float32)

    cost = pl.CostEstimate(
        flops=2 * nb * ns * ns + 2 * nb * ns * ns * ns + 6 * nb * ns,
        transcendentals=nb * ns + nb,           # tanh + reciprocal
        bytes_accessed=(out_itemsize * nb * ns * ns     # J out
                        + out_itemsize * nb * ns        # ydot out
                        + 4 * nb * ns                   # y in
                        + 4 * nb                        # t in
                        + 4 * (ns * ns + ns ** 3 + ns)),  # WT + M_sel + v
    )

    ydot, j_flat = pl.pallas_call(
        strain_model_kernel,
        out_shape=(
            jax.ShapeDtypeStruct((nb, ns), out_dtype),
            jax.ShapeDtypeStruct((nb, ns * ns), out_dtype),
        ),
        grid=(nb // tile_b,),
        in_specs=[
            pl.BlockSpec((tile_b, 1), lambda i: (i, 0)),        # t
            pl.BlockSpec((tile_b, ns), lambda i: (i, 0)),       # y
            pl.BlockSpec((ns, ns), lambda i: (0, 0)),           # W^T (grid-invariant)
            pl.BlockSpec((ns, ns * ns), lambda i: (0, 0)),      # M_sel (grid-invariant)
            pl.BlockSpec((1, ns), lambda i: (0, 0)),            # v (grid-invariant)
        ],
        out_specs=(
            pl.BlockSpec((tile_b, ns), lambda i: (i, 0)),       # ydot
            pl.BlockSpec((tile_b, ns * ns), lambda i: (i, 0)),  # J, lane-dense flat
        ),
        compiler_params=pltpu.CompilerParams(
            dimension_semantics=("parallel",),
            vmem_limit_bytes=vmem_budget),
        cost_estimate=cost,
    )(t2d, y32, WT, M_sel, v2d)

    # Free contiguous reshape back to the (NB, NS, NS) Jacobian layout.
    return ydot, j_flat.reshape(nb, ns, ns)


def reference(t, y, W, v):
    t = t.astype(jnp.float32)
    erate = ERATE0 + ERATE1 * t
    T = T0 + T1 * t
    gT = 1.0 / (1.0 + T / T_SCALE)
    s = jnp.tanh(y)
    ydot = jnp.einsum("ij,bj->bi", W, s) * gT[:, None] + v[None, :] * erate[:, None]
    J = W[None, :, :] * (1.0 - s * s)[:, None, :] * gT[:, None, None]
    return ydot, J


if __name__ == "__main__":
    nbatch, nstate = 128, 32

    key = jax.random.PRNGKey(0)
    kt, ky, kw, kv = jax.random.split(key, 4)

    t = jax.random.uniform(kt, (nbatch,), jnp.float32, 0.0, 10.0)
    y = jax.random.normal(ky, (nbatch, nstate), jnp.float32)
    W = 0.1 * jax.random.normal(kw, (nstate, nstate), jnp.float32)
    v = jax.random.normal(kv, (nstate,), jnp.float32)

    ydot_ref, J_ref = reference(t, y, W, v)

    # Auto-picked tile (maximal on v5e/v6e, >= 4 grid steps on v7x).
    ydot, J = strain_based_model(t, y, W, v)
    jax.block_until_ready((ydot, J))
    assert ydot.shape == (nbatch, nstate)
    assert J.shape == (nbatch, nstate, nstate)
    assert jnp.allclose(ydot, ydot_ref, atol=1e-5, rtol=1e-5)
    assert jnp.allclose(J, J_ref, atol=1e-5, rtol=1e-5)

    # Forced multi-step grid so the batch pipeline is exercised explicitly.
    ydot2, J2 = strain_based_model(t, y, W, v, tile_b=32)
    jax.block_until_ready((ydot2, J2))
    assert jnp.allclose(ydot2, ydot_ref, atol=1e-5, rtol=1e-5)
    assert jnp.allclose(J2, J_ref, atol=1e-5, rtol=1e-5)

    print("KERNEL_OK")
</pallas_src>

<mosaic_0001>
module attributes {stable_mosaic.version = 11 : i64} {
  func.func @strain_model_kernel(%arg0: i32, %arg1: memref<64x1xf32, #tpu.memory_space<vmem>>, %arg2: memref<64x32xf32, #tpu.memory_space<vmem>>, %arg3: memref<32x32xf32, #tpu.memory_space<vmem>>, %arg4: memref<32x1024xf32, #tpu.memory_space<vmem>>, %arg5: memref<1x32xf32, #tpu.memory_space<vmem>>, %arg6: memref<64x32xf32, #tpu.memory_space<vmem>>, %arg7: memref<64x1024xf32, #tpu.memory_space<vmem>>) attributes {dimension_semantics = [#tpu.dimension_semantics<parallel>], iteration_bounds = array<i64: 2>, scalar_prefetch = 0 : i64, scratch_operands = 0 : i64, tpu.core_type = #tpu.core_type<tc>, window_params = [{transform_indices = @transform_0, window_bounds = array<i64: 64, 1>}, {transform_indices = @transform_1, window_bounds = array<i64: 64, 32>}, {pipeline_mode = #tpu.pipeline_mode<synchronous>, transform_indices = @transform_2, window_bounds = array<i64: 32, 32>}, {pipeline_mode = #tpu.pipeline_mode<synchronous>, transform_indices = @transform_3, window_bounds = array<i64: 32, 1024>}, {pipeline_mode = #tpu.pipeline_mode<synchronous>, transform_indices = @transform_4, window_bounds = array<i64: 1, 32>}, {transform_indices = @transform_5, window_bounds = array<i64: 64, 32>}, {transform_indices = @transform_6, window_bounds = array<i64: 64, 1024>}]} {
    %c0 = arith.constant 0 : index
    %c0_0 = arith.constant 0 : index
    %0 = vector.load %arg1[%c0, %c0_0] : memref<64x1xf32, #tpu.memory_space<vmem>>, vector<64x1xf32>
    %c0_1 = arith.constant 0 : index
    %c0_2 = arith.constant 0 : index
    %1 = vector.load %arg2[%c0_1, %c0_2] : memref<64x32xf32, #tpu.memory_space<vmem>>, vector<64x32xf32>
    %c0_3 = arith.constant 0 : index
    %c0_4 = arith.constant 0 : index
    %2 = vector.load %arg3[%c0_3, %c0_4] : memref<32x32xf32, #tpu.memory_space<vmem>>, vector<32x32xf32>
    %c0_5 = arith.constant 0 : index
    %c0_6 = arith.constant 0 : index
    %3 = vector.load %arg4[%c0_5, %c0_6] : memref<32x1024xf32, #tpu.memory_space<vmem>>, vector<32x1024xf32>
    %c0_7 = arith.constant 0 : index
    %c0_8 = arith.constant 0 : index
    %4 = vector.load %arg5[%c0_7, %c0_8] : memref<1x32xf32, #tpu.memory_space<vmem>>, vector<1x32xf32>
    %cst = arith.constant 5.000000e-04 : f32
    %5 = vector.broadcast %cst : f32 to vector<64x1xf32>
    %6 = arith.mulf %5, %0 : vector<64x1xf32>
    %cst_9 = arith.constant 1.000000e-03 : f32
    %7 = vector.broadcast %cst_9 : f32 to vector<64x1xf32>
    %8 = arith.addf %7, %6 : vector<64x1xf32>
    %cst_10 = arith.constant 1.000000e+01 : f32
    %9 = vector.broadcast %cst_10 : f32 to vector<64x1xf32>
    %10 = arith.mulf %9, %0 : vector<64x1xf32>
    %cst_11 = arith.constant 3.000000e+02 : f32
    %11 = vector.broadcast %cst_11 : f32 to vector<64x1xf32>
    %12 = arith.addf %11, %10 : vector<64x1xf32>
    %cst_12 = arith.constant 2.000000e-03 : f32
    %13 = vector.broadcast %cst_12 : f32 to vector<64x1xf32>
    %14 = arith.mulf %12, %13 : vector<64x1xf32>
    %cst_13 = arith.constant 1.000000e+00 : f32
    %15 = vector.broadcast %cst_13 : f32 to vector<64x1xf32>
    %16 = arith.addf %15, %14 : vector<64x1xf32>
    %17 = tpu.reciprocal %16 : vector<64x1xf32> -> vector<64x1xf32>
    %18 = math.tanh %1 : vector<64x32xf32>
    %cst_14 = arith.constant dense<0.000000e+00> : vector<64x32xf32>
    %19 = tpu.matmul %18, %2, %cst_14 {dimension_numbers = #tpu.dot_dimension_numbers<[1], [0], [0], [1], [0, 0, 1, 1], [], []>, precision = #tpu.contract_precision<fp32>} : vector<64x32xf32>, vector<32x32xf32>, vector<64x32xf32> -> vector<64x32xf32>
    %20 = vector.broadcast %17 : vector<64x1xf32> to vector<64x32xf32>
    %21 = arith.mulf %19, %20 : vector<64x32xf32>
    %22 = vector.broadcast %4 : vector<1x32xf32> to vector<64x32xf32>
    %23 = vector.broadcast %8 : vector<64x1xf32> to vector<64x32xf32>
    %24 = arith.mulf %22, %23 : vector<64x32xf32>
    %25 = arith.addf %21, %24 : vector<64x32xf32>
    %c0_15 = arith.constant 0 : index
    %c0_16 = arith.constant 0 : index
    %26 = vector.load %arg6[%c0_15, %c0_16] : memref<64x32xf32, #tpu.memory_space<vmem>>, vector<64x32xf32>
    tpu.vector_store %arg6[%c0_15, %c0_16], %25 {strides = array<i32>} : memref<64x32xf32, #tpu.memory_space<vmem>>, vector<64x32xf32>,
    %27 = arith.mulf %18, %18 : vector<64x32xf32>
    %cst_17 = arith.constant 1.000000e+00 : f32
    %28 = vector.broadcast %cst_17 : f32 to vector<64x32xf32>
    %29 = arith.subf %28, %27 : vector<64x32xf32>
    %30 = vector.broadcast %17 : vector<64x1xf32> to vector<64x32xf32>
    %31 = arith.mulf %29, %30 : vector<64x32xf32>
    %cst_18 = arith.constant dense<0.000000e+00> : vector<64x1024xf32>
    %32 = tpu.matmul %31, %3, %cst_18 {dimension_numbers = #tpu.dot_dimension_numbers<[1], [0], [0], [1], [0, 0, 1, 1], [], []>, precision = #tpu.contract_precision<fp32>} : vector<64x32xf32>, vector<32x1024xf32>, vector<64x1024xf32> -> vector<64x1024xf32>
    %c0_19 = arith.constant 0 : index
    %c0_20 = arith.constant 0 : index
    %33 = vector.load %arg7[%c0_19, %c0_20] : memref<64x1024xf32, #tpu.memory_space<vmem>>, vector<64x1024xf32>
    tpu.vector_store %arg7[%c0_19, %c0_20], %32 {strides = array<i32>} : memref<64x1024xf32, #tpu.memory_space<vmem>>, vector<64x1024xf32>,
    return
  }
  func.func @transform_0(%arg0: i32) -> (i32, i32) {
    %c0_i32 = arith.constant 0 : i32
    %c0_i32_0 = arith.constant 0 : i32
    return %arg0, %c0_i32 : i32, i32
  }
  func.func @transform_1(%arg0: i32) -> (i32, i32) {
    %c0_i32 = arith.constant 0 : i32
    %c0_i32_0 = arith.constant 0 : i32
    return %arg0, %c0_i32 : i32, i32
  }
  func.func @transform_2(%arg0: i32) -> (i32, i32) {
    %c0_i32 = arith.constant 0 : i32
    %c0_i32_0 = arith.constant 0 : i32
    %c0_i32_1 = arith.constant 0 : i32
    return %c0_i32, %c0_i32_0 : i32, i32
  }
  func.func @transform_3(%arg0: i32) -> (i32, i32) {
    %c0_i32 = arith.constant 0 : i32
    %c0_i32_0 = arith.constant 0 : i32
    %c0_i32_1 = arith.constant 0 : i32
    return %c0_i32, %c0_i32_0 : i32, i32
  }
  func.func @transform_4(%arg0: i32) -> (i32, i32) {
    %c0_i32 = arith.constant 0 : i32
    %c0_i32_0 = arith.constant 0 : i32
    %c0_i32_1 = arith.constant 0 : i32
    return %c0_i32, %c0_i32_0 : i32, i32
  }
  func.func @transform_5(%arg0: i32) -> (i32, i32) {
    %c0_i32 = arith.constant 0 : i32
    %c0_i32_0 = arith.constant 0 : i32
    return %arg0, %c0_i32 : i32, i32
  }
  func.func @transform_6(%arg0: i32) -> (i32, i32) {
    %c0_i32 = arith.constant 0 : i32
    %c0_i32_0 = arith.constant 0 : i32
    return %arg0, %c0_i32 : i32, i32
  }
}

</mosaic_0001>

<llo_original>
// kernel: tpu_custom_call.1
$region0: #{tpu_custom_call.1}
  #allocation0 [shape = 'u32[]', space=smem, size = 0x4, offset = 0x4, fixed_abs, tag = 'smem constant byte address 0x4 - core index']
  #allocation1 [shape = 'u32[144,128]{1,0:T(1,128)}', space=vmem, size = 0x12000, scoped, tag = 'internal scratch']
  %s0 = inlined_call_operand.vmem [shape: f32[128,1], index: 0, kind: input, shape index: {}]
  %s1 = inlined_call_operand.vmem [shape: f32[128,32], index: 1, kind: input, shape index: {}]
  %s2 = inlined_call_operand.vmem [shape: f32[32,32], index: 2, kind: input, shape index: {}]
  %s3 = inlined_call_operand.vmem [shape: f32[32,1024], index: 3, kind: input, shape index: {}]
  %s4 = inlined_call_operand.vmem [shape: f32[1,32], index: 4, kind: input, shape index: {}]
  %s5 = inlined_call_operand.vmem [shape: f32[128,32], index: 5, kind: output, shape index: {0}]
  %s6 = inlined_call_operand.hbm [shape: f32[128,1024], index: 6, kind: output, shape index: {1}]
  %7 = xla_tuple %s5, %s6
  %s8 = sld [smem:[#allocation0]]
  $region61: #{tpu_custom_call.1} parent=0
    _
  %s10 = ssub.s32 1, %s8
  %s11 = scalar_select 0, %s10, %s8
  $region1: #{tpu_custom_call.1} parent=0
    #allocation2 [shape = 'u8[524288]{0}', space=vmem, size = 0x80000, scoped, tag = 'output window, operand 1']
    #allocation3 [shape = 's32[2]{0}', space=sflag, size = 0x8, scoped, tag = 'scoped memory for tpu_custom_call.1']
    %12 = vsyncpa [#allocation3], 0
    %s13 = scalar_lea.sflag [#allocation3], 1
    %14 = vsyncpa %s13, 0
    loop: start=0, step=1, limit=4
    $region2: #{tpu_custom_call.1} parent=1 // loop_pre_header
      _
    $region3: #{tpu_custom_call.1} parent=1 // loop_header
      %s16 = sphi 0, %s20
      %p17 = scmp.ge.s32.totalorder %s16, 4
      %s26 = sphi 0, %s28
      %s29 = sphi 0, %s26
      %s30 = sphi 0, %s29
      %s46 = sphi 0, %s30
      %s52 = sphi 0, %s54
      %s55 = sphi 0, %s52
      %s56 = sphi 0, %s55
      %s72 = sphi 0, %s56
      %s76 = sphi 0, %s76
      %s78 = sphi 0, %s76
      %s79 = sphi 0, %s78
      %s93 = sphi 0, %s79
      %s97 = sphi 0, %s97
      %s99 = sphi 0, %s97
      %s100 = sphi 0, %s99
      %s114 = sphi 0, %s100
      %s118 = sphi 0, %s118
      %s120 = sphi 0, %s118
      %s121 = sphi 0, %s120
      %s135 = sphi 0, %s121
      %s141 = sphi 0, %s143
      %s144 = sphi 0, %s141
      %s145 = sphi 0, %s144
      %s161 = sphi 0, %s145
      %s167 = sphi 0, %s169
      %s170 = sphi 0, %s167
      %s171 = sphi 0, %s170
      %s187 = sphi 0, %s171
    $region4: #{tpu_custom_call.1} parent=1 // loop_header_branch
      %19 = sbr.rel (%p17) target = $region8
    $region5: #{tpu_custom_call.1} parent=1 // loop_body
      %s21 = ssub.s32 %s16, 1
      %s22 = ssub.s32 %s16, 2
      %s23 = sadd.s32 %s16, 1
      %s24 = ssub.s32 %s16, %s23
      %p25 = scmp.eq.s32.totalorder %s24, 0
      %s27 = sadd.s32 %s26, 1
      %s28 = scalar_select %p25, %s26, %s27
      %p31 = pneg %p25
      %p32 = scmp.eq.s32.totalorder %s16, 1
      %p33 = por %p31, %p32
      %p34 = scmp.ne.s32.totalorder %s26, %s29
      %p35 = scmp.eq.s32.totalorder %s16, 0
      %p36 = por %p34, %p35
      %p37 = scmp.ne.s32.totalorder %s26, %s29
      %p38 = scmp.eq.s32.totalorder %s21, 1
      %p39 = por %p37, %p38
      %p40 = scmp.ne.s32.totalorder %s29, %s30
      %p41 = scmp.eq.s32.totalorder %s21, 0
      %p42 = por %p40, %p41
      %p43 = scmp.ne.s32.totalorder %s29, %s30
      %p44 = scmp.eq.s32.totalorder %s22, 1
      %p45 = por %p43, %p44
      %p47 = scmp.ne.s32.totalorder %s30, %s46
      %p48 = scmp.eq.s32.totalorder %s22, 0
      %p49 = por %p47, %p48
      %s50 = ssub.s32 %s16, %s23
      %p51 = scmp.eq.s32.totalorder %s50, 0
      %s53 = sadd.s32 %s52, 1
      %s54 = scalar_select %p51, %s52, %s53
      %p57 = pneg %p51
      %p58 = scmp.eq.s32.totalorder %s16, 1
      %p59 = por %p57, %p58
      %p60 = scmp.ne.s32.totalorder %s52, %s55
      %p61 = scmp.eq.s32.totalorder %s16, 0
      %p62 = por %p60, %p61
      %p63 = scmp.ne.s32.totalorder %s52, %s55
      %p64 = scmp.eq.s32.totalorder %s21, 1
      %p65 = por %p63, %p64
      %p66 = scmp.ne.s32.totalorder %s55, %s56
      %p67 = scmp.eq.s32.totalorder %s21, 0
      %p68 = por %p66, %p67
      %p69 = scmp.ne.s32.totalorder %s55, %s56
      %p70 = scmp.eq.s32.totalorder %s22, 1
      %p71 = por %p69, %p70
      %p73 = scmp.ne.s32.totalorder %s56, %s72
      %p74 = scmp.eq.s32.totalorder %s22, 0
      %p75 = por %p73, %p74
      %s77 = sadd.s32 %s76, 1
      %p80 = scmp.eq.s32.totalorder %s16, 1
      %p81 = scmp.ne.s32.totalorder %s76, %s78
      %p82 = scmp.eq.s32.totalorder %s16, 0
      %p83 = por %p81, %p82
      %p84 = scmp.ne.s32.totalorder %s76, %s78
      %p85 = scmp.eq.s32.totalorder %s21, 1
      %p86 = por %p84, %p85
      %p87 = scmp.ne.s32.totalorder %s78, %s79
      %p88 = scmp.eq.s32.totalorder %s21, 0
      %p89 = por %p87, %p88
      %p90 = scmp.ne.s32.totalorder %s78, %s79
      %p91 = scmp.eq.s32.totalorder %s22, 1
      %p92 = por %p90, %p91
      %p94 = scmp.ne.s32.totalorder %s79, %s93
      %p95 = scmp.eq.s32.totalorder %s22, 0
      %p96 = por %p94, %p95
      %s98 = sadd.s32 %s97, 1
      %p101 = scmp.eq.s32.totalorder %s16, 1
      %p102 = scmp.ne.s32.totalorder %s97, %s99
      %p103 = scmp.eq.s32.totalorder %s16, 0
      %p104 = por %p102, %p103
      %p105 = scmp.ne.s32.totalorder %s97, %s99
      %p106 = scmp.eq.s32.totalorder %s21, 1
      %p107 = por %p105, %p106
      %p108 = scmp.ne.s32.totalorder %s99, %s100
      %p109 = scmp.eq.s32.totalorder %s21, 0
      %p110 = por %p108, %p109
      %p111 = scmp.ne.s32.totalorder %s99, %s100
      %p112 = scmp.eq.s32.totalorder %s22, 1
      %p113 = por %p111, %p112
      %p115 = scmp.ne.s32.totalorder %s100, %s114
      %p116 = scmp.eq.s32.totalorder %s22, 0
      %p117 = por %p115, %p116
      %s119 = sadd.s32 %s118, 1
      %p122 = scmp.eq.s32.totalorder %s16, 1
      %p123 = scmp.ne.s32.totalorder %s118, %s120
      %p124 = scmp.eq.s32.totalorder %s16, 0
      %p125 = por %p123, %p124
      %p126 = scmp.ne.s32.totalorder %s118, %s120
      %p127 = scmp.eq.s32.totalorder %s21, 1
      %p128 = por %p126, %p127
      %p129 = scmp.ne.s32.totalorder %s120, %s121
      %p130 = scmp.eq.s32.totalorder %s21, 0
      %p131 = por %p129, %p130
      %p132 = scmp.ne.s32.totalorder %s120, %s121
      %p133 = scmp.eq.s32.totalorder %s22, 1
      %p134 = por %p132, %p133
      %p136 = scmp.ne.s32.totalorder %s121, %s135
      %p137 = scmp.eq.s32.totalorder %s22, 0
      %p138 = por %p136, %p137
      %s139 = ssub.s32 %s16, %s23
      %p140 = scmp.eq.s32.totalorder %s139, 0
      %s142 = sadd.s32 %s141, 1
      %s143 = scalar_select %p140, %s141, %s142
      %p146 = pneg %p140
      %p147 = scmp.eq.s32.totalorder %s16, 1
      %p148 = por %p146, %p147
      %p149 = scmp.ne.s32.totalorder %s141, %s144
      %p150 = scmp.eq.s32.totalorder %s16, 0
      %p151 = por %p149, %p150
      %p152 = scmp.ne.s32.totalorder %s141, %s144
      %p153 = scmp.eq.s32.totalorder %s21, 1
      %p154 = por %p152, %p153
      %p155 = scmp.ne.s32.totalorder %s144, %s145
      %p156 = scmp.eq.s32.totalorder %s21, 0
      %p157 = por %p155, %p156
      %p158 = scmp.ne.s32.totalorder %s144, %s145
      %p159 = scmp.eq.s32.totalorder %s22, 1
      %p160 = por %p158, %p159
      %p162 = scmp.ne.s32.totalorder %s145, %s161
      %p163 = scmp.eq.s32.totalorder %s22, 0
      %p164 = por %p162, %p163
      %s165 = ssub.s32 %s16, %s23
      %p166 = scmp.eq.s32.totalorder %s165, 0
      %s168 = sadd.s32 %s167, 1
      %s169 = scalar_select %p166, %s167, %s168
      %p172 = pneg %p166
      %p173 = scmp.eq.s32.totalorder %s16, 1
      %p174 = por %p172, %p173
      %p175 = scmp.ne.s32.totalorder %s167, %s170
      %p176 = scmp.eq.s32.totalorder %s16, 0
      %p177 = por %p175, %p176
      %p178 = scmp.ne.s32.totalorder %s167, %s170
      %p179 = scmp.eq.s32.totalorder %s21, 1
      %p180 = por %p178, %p179
      %p181 = scmp.ne.s32.totalorder %s170, %s171
      %p182 = scmp.eq.s32.totalorder %s21, 0
      %p183 = por %p181, %p182
      %p184 = scmp.ne.s32.totalorder %s170, %s171
      %p185 = scmp.eq.s32.totalorder %s22, 1
      %p186 = por %p184, %p185
      %p188 = scmp.ne.s32.totalorder %s171, %s187
      %p189 = scmp.eq.s32.totalorder %s22, 0
      %p190 = por %p188, %p189
      %p191 = scmp.le.s32.totalorder 1, %s16
      %p192 = scmp.lt.s32.totalorder %s16, 3
      %p193 = pnand %p191, %p192
      %p194 = pneg %p193
      // Predicated region
      $region9: #{tpu_custom_call.1} parent=5 // pred_check
        _
      $region10: #{tpu_custom_call.1} parent=5 // pred_check_branch
        %196 = sbr.rel (%p193) target = $region12
      $region11: #{tpu_custom_call.1} parent=5 // pred_region
        %s197 = ssub.s32 %s16, 1
        // Predicated region
        $region13: #{tpu_custom_call.1} parent=11 // pred_check
          %p198 = pneg %p89
        $region14: #{tpu_custom_call.1} parent=11 // pred_check_branch
          %200 = sbr.rel (%p198) target = $region16
        $region15: #{tpu_custom_call.1} parent=11 // pred_region
          _
        $region16: #{tpu_custom_call.1} parent=11 // pred_fallthru
          _
        // Predicated region
        $region17: #{tpu_custom_call.1} parent=11 // pred_check
          %p201 = pneg %p110
        $region18: #{tpu_custom_call.1} parent=11 // pred_check_branch
          %203 = sbr.rel (%p201) target = $region20
        $region19: #{tpu_custom_call.1} parent=11 // pred_region
          _
        $region20: #{tpu_custom_call.1} parent=11 // pred_fallthru
          _
        // Predicated region
        $region21: #{tpu_custom_call.1} parent=11 // pred_check
          %p204 = pneg %p131
        $region22: #{tpu_custom_call.1} parent=11 // pred_check_branch
          %206 = sbr.rel (%p204) target = $region24
        $region23: #{tpu_custom_call.1} parent=11 // pred_region
          _
        $region24: #{tpu_custom_call.1} parent=11 // pred_fallthru
          _
      $region12: #{tpu_custom_call.1} parent=5 // pred_fallthru
        _
      %p207 = scmp.lt.s32.totalorder %s16, 2
      // Predicated region
      $region25: #{tpu_custom_call.1} parent=5 // pred_check
        %p208 = pneg %p207
      $region26: #{tpu_custom_call.1} parent=5 // pred_check_branch
        %210 = sbr.rel (%p208) target = $region28
      $region27: #{tpu_custom_call.1} parent=5 // pred_region
        // Predicated region
        $region29: #{tpu_custom_call.1} parent=27 // pred_check
          %p211 = pneg %p36
        $region30: #{tpu_custom_call.1} parent=27 // pred_check_branch
          %213 = sbr.rel (%p211) target = $region32
        $region31: #{tpu_custom_call.1} parent=27 // pred_region
          %s214 = smul.u32 8, %s16
          %p215 = scmp.lt.s32.totalorder %s214, 15
          %s216 = scalar_select %p215, %s214, 15
          %s217 = smul.addr %s216, 8
          %s218 = scalar_lea.vmem %s0, %s217
          %s219 = smul.u32 8, %s16
        $region32: #{tpu_custom_call.1} parent=27 // pred_fallthru
          _
        // Predicated region
        $region33: #{tpu_custom_call.1} parent=27 // pred_check
          %p220 = pneg %p62
        $region34: #{tpu_custom_call.1} parent=27 // pred_check_branch
          %222 = sbr.rel (%p220) target = $region36
        $region35: #{tpu_custom_call.1} parent=27 // pred_region
          %s223 = smul.u32 8, %s16
          %p224 = scmp.lt.s32.totalorder %s223, 15
          %s225 = scalar_select %p224, %s223, 15
          %s226 = smul.addr %s225, 8
          %s227 = scalar_lea.vmem %s1, %s226
          %s228 = smul.u32 8, %s16
        $region36: #{tpu_custom_call.1} parent=27 // pred_fallthru
          _
      $region28: #{tpu_custom_call.1} parent=5 // pred_fallthru
        _
      %p229 = scmp.le.s32.totalorder 1, %s16
      %p230 = scmp.lt.s32.totalorder %s16, 3
      %p231 = pnand %p229, %p230
      %p232 = pneg %p231
      // Predicated region
      $region37: #{tpu_custom_call.1} parent=5 // pred_check
        _
      $region38: #{tpu_custom_call.1} parent=5 // pred_check_branch
        %234 = sbr.rel (%p231) target = $region40
      $region39: #{tpu_custom_call.1} parent=5 // pred_region
        %s235 = ssub.s32 %s16, 1
        %s236 = smul.u32 8, %s21
        %p237 = scmp.lt.s32.totalorder %s236, 15
        %s238 = scalar_select %p237, %s236, 15
        %s239 = smul.addr %s238, 8
        %s240 = scalar_lea.vmem %s0, %s239
        %p241 = pneg %p42
        %p242 = pneg %p39
        %s243 = smul.u32 8, %s21
        %p244 = scmp.lt.s32.totalorder %s243, 15
        %s245 = scalar_select %p244, %s243, 15
        %s246 = smul.addr %s245, 8
        %s247 = scalar_lea.vmem %s1, %s246
        %p248 = pneg %p68
        %p249 = pneg %p65
        %p250 = pneg %p89
        %p251 = pneg %p86
        %p252 = pneg %p110
        %p253 = pneg %p107
        %p254 = pneg %p131
        %p255 = pneg %p128
        %p256 = pneg %p157
        %p257 = pneg %p154
        %s258 = smul.u32 8, %s21
        %p259 = scmp.lt.s32.totalorder %s258, 15
        %s260 = scalar_select %p259, %s258, 15
        %s261 = smul.addr %s260, 8
        %s262 = scalar_lea.vmem %s5, %s261
        %p263 = pneg %p183
        %p264 = pneg %p180
        %s265 = sand.u32 %s170, 1
        %s266 = scalar_lea.sflag [#allocation3], %s265
        %s267 = sand.u32 %s170, 1
        %s268 = smul.addr %s267, 512
        %s269 = scalar_lea.vmem [#allocation2], %s268
        %s270 = smul.u32 8, %s21
        %p271 = scmp.lt.s32.totalorder %s270, 15
        %s272 = scalar_select %p271, %s270, 15
        %s273 = smul.addr %s272, 8
        %s274 = scalar_lea.vmem %s0, %s273
        %s275 = smul.u32 8, %s21
        %s276 = smul.u32 8, %s21
        %p277 = scmp.lt.s32.totalorder %s276, 15
        %s278 = scalar_select %p277, %s276, 15
        %s279 = smul.addr %s278, 8
        %s280 = scalar_lea.vmem %s1, %s279
        %s281 = smul.u32 8, %s21
        %s282 = smul.u32 8, %s21
        %p283 = scmp.lt.s32.totalorder %s282, 15
        %s284 = scalar_select %p283, %s282, 15
        %s285 = smul.addr %s284, 8
        %s286 = scalar_lea.vmem %s5, %s285
        %s287 = smul.u32 8, %s21
        %s288 = smul.u32 8, %s21
        %v289 = vld [vmem:[%s274] sm:$0xff]
        %v290 = vld [vmem:[%s274 + $0x8] sm:$0xff]
        %v291 = vld [vmem:[%s274 + $0x10] sm:$0xff]
        %v292 = vld [vmem:[%s274 + $0x18] sm:$0xff]
        %v293 = vld [vmem:[%s274 + $0x20] sm:$0xff]
        %v294 = vld [vmem:[%s274 + $0x28] sm:$0xff]
        %v295 = vld [vmem:[%s274 + $0x30] sm:$0xff]
        %v296 = vld [vmem:[%s274 + $0x38] sm:$0xff]
        %v297 = vld [vmem:[%s280] sm:$0xff]
        %v298 = vld [vmem:[%s280 + $0x8] sm:$0xff]
        %v299 = vld [vmem:[%s280 + $0x10] sm:$0xff]
        %v300 = vld [vmem:[%s280 + $0x18] sm:$0xff]
        %v301 = vld [vmem:[%s280 + $0x20] sm:$0xff]
        %v302 = vld [vmem:[%s280 + $0x28] sm:$0xff]
        %v303 = vld [vmem:[%s280 + $0x30] sm:$0xff]
        %v304 = vld [vmem:[%s280 + $0x38] sm:$0xff]
        %v305 = vld [vmem:[%s2] sm:$0xff]
        %v306 = vld [vmem:[%s2 + $0x8] sm:$0xff]
        %v307 = vld [vmem:[%s2 + $0x10] sm:$0xff]
        %v308 = vld [vmem:[%s2 + $0x18] sm:$0xff]
        %v309 = vld [vmem:[%s3] sm:$0xff]
        %v310 = vld [vmem:[%s3 + $0x8] sm:$0xff]
        %v311 = vld [vmem:[%s3 + $0x10] sm:$0xff]
        %v312 = vld [vmem:[%s3 + $0x18] sm:$0xff]
        %v313 = vld [vmem:[%s3 + $0x20] sm:$0xff]
        %v314 = vld [vmem:[%s3 + $0x28] sm:$0xff]
        %v315 = vld [vmem:[%s3 + $0x30] sm:$0xff]
        %v316 = vld [vmem:[%s3 + $0x38] sm:$0xff]
        %v317 = vld [vmem:[%s3 + $0x40] sm:$0xff]
        %v318 = vld [vmem:[%s3 + $0x48] sm:$0xff]
        %v319 = vld [vmem:[%s3 + $0x50] sm:$0xff]
        %v320 = vld [vmem:[%s3 + $0x58] sm:$0xff]
        %v321 = vld [vmem:[%s3 + $0x60] sm:$0xff]
        %v322 = vld [vmem:[%s3 + $0x68] sm:$0xff]
        %v323 = vld [vmem:[%s3 + $0x70] sm:$0xff]
        %v324 = vld [vmem:[%s3 + $0x78] sm:$0xff]
        %v325 = vld [vmem:[%s3 + $0x80] sm:$0xff]
        %v326 = vld [vmem:[%s3 + $0x88] sm:$0xff]
        %v327 = vld [vmem:[%s3 + $0x90] sm:$0xff]
        %v328 = vld [vmem:[%s3 + $0x98] sm:$0xff]
        %v329 = vld [vmem:[%s3 + $0xa0] sm:$0xff]
        %v330 = vld [vmem:[%s3 + $0xa8] sm:$0xff]
        %v331 = vld [vmem:[%s3 + $0xb0] sm:$0xff]
        %v332 = vld [vmem:[%s3 + $0xb8] sm:$0xff]
        %v333 = vld [vmem:[%s3 + $0xc0] sm:$0xff]
        %v334 = vld [vmem:[%s3 + $0xc8] sm:$0xff]
        %v335 = vld [vmem:[%s3 + $0xd0] sm:$0xff]
        %v336 = vld [vmem:[%s3 + $0xd8] sm:$0xff]
        %v337 = vld [vmem:[%s3 + $0xe0] sm:$0xff]
        %v338 = vld [vmem:[%s3 + $0xe8] sm:$0xff]
        %v339 = vld [vmem:[%s3 + $0xf0] sm:$0xff]
        %v340 = vld [vmem:[%s3 + $0xf8] sm:$0xff]
        %v341 = vld [vmem:[%s4] sm:$0x1]
        %v342 = vmul.f32 %v289, 0.0005
        %v343 = vmul.f32 %v290, 0.0005
        %v344 = vmul.f32 %v291, 0.0005
        %v345 = vmul.f32 %v292, 0.0005
        %v346 = vmul.f32 %v293, 0.0005
        %v347 = vmul.f32 %v294, 0.0005
        %v348 = vmul.f32 %v295, 0.0005
        %v349 = vmul.f32 %v296, 0.0005
        %v350 = vadd.f32 %v342, 0.001
        %v351 = vadd.f32 %v343, 0.001
        %v352 = vadd.f32 %v344, 0.001
        %v353 = vadd.f32 %v345, 0.001
        %v354 = vadd.f32 %v346, 0.001
        %v355 = vadd.f32 %v347, 0.001
        %v356 = vadd.f32 %v348, 0.001
        %v357 = vadd.f32 %v349, 0.001
        %v358 = vmul.f32 %v289, 10.0
        %v359 = vmul.f32 %v290, 10.0
        %v360 = vmul.f32 %v291, 10.0
        %v361 = vmul.f32 %v292, 10.0
        %v362 = vmul.f32 %v293, 10.0
        %v363 = vmul.f32 %v294, 10.0
        %v364 = vmul.f32 %v295, 10.0
        %v365 = vmul.f32 %v296, 10.0
        %v366 = vadd.f32 %v358, 300.0
        %v367 = vadd.f32 %v359, 300.0
        %v368 = vadd.f32 %v360, 300.0
        %v369 = vadd.f32 %v361, 300.0
        %v370 = vadd.f32 %v362, 300.0
        %v371 = vadd.f32 %v363, 300.0
        %v372 = vadd.f32 %v364, 300.0
        %v373 = vadd.f32 %v365, 300.0
        %v374 = vmul.f32 %v366, 0.002
        %v375 = vmul.f32 %v367, 0.002
        %v376 = vmul.f32 %v368, 0.002
        %v377 = vmul.f32 %v369, 0.002
        %v378 = vmul.f32 %v370, 0.002
        %v379 = vmul.f32 %v371, 0.002
        %v380 = vmul.f32 %v372, 0.002
        %v381 = vmul.f32 %v373, 0.002
        %v382 = vadd.f32 %v374, 1.0
        %v383 = vadd.f32 %v375, 1.0
        %v384 = vadd.f32 %v376, 1.0
        %v385 = vadd.f32 %v377, 1.0
        %v386 = vadd.f32 %v378, 1.0
        %v387 = vadd.f32 %v379, 1.0
        %v388 = vadd.f32 %v380, 1.0
        %v389 = vadd.f32 %v381, 1.0
        %v390 = vrcp.pop %v382
        %v391 = vrcp.pop %v383
        %v392 = vrcp.pop %v384
        %v393 = vrcp.pop %v385
        %v394 = vrcp.pop %v386
        %v395 = vrcp.pop %v387
        %v396 = vrcp.pop %v388
        %v397 = vrcp.pop %v389
        %v398 = vtanh.pop %v297
        %v399 = vtanh.pop %v298
        %v400 = vtanh.pop %v299
        %v401 = vtanh.pop %v300
        %v402 = vtanh.pop %v301
        %v403 = vtanh.pop %v302
        %v404 = vtanh.pop %v303
        %v405 = vtanh.pop %v304
        %vm406 = vcmask 261120
        %v408 = vsel %vm406, %v398, 0
        %v411 = vsel %vm406, %v399, 0
        %v414 = vsel %vm406, %v400, 0
        %v417 = vsel %vm406, %v401, 0
        %v420 = vsel %vm406, %v402, 0
        %v423 = vsel %vm406, %v403, 0
        %v426 = vsel %vm406, %v404, 0
        %v429 = vsel %vm406, %v405, 0
        %431 = vmatprep.subr.mxu0 0.0
        %v432 = vand.u32 %v305, 4294901760
        %433 = vmatpush1.msra.mxu0 %v432
        %434 = vmatprep.subr.mxu0 0.0
        %v435 = vand.u32 %v306, 4294901760
        %436 = vmatpush1.msra.mxu0 %v435
        %437 = vmatprep.subr.mxu0 0.0
        %v438 = vand.u32 %v307, 4294901760
        %439 = vmatpush1.msra.mxu0 %v438
        %440 = vmatprep.subr.mxu0 0.0
        %v441 = vand.u32 %v308, 4294901760
        %442 = vmatpush1.msra.mxu0 %v441
        %443 = vmatprep.subr.mxu0 0.0
        %444 = vmatpush1.msra.mxu0 0.0
        %445 = vmatprep.subr.mxu0 0.0
        %446 = vmatpush1.msra.mxu0 0.0
        %447 = vmatprep.subr.mxu0 0.0
        %448 = vmatpush1.msra.mxu0 0.0
        %449 = vmatprep.subr.mxu0 0.0
        %450 = vmatpush1.msra.mxu0 0.0
        %451 = vmatprep.subr.mxu0 0.0
        %452 = vmatpush1.msra.mxu0 0.0
        %453 = vmatprep.subr.mxu0 0.0
        %454 = vmatpush1.msra.mxu0 0.0
        %455 = vmatprep.subr.mxu0 0.0
        %456 = vmatpush1.msra.mxu0 0.0
        %457 = vmatprep.subr.mxu0 0.0
        %458 = vmatpush1.msra.mxu0 0.0
        %459 = vmatprep.subr.mxu0 0.0
        %460 = vmatpush1.msra.mxu0 0.0
        %461 = vmatprep.subr.mxu0 0.0
        %462 = vmatpush1.msra.mxu0 0.0
        %463 = vmatprep.subr.mxu0 0.0
        %464 = vmatpush1.msra.mxu0 0.0
        %465 = vmatprep.subr.mxu0 0.0
        %466 = vmatpush1.msra.mxu0 0.0
        %467 = vmatprep.subr.mxu0 0.0
        %468 = vmatpush1.msra.mxu0 0.0
        %469 = vmatprep.subr.mxu0 0.0
        %470 = vmatpush1.msra.mxu0 0.0
        %471 = vmatprep.subr.mxu0 0.0
        %472 = vmatpush1.msra.mxu0 0.0
        %473 = vmatprep.subr.mxu0 0.0
        %474 = vmatpush1.msra.mxu0 0.0
        %475 = vmatprep.subr.mxu0 0.0
        %476 = vmatpush1.msra.mxu0 0.0
        %477 = vmatprep.subr.mxu0 0.0
        %478 = vmatpush1.msra.mxu0 0.0
        %479 = vmatprep.subr.mxu0 0.0
        %480 = vmatpush1.msra.mxu0 0.0
        %481 = vmatprep.subr.mxu0 0.0
        %482 = vmatpush1.msra.mxu0 0.0
        %483 = vmatprep.subr.mxu0 0.0
        %484 = vmatpush1.msra.mxu0 0.0
        %485 = vmatprep.subr.mxu0 0.0
        %486 = vmatpush1.msra.mxu0 0.0
        %487 = vmatprep.subr.mxu0 0.0
        %488 = vmatpush1.msra.mxu0 0.0
        %489 = vmatprep.subr.mxu0 0.0
        %490 = vmatpush1.msra.mxu0 0.0
        %491 = vmatprep.subr.mxu0 0.0
        %492 = vmatpush1.msra.mxu0 0.0
        %493 = vmatprep.subr.mxu0 0.0
        %494 = vmatpush1.msra.mxu0 0.0
        %495 = vmatprep.subr.mxu0 0.0
        %496 = vmatpush1.msra.mxu0 0.0
        %497 = vmatprep.subr.mxu0 0.0
        %498 = vmatpush1.msra.mxu0 0.0
        %499 = vmatprep.mubr.f32.mxu0 0.0
        %v500 = vand.u32 %v408, 4294901760
        %v501 = vsub.f32 %v408, %v500
        %v502 = vand.u32 %v501, 4294901760
        %v503 = vsub.f32 %v501, %v502
        %v504 = vand.u32 %v503, 4294901760
        %505 = vmatmul.mubr.f32.gmra.mrb[0].mxu0 %v504
        %v506 = vpop.f32.mrb[0].mxu0
        %v507 = vadd.f32 0.0, %v506
        %v508 = vpop.f32.mrb[0].mxu0
        %509 = vmatprep.mubr.f32.mxu0 0.0
        %v510 = vand.u32 %v411, 4294901760
        %v511 = vsub.f32 %v411, %v510
        %v512 = vand.u32 %v511, 4294901760
        %v513 = vsub.f32 %v511, %v512
        %v514 = vand.u32 %v513, 4294901760
        %515 = vmatmul.mubr.f32.gmra.mrb[0].mxu0 %v514
        %v516 = vpop.f32.mrb[0].mxu0
        %v517 = vadd.f32 0.0, %v516
        %v518 = vpop.f32.mrb[0].mxu0
        %519 = vmatprep.mubr.f32.mxu0 0.0
        %v520 = vand.u32 %v414, 4294901760
        %v521 = vsub.f32 %v414, %v520
        %v522 = vand.u32 %v521, 4294901760
        %v523 = vsub.f32 %v521, %v522
        %v524 = vand.u32 %v523, 4294901760
        %525 = vmatmul.mubr.f32.gmra.mrb[0].mxu0 %v524
        %v526 = vpop.f32.mrb[0].mxu0
        %v527 = vadd.f32 0.0, %v526
        %v528 = vpop.f32.mrb[0].mxu0
        %529 = vmatprep.mubr.f32.mxu0 0.0
        %v530 = vand.u32 %v417, 4294901760
        %v531 = vsub.f32 %v417, %v530
        %v532 = vand.u32 %v531, 4294901760
        %v533 = vsub.f32 %v531, %v532
        %v534 = vand.u32 %v533, 4294901760
        %535 = vmatmul.mubr.f32.gmra.mrb[0].mxu0 %v534
        %v536 = vpop.f32.mrb[0].mxu0
        %v537 = vadd.f32 0.0, %v536
        %v538 = vpop.f32.mrb[0].mxu0
        %539 = vmatprep.mubr.f32.mxu0 0.0
        %v540 = vand.u32 %v420, 4294901760
        %v541 = vsub.f32 %v420, %v540
        %v542 = vand.u32 %v541, 4294901760
        %v543 = vsub.f32 %v541, %v542
        %v544 = vand.u32 %v543, 4294901760
        %545 = vmatmul.mubr.f32.gmra.mrb[0].mxu0 %v544
        %v546 = vpop.f32.mrb[0].mxu0
        %v547 = vadd.f32 0.0, %v546
        %v548 = vpop.f32.mrb[0].mxu0
        %549 = vmatprep.mubr.f32.mxu0 0.0
        %v550 = vand.u32 %v423, 4294901760
        %v551 = vsub.f32 %v423, %v550
        %v552 = vand.u32 %v551, 4294901760
        %v553 = vsub.f32 %v551, %v552
        %v554 = vand.u32 %v553, 4294901760
        %555 = vmatmul.mubr.f32.gmra.mrb[0].mxu0 %v554
        %v556 = vpop.f32.mrb[0].mxu0
        %v557 = vadd.f32 0.0, %v556
        %v558 = vpop.f32.mrb[0].mxu0
        %559 = vmatprep.mubr.f32.mxu0 0.0
        %v560 = vand.u32 %v426, 4294901760
        %v561 = vsub.f32 %v426, %v560
        %v562 = vand.u32 %v561, 4294901760
        %v563 = vsub.f32 %v561, %v562
        %v564 = vand.u32 %v563, 4294901760
        %565 = vmatmul.mubr.f32.gmra.mrb[0].mxu0 %v564
        %v566 = vpop.f32.mrb[0].mxu0
        %v567 = vadd.f32 0.0, %v566
        %v568 = vpop.f32.mrb[0].mxu0
        %569 = vmatprep.mubr.f32.mxu0 0.0
        %v570 = vand.u32 %v429, 4294901760
        %v571 = vsub.f32 %v429, %v570
        %v572 = vand.u32 %v571, 4294901760
        %v573 = vsub.f32 %v571, %v572
        %v574 = vand.u32 %v573, 4294901760
        %575 = vmatmul.mubr.f32.gmra.mrb[0].mxu0 %v574
        %v576 = vpop.f32.mrb[0].mxu0
        %v577 = vadd.f32 0.0, %v576
        %v578 = vpop.f32.mrb[0].mxu0
        %579 = vdwg.mxu0
        %580 = vmatprep.subr.mxu0 0.0
        %v581 = vand.u32 %v305, 4294901760
        %v582 = vsub.f32 %v305, %v581
        %v583 = vand.u32 %v582, 4294901760
        %v584 = vsub.f32 %v582, %v583
        %v585 = vand.u32 %v584, 4294901760
        %586 = vmatpush1.msra.mxu0 %v585
        %587 = vmatprep.subr.mxu0 0.0
        %v588 = vand.u32 %v306, 4294901760
        %v589 = vsub.f32 %v306, %v588
        %v590 = vand.u32 %v589, 4294901760
        %v591 = vsub.f32 %v589, %v590
        %v592 = vand.u32 %v591, 4294901760
        %593 = vmatpush1.msra.mxu0 %v592
        %594 = vmatprep.subr.mxu0 0.0
        %v595 = vand.u32 %v307, 4294901760
        %v596 = vsub.f32 %v307, %v595
        %v597 = vand.u32 %v596, 4294901760
        %v598 = vsub.f32 %v596, %v597
        %v599 = vand.u32 %v598, 4294901760
        %600 = vmatpush1.msra.mxu0 %v599
        %601 = vmatprep.subr.mxu0 0.0
        %v602 = vand.u32 %v308, 4294901760
        %v603 = vsub.f32 %v308, %v602
        %v604 = vand.u32 %v603, 4294901760
        %v605 = vsub.f32 %v603, %v604
        %v606 = vand.u32 %v605, 4294901760
        %607 = vmatpush1.msra.mxu0 %v606
        %608 = vmatprep.subr.mxu0 0.0
        %609 = vmatpush1.msra.mxu0 0.0
        %610 = vmatprep.subr.mxu0 0.0
        %611 = vmatpush1.msra.mxu0 0.0
        %612 = vmatprep.subr.mxu0 0.0
        %613 = vmatpush1.msra.mxu0 0.0
        %614 = vmatprep.subr.mxu0 0.0
        %615 = vmatpush1.msra.mxu0 0.0
        %616 = vmatprep.subr.mxu0 0.0
        %617 = vmatpush1.msra.mxu0 0.0
        %618 = vmatprep.subr.mxu0 0.0
        %619 = vmatpush1.msra.mxu0 0.0
        %620 = vmatprep.subr.mxu0 0.0
        %621 = vmatpush1.msra.mxu0 0.0
        %622 = vmatprep.subr.mxu0 0.0
        %623 = vmatpush1.msra.mxu0 0.0
        %624 = vmatprep.subr.mxu0 0.0
        %625 = vmatpush1.msra.mxu0 0.0
        %626 = vmatprep.subr.mxu0 0.0
        %627 = vmatpush1.msra.mxu0 0.0
        %628 = vmatprep.subr.mxu0 0.0
        %629 = vmatpush1.msra.mxu0 0.0
        %630 = vmatprep.subr.mxu0 0.0
        %631 = vmatpush1.msra.mxu0 0.0
        %632 = vmatprep.subr.mxu0 0.0
        %633 = vmatpush1.msra.mxu0 0.0
        %634 = vmatprep.subr.mxu0 0.0
        %635 = vmatpush1.msra.mxu0 0.0
        %636 = vmatprep.subr.mxu0 0.0
        %637 = vmatpush1.msra.mxu0 0.0
        %638 = vmatprep.subr.mxu0 0.0
        %639 = vmatpush1.msra.mxu0 0.0
        %640 = vmatprep.subr.mxu0 0.0
        %641 = vmatpush1.msra.mxu0 0.0
        %642 = vmatprep.subr.mxu0 0.0
        %643 = vmatpush1.msra.mxu0 0.0
        %644 = vmatprep.subr.mxu0 0.0
        %645 = vmatpush1.msra.mxu0 0.0
        %646 = vmatprep.subr.mxu0 0.0
        %647 = vmatpush1.msra.mxu0 0.0
        %648 = vmatprep.subr.mxu0 0.0
        %649 = vmatpush1.msra.mxu0 0.0
        %650 = vmatprep.subr.mxu0 0.0
        %651 = vmatpush1.msra.mxu0 0.0
        %652 = vmatprep.subr.mxu0 0.0
        %653 = vmatpush1.msra.mxu0 0.0
        %654 = vmatprep.subr.mxu0 0.0
        %655 = vmatpush1.msra.mxu0 0.0
        %656 = vmatprep.subr.mxu0 0.0
        %657 = vmatpush1.msra.mxu0 0.0
        %658 = vmatprep.subr.mxu0 0.0
        %659 = vmatpush1.msra.mxu0 0.0
        %660 = vmatprep.subr.mxu0 0.0
        %661 = vmatpush1.msra.mxu0 0.0
        %662 = vmatprep.subr.mxu0 0.0
        %663 = vmatpush1.msra.mxu0 0.0
        %664 = vmatprep.mubr.f32.mxu0 0.0
        %v665 = vand.u32 %v408, 4294901760
        %666 = vmatmul.mubr.f32.gmra.mrb[0].mxu0 %v665
        %v667 = vpop.f32.mrb[0].mxu0
        %v668 = vadd.f32 %v507, %v667
        %v669 = vpop.f32.mrb[0].mxu0
        %670 = vmatprep.mubr.f32.mxu0 0.0
        %v671 = vand.u32 %v411, 4294901760
        %672 = vmatmul.mubr.f32.gmra.mrb[0].mxu0 %v671
        %v673 = vpop.f32.mrb[0].mxu0
        %v674 = vadd.f32 %v517, %v673
        %v675 = vpop.f32.mrb[0].mxu0
        %676 = vmatprep.mubr.f32.mxu0 0.0
        %v677 = vand.u32 %v414, 4294901760
        %678 = vmatmul.mubr.f32.gmra.mrb[0].mxu0 %v677
        %v679 = vpop.f32.mrb[0].mxu0
        %v680 = vadd.f32 %v527, %v679
        %v681 = vpop.f32.mrb[0].mxu0
        %682 = vmatprep.mubr.f32.mxu0 0.0
        %v683 = vand.u32 %v417, 4294901760
        %684 = vmatmul.mubr.f32.gmra.mrb[0].mxu0 %v683
        %v685 = vpop.f32.mrb[0].mxu0
        %v686 = vadd.f32 %v537, %v685
        %v687 = vpop.f32.mrb[0].mxu0
        %688 = vmatprep.mubr.f32.mxu0 0.0
        %v689 = vand.u32 %v420, 4294901760
        %690 = vmatmul.mubr.f32.gmra.mrb[0].mxu0 %v689
        %v691 = vpop.f32.mrb[0].mxu0
        %v692 = vadd.f32 %v547, %v691
        %v693 = vpop.f32.mrb[0].mxu0
        %694 = vmatprep.mubr.f32.mxu0 0.0
        %v695 = vand.u32 %v423, 4294901760
        %696 = vmatmul.mubr.f32.gmra.mrb[0].mxu0 %v695
        %v697 = vpop.f32.mrb[0].mxu0
        %v698 = vadd.f32 %v557, %v697
        %v699 = vpop.f32.mrb[0].mxu0
        %700 = vmatprep.mubr.f32.mxu0 0.0
        %v701 = vand.u32 %v426, 4294901760
        %702 = vmatmul.mubr.f32.gmra.mrb[0].mxu0 %v701
        %v703 = vpop.f32.mrb[0].mxu0
        %v704 = vadd.f32 %v567, %v703
        %v705 = vpop.f32.mrb[0].mxu0
        %706 = vmatprep.mubr.f32.mxu0 0.0
        %v707 = vand.u32 %v429, 4294901760
        %708 = vmatmul.mubr.f32.gmra.mrb[0].mxu0 %v707
        %v709 = vpop.f32.mrb[0].mxu0
        %v710 = vadd.f32 %v577, %v709
        %v711 = vpop.f32.mrb[0].mxu0
        %712 = vdwg.mxu0
        %713 = vmatprep.subr.mxu0 0.0
        %v714 = vand.u32 %v305, 4294901760
        %v715 = vsub.f32 %v305, %v714
        %716 = vmatpush1.msra.mxu0 %v715
        %717 = vmatprep.subr.mxu0 0.0
        %v718 = vand.u32 %v306, 4294901760
        %v719 = vsub.f32 %v306, %v718
        %720 = vmatpush1.msra.mxu0 %v719
        %721 = vmatprep.subr.mxu0 0.0
        %v722 = vand.u32 %v307, 4294901760
        %v723 = vsub.f32 %v307, %v722
        %724 = vmatpush1.msra.mxu0 %v723
        %725 = vmatprep.subr.mxu0 0.0
        %v726 = vand.u32 %v308, 4294901760
        %v727 = vsub.f32 %v308, %v726
        %728 = vmatpush1.msra.mxu0 %v727
        %729 = vmatprep.subr.mxu0 0.0
        %730 = vmatpush1.msra.mxu0 0.0
        %731 = vmatprep.subr.mxu0 0.0
        %732 = vmatpush1.msra.mxu0 0.0
        %733 = vmatprep.subr.mxu0 0.0
        %734 = vmatpush1.msra.mxu0 0.0
        %735 = vmatprep.subr.mxu0 0.0
        %736 = vmatpush1.msra.mxu0 0.0
        %737 = vmatprep.subr.mxu0 0.0
        %738 = vmatpush1.msra.mxu0 0.0
        %739 = vmatprep.subr.mxu0 0.0
        %740 = vmatpush1.msra.mxu0 0.0
        %741 = vmatprep.subr.mxu0 0.0
        %742 = vmatpush1.msra.mxu0 0.0
        %743 = vmatprep.subr.mxu0 0.0
        %744 = vmatpush1.msra.mxu0 0.0
        %745 = vmatprep.subr.mxu0 0.0
        %746 = vmatpush1.msra.mxu0 0.0
        %747 = vmatprep.subr.mxu0 0.0
        %748 = vmatpush1.msra.mxu0 0.0
        %749 = vmatprep.subr.mxu0 0.0
        %750 = vmatpush1.msra.mxu0 0.0
        %751 = vmatprep.subr.mxu0 0.0
        %752 = vmatpush1.msra.mxu0 0.0
        %753 = vmatprep.subr.mxu0 0.0
        %754 = vmatpush1.msra.mxu0 0.0
        %755 = vmatprep.subr.mxu0 0.0
        %756 = vmatpush1.msra.mxu0 0.0
        %757 = vmatprep.subr.mxu0 0.0
        %758 = vmatpush1.msra.mxu0 0.0
        %759 = vmatprep.subr.mxu0 0.0
        %760 = vmatpush1.msra.mxu0 0.0
        %761 = vmatprep.subr.mxu0 0.0
        %762 = vmatpush1.msra.mxu0 0.0
        %763 = vmatprep.subr.mxu0 0.0
        %764 = vmatpush1.msra.mxu0 0.0
        %765 = vmatprep.subr.mxu0 0.0
        %766 = vmatpush1.msra.mxu0 0.0
        %767 = vmatprep.subr.mxu0 0.0
        %768 = vmatpush1.msra.mxu0 0.0
        %769 = vmatprep.subr.mxu0 0.0
        %770 = vmatpush1.msra.mxu0 0.0
        %771 = vmatprep.subr.mxu0 0.0
        %772 = vmatpush1.msra.mxu0 0.0
        %773 = vmatprep.subr.mxu0 0.0
        %774 = vmatpush1.msra.mxu0 0.0
        %775 = vmatprep.subr.mxu0 0.0
        %776 = vmatpush1.msra.mxu0 0.0
        %777 = vmatprep.subr.mxu0 0.0
        %778 = vmatpush1.msra.mxu0 0.0
        %779 = vmatprep.subr.mxu0 0.0
        %780 = vmatpush1.msra.mxu0 0.0
        %781 = vmatprep.subr.mxu0 0.0
        %782 = vmatpush1.msra.mxu0 0.0
        %783 = vmatprep.subr.mxu0 0.0
        %784 = vmatpush1.msra.mxu0 0.0
        %785 = vmatprep.mubr.f32.mxu0 0.0
        %v786 = vand.u32 %v408, 4294901760
        %v787 = vsub.f32 %v408, %v786
        %788 = vmatmul.mubr.f32.gmra.mrb[0].mxu0 %v787
        %v789 = vpop.f32.mrb[0].mxu0
        %v790 = vadd.f32 %v668, %v789
        %v791 = vpop.f32.mrb[0].mxu0
        %792 = vmatprep.mubr.f32.mxu0 0.0
        %v793 = vand.u32 %v411, 4294901760
        %v794 = vsub.f32 %v411, %v793
        %795 = vmatmul.mubr.f32.gmra.mrb[0].mxu0 %v794
        %v796 = vpop.f32.mrb[0].mxu0
        %v797 = vadd.f32 %v674, %v796
        %v798 = vpop.f32.mrb[0].mxu0
        %799 = vmatprep.mubr.f32.mxu0 0.0
        %v800 = vand.u32 %v414, 4294901760
        %v801 = vsub.f32 %v414, %v800
        %802 = vmatmul.mubr.f32.gmra.mrb[0].mxu0 %v801
        %v803 = vpop.f32.mrb[0].mxu0
        %v804 = vadd.f32 %v680, %v803
        %v805 = vpop.f32.mrb[0].mxu0
        %806 = vmatprep.mubr.f32.mxu0 0.0
        %v807 = vand.u32 %v417, 4294901760
        %v808 = vsub.f32 %v417, %v807
        %809 = vmatmul.mubr.f32.gmra.mrb[0].mxu0 %v808
        %v810 = vpop.f32.mrb[0].mxu0
        %v811 = vadd.f32 %v686, %v810
        %v812 = vpop.f32.mrb[0].mxu0
        %813 = vmatprep.mubr.f32.mxu0 0.0
        %v814 = vand.u32 %v420, 4294901760
        %v815 = vsub.f32 %v420, %v814
        %816 = vmatmul.mubr.f32.gmra.mrb[0].mxu0 %v815
        %v817 = vpop.f32.mrb[0].mxu0
        %v818 = vadd.f32 %v692, %v817
        %v819 = vpop.f32.mrb[0].mxu0
        %820 = vmatprep.mubr.f32.mxu0 0.0
        %v821 = vand.u32 %v423, 4294901760
        %v822 = vsub.f32 %v423, %v821
        %823 = vmatmul.mubr.f32.gmra.mrb[0].mxu0 %v822
        %v824 = vpop.f32.mrb[0].mxu0
        %v825 = vadd.f32 %v698, %v824
        %v826 = vpop.f32.mrb[0].mxu0
        %827 = vmatprep.mubr.f32.mxu0 0.0
        %v828 = vand.u32 %v426, 4294901760
        %v829 = vsub.f32 %v426, %v828
        %830 = vmatmul.mubr.f32.gmra.mrb[0].mxu0 %v829
        %v831 = vpop.f32.mrb[0].mxu0
        %v832 = vadd.f32 %v704, %v831
        %v833 = vpop.f32.mrb[0].mxu0
        %834 = vmatprep.mubr.f32.mxu0 0.0
        %v835 = vand.u32 %v429, 4294901760
        %v836 = vsub.f32 %v429, %v835
        %837 = vmatmul.mubr.f32.gmra.mrb[0].mxu0 %v836
        %v838 = vpop.f32.mrb[0].mxu0
        %v839 = vadd.f32 %v710, %v838
        %v840 = vpop.f32.mrb[0].mxu0
        %841 = vdwg.mxu0
        %842 = vmatprep.subr.mxu0 0.0
        %v843 = vand.u32 %v305, 4294901760
        %844 = vmatpush1.msra.mxu0 %v843
        %845 = vmatprep.subr.mxu0 0.0
        %v846 = vand.u32 %v306, 4294901760
        %847 = vmatpush1.msra.mxu0 %v846
        %848 = vmatprep.subr.mxu0 0.0
        %v849 = vand.u32 %v307, 4294901760
        %850 = vmatpush1.msra.mxu0 %v849
        %851 = vmatprep.subr.mxu0 0.0
        %v852 = vand.u32 %v308, 4294901760
        %853 = vmatpush1.msra.mxu0 %v852
        %854 = vmatprep.subr.mxu0 0.0
        %855 = vmatpush1.msra.mxu0 0.0
        %856 = vmatprep.subr.mxu0 0.0
        %857 = vmatpush1.msra.mxu0 0.0
        %858 = vmatprep.subr.mxu0 0.0
        %859 = vmatpush1.msra.mxu0 0.0
        %860 = vmatprep.subr.mxu0 0.0
        %861 = vmatpush1.msra.mxu0 0.0
        %862 = vmatprep.subr.mxu0 0.0
        %863 = vmatpush1.msra.mxu0 0.0
        %864 = vmatprep.subr.mxu0 0.0
        %865 = vmatpush1.msra.mxu0 0.0
        %866 = vmatprep.subr.mxu0 0.0
        %867 = vmatpush1.msra.mxu0 0.0
        %868 = vmatprep.subr.mxu0 0.0
        %869 = vmatpush1.msra.mxu0 0.0
        %870 = vmatprep.subr.mxu0 0.0
        %871 = vmatpush1.msra.mxu0 0.0
        %872 = vmatprep.subr.mxu0 0.0
        %873 = vmatpush1.msra.mxu0 0.0
        %874 = vmatprep.subr.mxu0 0.0
        %875 = vmatpush1.msra.mxu0 0.0
        %876 = vmatprep.subr.mxu0 0.0
        %877 = vmatpush1.msra.mxu0 0.0
        %878 = vmatprep.subr.mxu0 0.0
        %879 = vmatpush1.msra.mxu0 0.0
        %880 = vmatprep.subr.mxu0 0.0
        %881 = vmatpush1.msra.mxu0 0.0
        %882 = vmatprep.subr.mxu0 0.0
        %883 = vmatpush1.msra.mxu0 0.0
        %884 = vmatprep.subr.mxu0 0.0
        %885 = vmatpush1.msra.mxu0 0.0
        %886 = vmatprep.subr.mxu0 0.0
        %887 = vmatpush1.msra.mxu0 0.0
        %888 = vmatprep.subr.mxu0 0.0
        %889 = vmatpush1.msra.mxu0 0.0
        %890 = vmatprep.subr.mxu0 0.0
        %891 = vmatpush1.msra.mxu0 0.0
        %892 = vmatprep.subr.mxu0 0.0
        %893 = vmatpush1.msra.mxu0 0.0
        %894 = vmatprep.subr.mxu0 0.0
        %895 = vmatpush1.msra.mxu0 0.0
        %896 = vmatprep.subr.mxu0 0.0
        %897 = vmatpush1.msra.mxu0 0.0
        %898 = vmatprep.subr.mxu0 0.0
        %899 = vmatpush1.msra.mxu0 0.0
        %900 = vmatprep.subr.mxu0 0.0
        %901 = vmatpush1.msra.mxu0 0.0
        %902 = vmatprep.subr.mxu0 0.0
        %903 = vmatpush1.msra.mxu0 0.0
        %904 = vmatprep.subr.mxu0 0.0
        %905 = vmatpush1.msra.mxu0 0.0
        %906 = vmatprep.subr.mxu0 0.0
        %907 = vmatpush1.msra.mxu0 0.0
        %908 = vmatprep.subr.mxu0 0.0
        %909 = vmatpush1.msra.mxu0 0.0
        %910 = vmatprep.mubr.f32.mxu0 0.0
        %v911 = vand.u32 %v408, 4294901760
        %v912 = vsub.f32 %v408, %v911
        %v913 = vand.u32 %v912, 4294901760
        %914 = vmatmul.mubr.f32.gmra.mrb[0].mxu0 %v913
        %v915 = vpop.f32.mrb[0].mxu0
        %v916 = vadd.f32 %v790, %v915
        %v917 = vpop.f32.mrb[0].mxu0
        %918 = vmatprep.mubr.f32.mxu0 0.0
        %v919 = vand.u32 %v411, 4294901760
        %v920 = vsub.f32 %v411, %v919
        %v921 = vand.u32 %v920, 4294901760
        %922 = vmatmul.mubr.f32.gmra.mrb[0].mxu0 %v921
        %v923 = vpop.f32.mrb[0].mxu0
        %v924 = vadd.f32 %v797, %v923
        %v925 = vpop.f32.mrb[0].mxu0
        %926 = vmatprep.mubr.f32.mxu0 0.0
        %v927 = vand.u32 %v414, 4294901760
        %v928 = vsub.f32 %v414, %v927
        %v929 = vand.u32 %v928, 4294901760
        %930 = vmatmul.mubr.f32.gmra.mrb[0].mxu0 %v929
        %v931 = vpop.f32.mrb[0].mxu0
        %v932 = vadd.f32 %v804, %v931
        %v933 = vpop.f32.mrb[0].mxu0
        %934 = vmatprep.mubr.f32.mxu0 0.0
        %v935 = vand.u32 %v417, 4294901760
        %v936 = vsub.f32 %v417, %v935
        %v937 = vand.u32 %v936, 4294901760
        %938 = vmatmul.mubr.f32.gmra.mrb[0].mxu0 %v937
        %v939 = vpop.f32.mrb[0].mxu0
        %v940 = vadd.f32 %v811, %v939
        %v941 = vpop.f32.mrb[0].mxu0
        %942 = vmatprep.mubr.f32.mxu0 0.0
        %v943 = vand.u32 %v420, 4294901760
        %v944 = vsub.f32 %v420, %v943
        %v945 = vand.u32 %v944, 4294901760
        %946 = vmatmul.mubr.f32.gmra.mrb[0].mxu0 %v945
        %v947 = vpop.f32.mrb[0].mxu0
        %v948 = vadd.f32 %v818, %v947
        %v949 = vpop.f32.mrb[0].mxu0
        %950 = vmatprep.mubr.f32.mxu0 0.0
        %v951 = vand.u32 %v423, 4294901760
        %v952 = vsub.f32 %v423, %v951
        %v953 = vand.u32 %v952, 4294901760
        %954 = vmatmul.mubr.f32.gmra.mrb[0].mxu0 %v953
        %v955 = vpop.f32.mrb[0].mxu0
        %v956 = vadd.f32 %v825, %v955
        %v957 = vpop.f32.mrb[0].mxu0
        %958 = vmatprep.mubr.f32.mxu0 0.0
        %v959 = vand.u32 %v426, 4294901760
        %v960 = vsub.f32 %v426, %v959
        %v961 = vand.u32 %v960, 4294901760
        %962 = vmatmul.mubr.f32.gmra.mrb[0].mxu0 %v961
        %v963 = vpop.f32.mrb[0].mxu0
        %v964 = vadd.f32 %v832, %v963
        %v965 = vpop.f32.mrb[0].mxu0
        %966 = vmatprep.mubr.f32.mxu0 0.0
        %v967 = vand.u32 %v429, 4294901760
        %v968 = vsub.f32 %v429, %v967
        %v969 = vand.u32 %v968, 4294901760
        %970 = vmatmul.mubr.f32.gmra.mrb[0].mxu0 %v969
        %v971 = vpop.f32.mrb[0].mxu0
        %v972 = vadd.f32 %v839, %v971
        %v973 = vpop.f32.mrb[0].mxu0
        %974 = vdwg.mxu0
        %975 = vmatprep.subr.mxu0 0.0
        %v976 = vand.u32 %v305, 4294901760
        %v977 = vsub.f32 %v305, %v976
        %v978 = vand.u32 %v977, 4294901760
        %979 = vmatpush1.msra.mxu0 %v978
        %980 = vmatprep.subr.mxu0 0.0
        %v981 = vand.u32 %v306, 4294901760
        %v982 = vsub.f32 %v306, %v981
        %v983 = vand.u32 %v982, 4294901760
        %984 = vmatpush1.msra.mxu0 %v983
        %985 = vmatprep.subr.mxu0 0.0
        %v986 = vand.u32 %v307, 4294901760
        %v987 = vsub.f32 %v307, %v986
        %v988 = vand.u32 %v987, 4294901760
        %989 = vmatpush1.msra.mxu0 %v988
        %990 = vmatprep.subr.mxu0 0.0
        %v991 = vand.u32 %v308, 4294901760
        %v992 = vsub.f32 %v308, %v991
        %v993 = vand.u32 %v992, 4294901760
        %994 = vmatpush1.msra.mxu0 %v993
        %995 = vmatprep.subr.mxu0 0.0
        %996 = vmatpush1.msra.mxu0 0.0
        %997 = vmatprep.subr.mxu0 0.0
        %998 = vmatpush1.msra.mxu0 0.0
        %999 = vmatprep.subr.mxu0 0.0
        %1000 = vmatpush1.msra.mxu0 0.0
        %1001 = vmatprep.subr.mxu0 0.0
        %1002 = vmatpush1.msra.mxu0 0.0
        %1003 = vmatprep.subr.mxu0 0.0
        %1004 = vmatpush1.msra.mxu0 0.0
        %1005 = vmatprep.subr.mxu0 0.0
        %1006 = vmatpush1.msra.mxu0 0.0
        %1007 = vmatprep.subr.mxu0 0.0
        %1008 = vmatpush1.msra.mxu0 0.0
        %1009 = vmatprep.subr.mxu0 0.0
        %1010 = vmatpush1.msra.mxu0 0.0
        %1011 = vmatprep.subr.mxu0 0.0
        %1012 = vmatpush1.msra.mxu0 0.0
        %1013 = vmatprep.subr.mxu0 0.0
        %1014 = vmatpush1.msra.mxu0 0.0
        %1015 = vmatprep.subr.mxu0 0.0
        %1016 = vmatpush1.msra.mxu0 0.0
        %1017 = vmatprep.subr.mxu0 0.0
        %1018 = vmatpush1.msra.mxu0 0.0
        %1019 = vmatprep.subr.mxu0 0.0
        %1020 = vmatpush1.msra.mxu0 0.0
        %1021 = vmatprep.subr.mxu0 0.0
        %1022 = vmatpush1.msra.mxu0 0.0
        %1023 = vmatprep.subr.mxu0 0.0
        %1024 = vmatpush1.msra.mxu0 0.0
        %1025 = vmatprep.subr.mxu0 0.0
        %1026 = vmatpush1.msra.mxu0 0.0
        %1027 = vmatprep.subr.mxu0 0.0
        %1028 = vmatpush1.msra.mxu0 0.0
        %1029 = vmatprep.subr.mxu0 0.0
        %1030 = vmatpush1.msra.mxu0 0.0
        %1031 = vmatprep.subr.mxu0 0.0
        %1032 = vmatpush1.msra.mxu0 0.0
        %1033 = vmatprep.subr.mxu0 0.0
        %1034 = vmatpush1.msra.mxu0 0.0
        %1035 = vmatprep.subr.mxu0 0.0
        %1036 = vmatpush1.msra.mxu0 0.0
        %1037 = vmatprep.subr.mxu0 0.0
        %1038 = vmatpush1.msra.mxu0 0.0
        %1039 = vmatprep.subr.mxu0 0.0
        %1040 = vmatpush1.msra.mxu0 0.0
        %1041 = vmatprep.subr.mxu0 0.0
        %1042 = vmatpush1.msra.mxu0 0.0
        %1043 = vmatprep.subr.mxu0 0.0
        %1044 = vmatpush1.msra.mxu0 0.0
        %1045 = vmatprep.subr.mxu0 0.0
        %1046 = vmatpush1.msra.mxu0 0.0
        %1047 = vmatprep.subr.mxu0 0.0
        %1048 = vmatpush1.msra.mxu0 0.0
        %1049 = vmatprep.subr.mxu0 0.0
        %1050 = vmatpush1.msra.mxu0 0.0
        %1051 = vmatprep.mubr.f32.mxu0 0.0
        %v1052 = vand.u32 %v408, 4294901760
        %1053 = vmatmul.mubr.f32.gmra.mrb[0].mxu0 %v1052
        %v1054 = vpop.f32.mrb[0].mxu0
        %v1055 = vadd.f32 %v916, %v1054
        %v1056 = vpop.f32.mrb[0].mxu0
        %1057 = vmatprep.mubr.f32.mxu0 0.0
        %v1058 = vand.u32 %v411, 4294901760
        %1059 = vmatmul.mubr.f32.gmra.mrb[0].mxu0 %v1058
        %v1060 = vpop.f32.mrb[0].mxu0
        %v1061 = vadd.f32 %v924, %v1060
        %v1062 = vpop.f32.mrb[0].mxu0
        %1063 = vmatprep.mubr.f32.mxu0 0.0
        %v1064 = vand.u32 %v414, 4294901760
        %1065 = vmatmul.mubr.f32.gmra.mrb[0].mxu0 %v1064
        %v1066 = vpop.f32.mrb[0].mxu0
        %v1067 = vadd.f32 %v932, %v1066
        %v1068 = vpop.f32.mrb[0].mxu0
        %1069 = vmatprep.mubr.f32.mxu0 0.0
        %v1070 = vand.u32 %v417, 4294901760
        %1071 = vmatmul.mubr.f32.gmra.mrb[0].mxu0 %v1070
        %v1072 = vpop.f32.mrb[0].mxu0
        %v1073 = vadd.f32 %v940, %v1072
        %v1074 = vpop.f32.mrb[0].mxu0
        %1075 = vmatprep.mubr.f32.mxu0 0.0
        %v1076 = vand.u32 %v420, 4294901760
        %1077 = vmatmul.mubr.f32.gmra.mrb[0].mxu0 %v1076
        %v1078 = vpop.f32.mrb[0].mxu0
        %v1079 = vadd.f32 %v948, %v1078
        %v1080 = vpop.f32.mrb[0].mxu0
        %1081 = vmatprep.mubr.f32.mxu0 0.0
        %v1082 = vand.u32 %v423, 4294901760
        %1083 = vmatmul.mubr.f32.gmra.mrb[0].mxu0 %v1082
        %v1084 = vpop.f32.mrb[0].mxu0
        %v1085 = vadd.f32 %v956, %v1084
        %v1086 = vpop.f32.mrb[0].mxu0
        %1087 = vmatprep.mubr.f32.mxu0 0.0
        %v1088 = vand.u32 %v426, 4294901760
        %1089 = vmatmul.mubr.f32.gmra.mrb[0].mxu0 %v1088
        %v1090 = vpop.f32.mrb[0].mxu0
        %v1091 = vadd.f32 %v964, %v1090
        %v1092 = vpop.f32.mrb[0].mxu0
        %1093 = vmatprep.mubr.f32.mxu0 0.0
        %v1094 = vand.u32 %v429, 4294901760
        %1095 = vmatmul.mubr.f32.gmra.mrb[0].mxu0 %v1094
        %v1096 = vpop.f32.mrb[0].mxu0
        %v1097 = vadd.f32 %v972, %v1096
        %v1098 = vpop.f32.mrb[0].mxu0
        %1099 = vdwg.mxu0
        %1100 = vmatprep.subr.mxu0 0.0
        %v1101 = vand.u32 %v305, 4294901760
        %1102 = vmatpush1.msra.mxu0 %v1101
        %1103 = vmatprep.subr.mxu0 0.0
        %v1104 = vand.u32 %v306, 4294901760
        %1105 = vmatpush1.msra.mxu0 %v1104
        %1106 = vmatprep.subr.mxu0 0.0
        %v1107 = vand.u32 %v307, 4294901760
        %1108 = vmatpush1.msra.mxu0 %v1107
        %1109 = vmatprep.subr.mxu0 0.0
        %v1110 = vand.u32 %v308, 4294901760
        %1111 = vmatpush1.msra.mxu0 %v1110
        %1112 = vmatprep.subr.mxu0 0.0
        %1113 = vmatpush1.msra.mxu0 0.0
        %1114 = vmatprep.subr.mxu0 0.0
        %1115 = vmatpush1.msra.mxu0 0.0
        %1116 = vmatprep.subr.mxu0 0.0
        %1117 = vmatpush1.msra.mxu0 0.0
        %1118 = vmatprep.subr.mxu0 0.0
        %1119 = vmatpush1.msra.mxu0 0.0
        %1120 = vmatprep.subr.mxu0 0.0
        %1121 = vmatpush1.msra.mxu0 0.0
        %1122 = vmatprep.subr.mxu0 0.0
        %1123 = vmatpush1.msra.mxu0 0.0
        %1124 = vmatprep.subr.mxu0 0.0
        %1125 = vmatpush1.msra.mxu0 0.0
        %1126 = vmatprep.subr.mxu0 0.0
        %1127 = vmatpush1.msra.mxu0 0.0
        %1128 = vmatprep.subr.mxu0 0.0
        %1129 = vmatpush1.msra.mxu0 0.0
        %1130 = vmatprep.subr.mxu0 0.0
        %1131 = vmatpush1.msra.mxu0 0.0
        %1132 = vmatprep.subr.mxu0 0.0
        %1133 = vmatpush1.msra.mxu0 0.0
        %1134 = vmatprep.subr.mxu0 0.0
        %1135 = vmatpush1.msra.mxu0 0.0
        %1136 = vmatprep.subr.mxu0 0.0
        %1137 = vmatpush1.msra.mxu0 0.0
        %1138 = vmatprep.subr.mxu0 0.0
        %1139 = vmatpush1.msra.mxu0 0.0
        %1140 = vmatprep.subr.mxu0 0.0
        %1141 = vmatpush1.msra.mxu0 0.0
        %1142 = vmatprep.subr.mxu0 0.0
        %1143 = vmatpush1.msra.mxu0 0.0
        %1144 = vmatprep.subr.mxu0 0.0
        %1145 = vmatpush1.msra.mxu0 0.0
        %1146 = vmatprep.subr.mxu0 0.0
        %1147 = vmatpush1.msra.mxu0 0.0
        %1148 = vmatprep.subr.mxu0 0.0
        %1149 = vmatpush1.msra.mxu0 0.0
        %1150 = vmatprep.subr.mxu0 0.0
        %1151 = vmatpush1.msra.mxu0 0.0
        %1152 = vmatprep.subr.mxu0 0.0
        %1153 = vmatpush1.msra.mxu0 0.0
        %1154 = vmatprep.subr.mxu0 0.0
        %1155 = vmatpush1.msra.mxu0 0.0
        %1156 = vmatprep.subr.mxu0 0.0
        %1157 = vmatpush1.msra.mxu0 0.0
        %1158 = vmatprep.subr.mxu0 0.0
        %1159 = vmatpush1.msra.mxu0 0.0
        %1160 = vmatprep.subr.mxu0 0.0
        %1161 = vmatpush1.msra.mxu0 0.0
        %1162 = vmatprep.subr.mxu0 0.0
        %1163 = vmatpush1.msra.mxu0 0.0
        %1164 = vmatprep.subr.mxu0 0.0
        %1165 = vmatpush1.msra.mxu0 0.0
        %1166 = vmatprep.subr.mxu0 0.0
        %1167 = vmatpush1.msra.mxu0 0.0
        %1168 = vmatprep.mubr.f32.mxu0 0.0
        %v1169 = vand.u32 %v408, 4294901760
        %1170 = vmatmul.mubr.f32.gmra.mrb[0].mxu0 %v1169
        %v1171 = vpop.f32.mrb[0].mxu0
        %v1172 = vadd.f32 %v1055, %v1171
        %v1173 = vpop.f32.mrb[0].mxu0
        %1174 = vmatprep.mubr.f32.mxu0 0.0
        %v1175 = vand.u32 %v411, 4294901760
        %1176 = vmatmul.mubr.f32.gmra.mrb[0].mxu0 %v1175
        %v1177 = vpop.f32.mrb[0].mxu0
        %v1178 = vadd.f32 %v1061, %v1177
        %v1179 = vpop.f32.mrb[0].mxu0
        %1180 = vmatprep.mubr.f32.mxu0 0.0
        %v1181 = vand.u32 %v414, 4294901760
        %1182 = vmatmul.mubr.f32.gmra.mrb[0].mxu0 %v1181
        %v1183 = vpop.f32.mrb[0].mxu0
        %v1184 = vadd.f32 %v1067, %v1183
        %v1185 = vpop.f32.mrb[0].mxu0
        %1186 = vmatprep.mubr.f32.mxu0 0.0
        %v1187 = vand.u32 %v417, 4294901760
        %1188 = vmatmul.mubr.f32.gmra.mrb[0].mxu0 %v1187
        %v1189 = vpop.f32.mrb[0].mxu0
        %v1190 = vadd.f32 %v1073, %v1189
        %v1191 = vpop.f32.mrb[0].mxu0
        %1192 = vmatprep.mubr.f32.mxu0 0.0
        %v1193 = vand.u32 %v420, 4294901760
        %1194 = vmatmul.mubr.f32.gmra.mrb[0].mxu0 %v1193
        %v1195 = vpop.f32.mrb[0].mxu0
        %v1196 = vadd.f32 %v1079, %v1195
        %v1197 = vpop.f32.mrb[0].mxu0
        %1198 = vmatprep.mubr.f32.mxu0 0.0
        %v1199 = vand.u32 %v423, 4294901760
        %1200 = vmatmul.mubr.f32.gmra.mrb[0].mxu0 %v1199
        %v1201 = vpop.f32.mrb[0].mxu0
        %v1202 = vadd.f32 %v1085, %v1201
        %v1203 = vpop.f32.mrb[0].mxu0
        %1204 = vmatprep.mubr.f32.mxu0 0.0
        %v1205 = vand.u32 %v426, 4294901760
        %1206 = vmatmul.mubr.f32.gmra.mrb[0].mxu0 %v1205
        %v1207 = vpop.f32.mrb[0].mxu0
        %v1208 = vadd.f32 %v1091, %v1207
        %v1209 = vpop.f32.mrb[0].mxu0
        %1210 = vmatprep.mubr.f32.mxu0 0.0
        %v1211 = vand.u32 %v429, 4294901760
        %1212 = vmatmul.mubr.f32.gmra.mrb[0].mxu0 %v1211
        %v1213 = vpop.f32.mrb[0].mxu0
        %v1214 = vadd.f32 %v1097, %v1213
        %v1215 = vpop.f32.mrb[0].mxu0
        %1216 = vdwg.mxu0
        %1218 = vset.pattern.permute.xlu0 0
        %1219 = vperm.xlu0 %1218, %v390
        %v1220 = vpop.permute.xlu0 %1219
        %1223 = vset.pattern.permute.xlu0 0
        %1224 = vperm.xlu0 %1223, %v391
        %v1225 = vpop.permute.xlu0 %1224
        %1228 = vset.pattern.permute.xlu0 0
        %1229 = vperm.xlu0 %1228, %v392
        %v1230 = vpop.permute.xlu0 %1229
        %1233 = vset.pattern.permute.xlu0 0
        %1234 = vperm.xlu0 %1233, %v393
        %v1235 = vpop.permute.xlu0 %1234
        %1238 = vset.pattern.permute.xlu0 0
        %1239 = vperm.xlu0 %1238, %v394
        %v1240 = vpop.permute.xlu0 %1239
        %1243 = vset.pattern.permute.xlu0 0
        %1244 = vperm.xlu0 %1243, %v395
        %v1245 = vpop.permute.xlu0 %1244
        %1248 = vset.pattern.permute.xlu0 0
        %1249 = vperm.xlu0 %1248, %v396
        %v1250 = vpop.permute.xlu0 %1249
        %1253 = vset.pattern.permute.xlu0 0
        %1254 = vperm.xlu0 %1253, %v397
        %v1255 = vpop.permute.xlu0 %1254
        %v1257 = vmul.f32 %v1172, %v1220
        %v1258 = vmul.f32 %v1178, %v1225
        %v1259 = vmul.f32 %v1184, %v1230
        %v1260 = vmul.f32 %v1190, %v1235
        %v1261 = vmul.f32 %v1196, %v1240
        %v1262 = vmul.f32 %v1202, %v1245
        %v1263 = vmul.f32 %v1208, %v1250
        %v1264 = vmul.f32 %v1214, %v1255
        %v1266 = vlaneseq
        %v1267 = vshrl.u32 %v1266, 7
        %v1268 = vsub.s32 0, %v1267
        %v1269 = vrot.slane %v341, %v1268
        %1272 = vset.pattern.permute.xlu0 0
        %1273 = vperm.xlu0 %1272, %v350
        %v1274 = vpop.permute.xlu0 %1273
        %1277 = vset.pattern.permute.xlu0 0
        %1278 = vperm.xlu0 %1277, %v351
        %v1279 = vpop.permute.xlu0 %1278
        %1282 = vset.pattern.permute.xlu0 0
        %1283 = vperm.xlu0 %1282, %v352
        %v1284 = vpop.permute.xlu0 %1283
        %1287 = vset.pattern.permute.xlu0 0
        %1288 = vperm.xlu0 %1287, %v353
        %v1289 = vpop.permute.xlu0 %1288
        %1292 = vset.pattern.permute.xlu0 0
        %1293 = vperm.xlu0 %1292, %v354
        %v1294 = vpop.permute.xlu0 %1293
        %1297 = vset.pattern.permute.xlu0 0
        %1298 = vperm.xlu0 %1297, %v355
        %v1299 = vpop.permute.xlu0 %1298
        %1302 = vset.pattern.permute.xlu0 0
        %1303 = vperm.xlu0 %1302, %v356
        %v1304 = vpop.permute.xlu0 %1303
        %1307 = vset.pattern.permute.xlu0 0
        %1308 = vperm.xlu0 %1307, %v357
        %v1309 = vpop.permute.xlu0 %1308
        %v1311 = vmul.f32 %v1269, %v1274
        %v1312 = vmul.f32 %v1269, %v1279
        %v1313 = vmul.f32 %v1269, %v1284
        %v1314 = vmul.f32 %v1269, %v1289
        %v1315 = vmul.f32 %v1269, %v1294
        %v1316 = vmul.f32 %v1269, %v1299
        %v1317 = vmul.f32 %v1269, %v1304
        %v1318 = vmul.f32 %v1269, %v1309
        %v1319 = vadd.f32 %v1257, %v1311
        %v1320 = vadd.f32 %v1258, %v1312
        %v1321 = vadd.f32 %v1259, %v1313
        %v1322 = vadd.f32 %v1260, %v1314
        %v1323 = vadd.f32 %v1261, %v1315
        %v1324 = vadd.f32 %v1262, %v1316
        %v1325 = vadd.f32 %v1263, %v1317
        %v1326 = vadd.f32 %v1264, %v1318
        %1327 = vst.msk [vmem:[%s286] sm:$0xff] %vm406, %v1319
        %1328 = vst.msk [vmem:[%s286 + $0x8] sm:$0xff] %vm406, %v1320
        %1329 = vst.msk [vmem:[%s286 + $0x10] sm:$0xff] %vm406, %v1321
        %1330 = vst.msk [vmem:[%s286 + $0x18] sm:$0xff] %vm406, %v1322
        %1331 = vst.msk [vmem:[%s286 + $0x20] sm:$0xff] %vm406, %v1323
        %1332 = vst.msk [vmem:[%s286 + $0x28] sm:$0xff] %vm406, %v1324
        %1333 = vst.msk [vmem:[%s286 + $0x30] sm:$0xff] %vm406, %v1325
        %1334 = vst.msk [vmem:[%s286 + $0x38] sm:$0xff] %vm406, %v1326
        %v1335 = vmul.f32 %v398, %v398
        %v1336 = vmul.f32 %v399, %v399
        %v1337 = vmul.f32 %v400, %v400
        %v1338 = vmul.f32 %v401, %v401
        %v1339 = vmul.f32 %v402, %v402
        %v1340 = vmul.f32 %v403, %v403
        %v1341 = vmul.f32 %v404, %v404
        %v1342 = vmul.f32 %v405, %v405
        %v1343 = vsub.f32 1.0, %v1335
        %v1344 = vsub.f32 1.0, %v1336
        %v1345 = vsub.f32 1.0, %v1337
        %v1346 = vsub.f32 1.0, %v1338
        %v1347 = vsub.f32 1.0, %v1339
        %v1348 = vsub.f32 1.0, %v1340
        %v1349 = vsub.f32 1.0, %v1341
        %v1350 = vsub.f32 1.0, %v1342
        %v1351 = vmul.f32 %v1343, %v1220
        %v1352 = vmul.f32 %v1344, %v1225
        %v1353 = vmul.f32 %v1345, %v1230
        %v1354 = vmul.f32 %v1346, %v1235
        %v1355 = vmul.f32 %v1347, %v1240
        %v1356 = vmul.f32 %v1348, %v1245
        %v1357 = vmul.f32 %v1349, %v1250
        %v1358 = vmul.f32 %v1350, %v1255
        %v1360 = vsel %vm406, %v1351, 0
        %v1363 = vsel %vm406, %v1352, 0
        %v1366 = vsel %vm406, %v1353, 0
        %v1369 = vsel %vm406, %v1354, 0
        %v1372 = vsel %vm406, %v1355, 0
        %v1375 = vsel %vm406, %v1356, 0
        %v1378 = vsel %vm406, %v1357, 0
        %v1381 = vsel %vm406, %v1358, 0
        %v1383 = vand.u32 %v310, 4294901760
        %1384 = vmatprep.subr.mxu0 %v1383
        %v1385 = vand.u32 %v309, 4294901760
        %1386 = vmatpush1.msra.mxu0 %v1385
        %v1387 = vand.u32 %v318, 4294901760
        %1388 = vmatprep.subr.mxu0 %v1387
        %v1389 = vand.u32 %v317, 4294901760
        %1390 = vmatpush1.msra.mxu0 %v1389
        %v1391 = vand.u32 %v326, 4294901760
        %1392 = vmatprep.subr.mxu0 %v1391
        %v1393 = vand.u32 %v325, 4294901760
        %1394 = vmatpush1.msra.mxu0 %v1393
        %v1395 = vand.u32 %v334, 4294901760
        %1396 = vmatprep.subr.mxu0 %v1395
        %v1397 = vand.u32 %v333, 4294901760
        %1398 = vmatpush1.msra.mxu0 %v1397
        %1399 = vmatprep.subr.mxu0 0.0
        %1400 = vmatpush1.msra.mxu0 0.0
        %1401 = vmatprep.subr.mxu0 0.0
        %1402 = vmatpush1.msra.mxu0 0.0
        %1403 = vmatprep.subr.mxu0 0.0
        %1404 = vmatpush1.msra.mxu0 0.0
        %1405 = vmatprep.subr.mxu0 0.0
        %1406 = vmatpush1.msra.mxu0 0.0
        %1407 = vmatprep.subr.mxu0 0.0
        %1408 = vmatpush1.msra.mxu0 0.0
        %1409 = vmatprep.subr.mxu0 0.0
        %1410 = vmatpush1.msra.mxu0 0.0
        %1411 = vmatprep.subr.mxu0 0.0
        %1412 = vmatpush1.msra.mxu0 0.0
        %1413 = vmatprep.subr.mxu0 0.0
        %1414 = vmatpush1.msra.mxu0 0.0
        %1415 = vmatprep.subr.mxu0 0.0
        %1416 = vmatpush1.msra.mxu0 0.0
        %1417 = vmatprep.subr.mxu0 0.0
        %1418 = vmatpush1.msra.mxu0 0.0
        %1419 = vmatprep.subr.mxu0 0.0
        %1420 = vmatpush1.msra.mxu0 0.0
        %1421 = vmatprep.subr.mxu0 0.0
        %1422 = vmatpush1.msra.mxu0 0.0
        %1423 = vmatprep.subr.mxu0 0.0
        %1424 = vmatpush1.msra.mxu0 0.0
        %1425 = vmatprep.subr.mxu0 0.0
        %1426 = vmatpush1.msra.mxu0 0.0
        %1427 = vmatprep.subr.mxu0 0.0
        %1428 = vmatpush1.msra.mxu0 0.0
        %1429 = vmatprep.subr.mxu0 0.0
        %1430 = vmatpush1.msra.mxu0 0.0
        %1431 = vmatprep.subr.mxu0 0.0
        %1432 = vmatpush1.msra.mxu0 0.0
        %1433 = vmatprep.subr.mxu0 0.0
        %1434 = vmatpush1.msra.mxu0 0.0
        %1435 = vmatprep.subr.mxu0 0.0
        %1436 = vmatpush1.msra.mxu0 0.0
        %1437 = vmatprep.subr.mxu0 0.0
        %1438 = vmatpush1.msra.mxu0 0.0
        %1439 = vmatprep.subr.mxu0 0.0
        %1440 = vmatpush1.msra.mxu0 0.0
        %1441 = vmatprep.subr.mxu0 0.0
        %1442 = vmatpush1.msra.mxu0 0.0
        %1443 = vmatprep.subr.mxu0 0.0
        %1444 = vmatpush1.msra.mxu0 0.0
        %1445 = vmatprep.subr.mxu0 0.0
        %1446 = vmatpush1.msra.mxu0 0.0
        %1447 = vmatprep.subr.mxu0 0.0
        %1448 = vmatpush1.msra.mxu0 0.0
        %1449 = vmatprep.subr.mxu0 0.0
        %1450 = vmatpush1.msra.mxu0 0.0
        %1451 = vmatprep.subr.mxu0 0.0
        %1452 = vmatpush1.msra.mxu0 0.0
        %1453 = vmatprep.subr.mxu0 0.0
        %1454 = vmatpush1.msra.mxu0 0.0
        %1455 = vmatprep.mubr.f32.mxu0 0.0
        %v1456 = vand.u32 %v1360, 4294901760
        %v1457 = vsub.f32 %v1360, %v1456
        %v1458 = vand.u32 %v1457, 4294901760
        %v1459 = vsub.f32 %v1457, %v1458
        %v1460 = vand.u32 %v1459, 4294901760
        %1461 = vmatmul.mubr.f32.gmra.mrb[0].mxu0 %v1460
        %v1462 = vpop.f32.mrb[0].mxu0
        %v1463 = vadd.f32 0.0, %v1462
        %v1464 = vpop.f32.mrb[0].mxu0
        %v1465 = vadd.f32 0.0, %v1464
        %1466 = vmatprep.mubr.f32.mxu0 0.0
        %v1467 = vand.u32 %v1363, 4294901760
        %v1468 = vsub.f32 %v1363, %v1467
        %v1469 = vand.u32 %v1468, 4294901760
        %v1470 = vsub.f32 %v1468, %v1469
        %v1471 = vand.u32 %v1470, 4294901760
        %1472 = vmatmul.mubr.f32.gmra.mrb[0].mxu0 %v1471
        %v1473 = vpop.f32.mrb[0].mxu0
        %v1474 = vadd.f32 0.0, %v1473
        %v1475 = vpop.f32.mrb[0].mxu0
        %v1476 = vadd.f32 0.0, %v1475
        %1477 = vmatprep.mubr.f32.mxu0 0.0
        %v1478 = vand.u32 %v1366, 4294901760
        %v1479 = vsub.f32 %v1366, %v1478
        %v1480 = vand.u32 %v1479, 4294901760
        %v1481 = vsub.f32 %v1479, %v1480
        %v1482 = vand.u32 %v1481, 4294901760
        %1483 = vmatmul.mubr.f32.gmra.mrb[0].mxu0 %v1482
        %v1484 = vpop.f32.mrb[0].mxu0
        %v1485 = vadd.f32 0.0, %v1484
        %v1486 = vpop.f32.mrb[0].mxu0
        %v1487 = vadd.f32 0.0, %v1486
        %1488 = vmatprep.mubr.f32.mxu0 0.0
        %v1489 = vand.u32 %v1369, 4294901760
        %v1490 = vsub.f32 %v1369, %v1489
        %v1491 = vand.u32 %v1490, 4294901760
        %v1492 = vsub.f32 %v1490, %v1491
        %v1493 = vand.u32 %v1492, 4294901760
        %1494 = vmatmul.mubr.f32.gmra.mrb[0].mxu0 %v1493
        %v1495 = vpop.f32.mrb[0].mxu0
        %v1496 = vadd.f32 0.0, %v1495
        %v1497 = vpop.f32.mrb[0].mxu0
        %v1498 = vadd.f32 0.0, %v1497
        %1499 = vmatprep.mubr.f32.mxu0 0.0
        %v1500 = vand.u32 %v1372, 4294901760
        %v1501 = vsub.f32 %v1372, %v1500
        %v1502 = vand.u32 %v1501, 4294901760
        %v1503 = vsub.f32 %v1501, %v1502
        %v1504 = vand.u32 %v1503, 4294901760
        %1505 = vmatmul.mubr.f32.gmra.mrb[0].mxu0 %v1504
        %v1506 = vpop.f32.mrb[0].mxu0
        %v1507 = vadd.f32 0.0, %v1506
        %v1508 = vpop.f32.mrb[0].mxu0
        %v1509 = vadd.f32 0.0, %v1508
        %1510 = vmatprep.mubr.f32.mxu0 0.0
        %v1511 = vand.u32 %v1375, 4294901760
        %v1512 = vsub.f32 %v1375, %v1511
        %v1513 = vand.u32 %v1512, 4294901760
        %v1514 = vsub.f32 %v1512, %v1513
        %v1515 = vand.u32 %v1514, 4294901760
        %1516 = vmatmul.mubr.f32.gmra.mrb[0].mxu0 %v1515
        %v1517 = vpop.f32.mrb[0].mxu0
        %v1518 = vadd.f32 0.0, %v1517
        %v1519 = vpop.f32.mrb[0].mxu0
        %v1520 = vadd.f32 0.0, %v1519
        %1521 = vmatprep.mubr.f32.mxu0 0.0
        %v1522 = vand.u32 %v1378, 4294901760
        %v1523 = vsub.f32 %v1378, %v1522
        %v1524 = vand.u32 %v1523, 4294901760
        %v1525 = vsub.f32 %v1523, %v1524
        %v1526 = vand.u32 %v1525, 4294901760
        %1527 = vmatmul.mubr.f32.gmra.mrb[0].mxu0 %v1526
        %v1528 = vpop.f32.mrb[0].mxu0
        %v1529 = vadd.f32 0.0, %v1528
        %v1530 = vpop.f32.mrb[0].mxu0
        %v1531 = vadd.f32 0.0, %v1530
        %1532 = vmatprep.mubr.f32.mxu0 0.0
        %v1533 = vand.u32 %v1381, 4294901760
        %v1534 = vsub.f32 %v1381, %v1533
        %v1535 = vand.u32 %v1534, 4294901760
        %v1536 = vsub.f32 %v1534, %v1535
        %v1537 = vand.u32 %v1536, 4294901760
        %1538 = vmatmul.mubr.f32.gmra.mrb[0].mxu0 %v1537
        %v1539 = vpop.f32.mrb[0].mxu0
        %v1540 = vadd.f32 0.0, %v1539
        %v1541 = vpop.f32.mrb[0].mxu0
        %v1542 = vadd.f32 0.0, %v1541
        %1543 = vdwg.mxu0
        %v1544 = vand.u32 %v310, 4294901760
        %v1545 = vsub.f32 %v310, %v1544
        %v1546 = vand.u32 %v1545, 4294901760
        %v1547 = vsub.f32 %v1545, %v1546
        %v1548 = vand.u32 %v1547, 4294901760
        %1549 = vmatprep.subr.mxu0 %v1548
        %v1550 = vand.u32 %v309, 4294901760
        %v1551 = vsub.f32 %v309, %v1550
        %v1552 = vand.u32 %v1551, 4294901760
        %v1553 = vsub.f32 %v1551, %v1552
        %v1554 = vand.u32 %v1553, 4294901760
        %1555 = vmatpush1.msra.mxu0 %v1554
        %v1556 = vand.u32 %v318, 4294901760
        %v1557 = vsub.f32 %v318, %v1556
        %v1558 = vand.u32 %v1557, 4294901760
        %v1559 = vsub.f32 %v1557, %v1558
        %v1560 = vand.u32 %v1559, 4294901760
        %1561 = vmatprep.subr.mxu0 %v1560
        %v1562 = vand.u32 %v317, 4294901760
        %v1563 = vsub.f32 %v317, %v1562
        %v1564 = vand.u32 %v1563, 4294901760
        %v1565 = vsub.f32 %v1563, %v1564
        %v1566 = vand.u32 %v1565, 4294901760
        %1567 = vmatpush1.msra.mxu0 %v1566
        %v1568 = vand.u32 %v326, 4294901760
        %v1569 = vsub.f32 %v326, %v1568
        %v1570 = vand.u32 %v1569, 4294901760
        %v1571 = vsub.f32 %v1569, %v1570
        %v1572 = vand.u32 %v1571, 4294901760
        %1573 = vmatprep.subr.mxu0 %v1572
        %v1574 = vand.u32 %v325, 4294901760
        %v1575 = vsub.f32 %v325, %v1574
        %v1576 = vand.u32 %v1575, 4294901760
        %v1577 = vsub.f32 %v1575, %v1576
        %v1578 = vand.u32 %v1577, 4294901760
        %1579 = vmatpush1.msra.mxu0 %v1578
        %v1580 = vand.u32 %v334, 4294901760
        %v1581 = vsub.f32 %v334, %v1580
        %v1582 = vand.u32 %v1581, 4294901760
        %v1583 = vsub.f32 %v1581, %v1582
        %v1584 = vand.u32 %v1583, 4294901760
        %1585 = vmatprep.subr.mxu0 %v1584
        %v1586 = vand.u32 %v333, 4294901760
        %v1587 = vsub.f32 %v333, %v1586
        %v1588 = vand.u32 %v1587, 4294901760
        %v1589 = vsub.f32 %v1587, %v1588
        %v1590 = vand.u32 %v1589, 4294901760
        %1591 = vmatpush1.msra.mxu0 %v1590
        %1592 = vmatprep.subr.mxu0 0.0
        %1593 = vmatpush1.msra.mxu0 0.0
        %1594 = vmatprep.subr.mxu0 0.0
        %1595 = vmatpush1.msra.mxu0 0.0
        %1596 = vmatprep.subr.mxu0 0.0
        %1597 = vmatpush1.msra.mxu0 0.0
        %1598 = vmatprep.subr.mxu0 0.0
        %1599 = vmatpush1.msra.mxu0 0.0
        %1600 = vmatprep.subr.mxu0 0.0
        %1601 = vmatpush1.msra.mxu0 0.0
        %1602 = vmatprep.subr.mxu0 0.0
        %1603 = vmatpush1.msra.mxu0 0.0
        %1604 = vmatprep.subr.mxu0 0.0
        %1605 = vmatpush1.msra.mxu0 0.0
        %1606 = vmatprep.subr.mxu0 0.0
        %1607 = vmatpush1.msra.mxu0 0.0
        %1608 = vmatprep.subr.mxu0 0.0
        %1609 = vmatpush1.msra.mxu0 0.0
        %1610 = vmatprep.subr.mxu0 0.0
        %1611 = vmatpush1.msra.mxu0 0.0
        %1612 = vmatprep.subr.mxu0 0.0
        %1613 = vmatpush1.msra.mxu0 0.0
        %1614 = vmatprep.subr.mxu0 0.0
        %1615 = vmatpush1.msra.mxu0 0.0
        %1616 = vmatprep.subr.mxu0 0.0
        %1617 = vmatpush1.msra.mxu0 0.0
        %1618 = vmatprep.subr.mxu0 0.0
        %1619 = vmatpush1.msra.mxu0 0.0
        %1620 = vmatprep.subr.mxu0 0.0
        %1621 = vmatpush1.msra.mxu0 0.0
        %1622 = vmatprep.subr.mxu0 0.0
        %1623 = vmatpush1.msra.mxu0 0.0
        %1624 = vmatprep.subr.mxu0 0.0
        %1625 = vmatpush1.msra.mxu0 0.0
        %1626 = vmatprep.subr.mxu0 0.0
        %1627 = vmatpush1.msra.mxu0 0.0
        %1628 = vmatprep.subr.mxu0 0.0
        %1629 = vmatpush1.msra.mxu0 0.0
        %1630 = vmatprep.subr.mxu0 0.0
        %1631 = vmatpush1.msra.mxu0 0.0
        %1632 = vmatprep.subr.mxu0 0.0
        %1633 = vmatpush1.msra.mxu0 0.0
        %1634 = vmatprep.subr.mxu0 0.0
        %1635 = vmatpush1.msra.mxu0 0.0
        %1636 = vmatprep.subr.mxu0 0.0
        %1637 = vmatpush1.msra.mxu0 0.0
        %1638 = vmatprep.subr.mxu0 0.0
        %1639 = vmatpush1.msra.mxu0 0.0
        %1640 = vmatprep.subr.mxu0 0.0
        %1641 = vmatpush1.msra.mxu0 0.0
        %1642 = vmatprep.subr.mxu0 0.0
        %1643 = vmatpush1.msra.mxu0 0.0
        %1644 = vmatprep.subr.mxu0 0.0
        %1645 = vmatpush1.msra.mxu0 0.0
        %1646 = vmatprep.subr.mxu0 0.0
        %1647 = vmatpush1.msra.mxu0 0.0
        %1648 = vmatprep.mubr.f32.mxu0 0.0
        %v1649 = vand.u32 %v1360, 4294901760
        %1650 = vmatmul.mubr.f32.gmra.mrb[0].mxu0 %v1649
        %v1651 = vpop.f32.mrb[0].mxu0
        %v1652 = vadd.f32 %v1463, %v1651
        %v1653 = vpop.f32.mrb[0].mxu0
        %v1654 = vadd.f32 %v1465, %v1653
        %1655 = vmatprep.mubr.f32.mxu0 0.0
        %v1656 = vand.u32 %v1363, 4294901760
        %1657 = vmatmul.mubr.f32.gmra.mrb[0].mxu0 %v1656
        %v1658 = vpop.f32.mrb[0].mxu0
        %v1659 = vadd.f32 %v1474, %v1658
        %v1660 = vpop.f32.mrb[0].mxu0
        %v1661 = vadd.f32 %v1476, %v1660
        %1662 = vmatprep.mubr.f32.mxu0 0.0
        %v1663 = vand.u32 %v1366, 4294901760
        %1664 = vmatmul.mubr.f32.gmra.mrb[0].mxu0 %v1663
        %v1665 = vpop.f32.mrb[0].mxu0
        %v1666 = vadd.f32 %v1485, %v1665
        %v1667 = vpop.f32.mrb[0].mxu0
        %v1668 = vadd.f32 %v1487, %v1667
        %1669 = vmatprep.mubr.f32.mxu0 0.0
        %v1670 = vand.u32 %v1369, 4294901760
        %1671 = vmatmul.mubr.f32.gmra.mrb[0].mxu0 %v1670
        %v1672 = vpop.f32.mrb[0].mxu0
        %v1673 = vadd.f32 %v1496, %v1672
        %v1674 = vpop.f32.mrb[0].mxu0
        %v1675 = vadd.f32 %v1498, %v1674
        %1676 = vmatprep.mubr.f32.mxu0 0.0
        %v1677 = vand.u32 %v1372, 4294901760
        %1678 = vmatmul.mubr.f32.gmra.mrb[0].mxu0 %v1677
        %v1679 = vpop.f32.mrb[0].mxu0
        %v1680 = vadd.f32 %v1507, %v1679
        %v1681 = vpop.f32.mrb[0].mxu0
        %v1682 = vadd.f32 %v1509, %v1681
        %1683 = vmatprep.mubr.f32.mxu0 0.0
        %v1684 = vand.u32 %v1375, 4294901760
        %1685 = vmatmul.mubr.f32.gmra.mrb[0].mxu0 %v1684
        %v1686 = vpop.f32.mrb[0].mxu0
        %v1687 = vadd.f32 %v1518, %v1686
        %v1688 = vpop.f32.mrb[0].mxu0
        %v1689 = vadd.f32 %v1520, %v1688
        %1690 = vmatprep.mubr.f32.mxu0 0.0
        %v1691 = vand.u32 %v1378, 4294901760
        %1692 = vmatmul.mubr.f32.gmra.mrb[0].mxu0 %v1691
        %v1693 = vpop.f32.mrb[0].mxu0
        %v1694 = vadd.f32 %v1529, %v1693
        %v1695 = vpop.f32.mrb[0].mxu0
        %v1696 = vadd.f32 %v1531, %v1695
        %1697 = vmatprep.mubr.f32.mxu0 0.0
        %v1698 = vand.u32 %v1381, 4294901760
        %1699 = vmatmul.mubr.f32.gmra.mrb[0].mxu0 %v1698
        %v1700 = vpop.f32.mrb[0].mxu0
        %v1701 = vadd.f32 %v1540, %v1700
        %v1702 = vpop.f32.mrb[0].mxu0
        %v1703 = vadd.f32 %v1542, %v1702
        %1704 = vdwg.mxu0
        %v1705 = vand.u32 %v310, 4294901760
        %v1706 = vsub.f32 %v310, %v1705
        %1707 = vmatprep.subr.mxu0 %v1706
        %v1708 = vand.u32 %v309, 4294901760
        %v1709 = vsub.f32 %v309, %v1708
        %1710 = vmatpush1.msra.mxu0 %v1709
        %v1711 = vand.u32 %v318, 4294901760
        %v1712 = vsub.f32 %v318, %v1711
        %1713 = vmatprep.subr.mxu0 %v1712
        %v1714 = vand.u32 %v317, 4294901760
        %v1715 = vsub.f32 %v317, %v1714
        %1716 = vmatpush1.msra.mxu0 %v1715
        %v1717 = vand.u32 %v326, 4294901760
        %v1718 = vsub.f32 %v326, %v1717
        %1719 = vmatprep.subr.mxu0 %v1718
        %v1720 = vand.u32 %v325, 4294901760
        %v1721 = vsub.f32 %v325, %v1720
        %1722 = vmatpush1.msra.mxu0 %v1721
        %v1723 = vand.u32 %v334, 4294901760
        %v1724 = vsub.f32 %v334, %v1723
        %1725 = vmatprep.subr.mxu0 %v1724
        %v1726 = vand.u32 %v333, 4294901760
        %v1727 = vsub.f32 %v333, %v1726
        %1728 = vmatpush1.msra.mxu0 %v1727
        %1729 = vmatprep.subr.mxu0 0.0
        %1730 = vmatpush1.msra.mxu0 0.0
        %1731 = vmatprep.subr.mxu0 0.0
        %1732 = vmatpush1.msra.mxu0 0.0
        %1733 = vmatprep.subr.mxu0 0.0
        %1734 = vmatpush1.msra.mxu0 0.0
        %1735 = vmatprep.subr.mxu0 0.0
        %1736 = vmatpush1.msra.mxu0 0.0
        %1737 = vmatprep.subr.mxu0 0.0
        %1738 = vmatpush1.msra.mxu0 0.0
        %1739 = vmatprep.subr.mxu0 0.0
        %1740 = vmatpush1.msra.mxu0 0.0
        %1741 = vmatprep.subr.mxu0 0.0
        %1742 = vmatpush1.msra.mxu0 0.0
        %1743 = vmatprep.subr.mxu0 0.0
        %1744 = vmatpush1.msra.mxu0 0.0
        %1745 = vmatprep.subr.mxu0 0.0
        %1746 = vmatpush1.msra.mxu0 0.0
        %1747 = vmatprep.subr.mxu0 0.0
        %1748 = vmatpush1.msra.mxu0 0.0
        %1749 = vmatprep.subr.mxu0 0.0
        %1750 = vmatpush1.msra.mxu0 0.0
        %1751 = vmatprep.subr.mxu0 0.0
        %1752 = vmatpush1.msra.mxu0 0.0
        %1753 = vmatprep.subr.mxu0 0.0
        %1754 = vmatpush1.msra.mxu0 0.0
        %1755 = vmatprep.subr.mxu0 0.0
        %1756 = vmatpush1.msra.mxu0 0.0
        %1757 = vmatprep.subr.mxu0 0.0
        %1758 = vmatpush1.msra.mxu0 0.0
        %1759 = vmatprep.subr.mxu0 0.0
        %1760 = vmatpush1.msra.mxu0 0.0
        %1761 = vmatprep.subr.mxu0 0.0
        %1762 = vmatpush1.msra.mxu0 0.0
        %1763 = vmatprep.subr.mxu0 0.0
        %1764 = vmatpush1.msra.mxu0 0.0
        %1765 = vmatprep.subr.mxu0 0.0
        %1766 = vmatpush1.msra.mxu0 0.0
        %1767 = vmatprep.subr.mxu0 0.0
        %1768 = vmatpush1.msra.mxu0 0.0
        %1769 = vmatprep.subr.mxu0 0.0
        %1770 = vmatpush1.msra.mxu0 0.0
        %1771 = vmatprep.subr.mxu0 0.0
        %1772 = vmatpush1.msra.mxu0 0.0
        %1773 = vmatprep.subr.mxu0 0.0
        %1774 = vmatpush1.msra.mxu0 0.0
        %1775 = vmatprep.subr.mxu0 0.0
        %1776 = vmatpush1.msra.mxu0 0.0
        %1777 = vmatprep.subr.mxu0 0.0
        %1778 = vmatpush1.msra.mxu0 0.0
        %1779 = vmatprep.subr.mxu0 0.0
        %1780 = vmatpush1.msra.mxu0 0.0
        %1781 = vmatprep.subr.mxu0 0.0
        %1782 = vmatpush1.msra.mxu0 0.0
        %1783 = vmatprep.subr.mxu0 0.0
        %1784 = vmatpush1.msra.mxu0 0.0
        %1785 = vmatprep.mubr.f32.mxu0 0.0
        %v1786 = vand.u32 %v1360, 4294901760
        %v1787 = vsub.f32 %v1360, %v1786
        %1788 = vmatmul.mubr.f32.gmra.mrb[0].mxu0 %v1787
        %v1789 = vpop.f32.mrb[0].mxu0
        %v1790 = vadd.f32 %v1652, %v1789
        %v1791 = vpop.f32.mrb[0].mxu0
        %v1792 = vadd.f32 %v1654, %v1791
        %1793 = vmatprep.mubr.f32.mxu0 0.0
        %v1794 = vand.u32 %v1363, 4294901760
        %v1795 = vsub.f32 %v1363, %v1794
        %1796 = vmatmul.mubr.f32.gmra.mrb[0].mxu0 %v1795
        %v1797 = vpop.f32.mrb[0].mxu0
        %v1798 = vadd.f32 %v1659, %v1797
        %v1799 = vpop.f32.mrb[0].mxu0
        %v1800 = vadd.f32 %v1661, %v1799
        %1801 = vmatprep.mubr.f32.mxu0 0.0
        %v1802 = vand.u32 %v1366, 4294901760
        %v1803 = vsub.f32 %v1366, %v1802
        %1804 = vmatmul.mubr.f32.gmra.mrb[0].mxu0 %v1803
        %v1805 = vpop.f32.mrb[0].mxu0
        %v1806 = vadd.f32 %v1666, %v1805
        %v1807 = vpop.f32.mrb[0].mxu0
        %v1808 = vadd.f32 %v1668, %v1807
        %1809 = vmatprep.mubr.f32.mxu0 0.0
        %v1810 = vand.u32 %v1369, 4294901760
        %v1811 = vsub.f32 %v1369, %v1810
        %1812 = vmatmul.mubr.f32.gmra.mrb[0].mxu0 %v1811
        %v1813 = vpop.f32.mrb[0].mxu0
        %v1814 = vadd.f32 %v1673, %v1813
        %v1815 = vpop.f32.mrb[0].mxu0
        %v1816 = vadd.f32 %v1675, %v1815
        %1817 = vmatprep.mubr.f32.mxu0 0.0
        %v1818 = vand.u32 %v1372, 4294901760
        %v1819 = vsub.f32 %v1372, %v1818
        %1820 = vmatmul.mubr.f32.gmra.mrb[0].mxu0 %v1819
        %v1821 = vpop.f32.mrb[0].mxu0
        %v1822 = vadd.f32 %v1680, %v1821
        %v1823 = vpop.f32.mrb[0].mxu0
        %v1824 = vadd.f32 %v1682, %v1823
        %1825 = vmatprep.mubr.f32.mxu0 0.0
        %v1826 = vand.u32 %v1375, 4294901760
        %v1827 = vsub.f32 %v1375, %v1826
        %1828 = vmatmul.mubr.f32.gmra.mrb[0].mxu0 %v1827
        %v1829 = vpop.f32.mrb[0].mxu0
        %v1830 = vadd.f32 %v1687, %v1829
        %v1831 = vpop.f32.mrb[0].mxu0
        %v1832 = vadd.f32 %v1689, %v1831
        %1833 = vmatprep.mubr.f32.mxu0 0.0
        %v1834 = vand.u32 %v1378, 4294901760
        %v1835 = vsub.f32 %v1378, %v1834
        %1836 = vmatmul.mubr.f32.gmra.mrb[0].mxu0 %v1835
        %v1837 = vpop.f32.mrb[0].mxu0
        %v1838 = vadd.f32 %v1694, %v1837
        %v1839 = vpop.f32.mrb[0].mxu0
        %v1840 = vadd.f32 %v1696, %v1839
        %1841 = vmatprep.mubr.f32.mxu0 0.0
        %v1842 = vand.u32 %v1381, 4294901760
        %v1843 = vsub.f32 %v1381, %v1842
        %1844 = vmatmul.mubr.f32.gmra.mrb[0].mxu0 %v1843
        %v1845 = vpop.f32.mrb[0].mxu0
        %v1846 = vadd.f32 %v1701, %v1845
        %v1847 = vpop.f32.mrb[0].mxu0
        %v1848 = vadd.f32 %v1703, %v1847
        %1849 = vdwg.mxu0
        %v1850 = vand.u32 %v310, 4294901760
        %1851 = vmatprep.subr.mxu0 %v1850
        %v1852 = vand.u32 %v309, 4294901760
        %1853 = vmatpush1.msra.mxu0 %v1852
        %v1854 = vand.u32 %v318, 4294901760
        %1855 = vmatprep.subr.mxu0 %v1854
        %v1856 = vand.u32 %v317, 4294901760
        %1857 = vmatpush1.msra.mxu0 %v1856
        %v1858 = vand.u32 %v326, 4294901760
        %1859 = vmatprep.subr.mxu0 %v1858
        %v1860 = vand.u32 %v325, 4294901760
        %1861 = vmatpush1.msra.mxu0 %v1860
        %v1862 = vand.u32 %v334, 4294901760
        %1863 = vmatprep.subr.mxu0 %v1862
        %v1864 = vand.u32 %v333, 4294901760
        %1865 = vmatpush1.msra.mxu0 %v1864
        %1866 = vmatprep.subr.mxu0 0.0
        %1867 = vmatpush1.msra.mxu0 0.0
        %1868 = vmatprep.subr.mxu0 0.0
        %1869 = vmatpush1.msra.mxu0 0.0
        %1870 = vmatprep.subr.mxu0 0.0
        %1871 = vmatpush1.msra.mxu0 0.0
        %1872 = vmatprep.subr.mxu0 0.0
        %1873 = vmatpush1.msra.mxu0 0.0
        %1874 = vmatprep.subr.mxu0 0.0
        %1875 = vmatpush1.msra.mxu0 0.0
        %1876 = vmatprep.subr.mxu0 0.0
        %1877 = vmatpush1.msra.mxu0 0.0
        %1878 = vmatprep.subr.mxu0 0.0
        %1879 = vmatpush1.msra.mxu0 0.0
        %1880 = vmatprep.subr.mxu0 0.0
        %1881 = vmatpush1.msra.mxu0 0.0
        %1882 = vmatprep.subr.mxu0 0.0
        %1883 = vmatpush1.msra.mxu0 0.0
        %1884 = vmatprep.subr.mxu0 0.0
        %1885 = vmatpush1.msra.mxu0 0.0
        %1886 = vmatprep.subr.mxu0 0.0
        %1887 = vmatpush1.msra.mxu0 0.0
        %1888 = vmatprep.subr.mxu0 0.0
        %1889 = vmatpush1.msra.mxu0 0.0
        %1890 = vmatprep.subr.mxu0 0.0
        %1891 = vmatpush1.msra.mxu0 0.0
        %1892 = vmatprep.subr.mxu0 0.0
        %1893 = vmatpush1.msra.mxu0 0.0
        %1894 = vmatprep.subr.mxu0 0.0
        %1895 = vmatpush1.msra.mxu0 0.0
        %1896 = vmatprep.subr.mxu0 0.0
        %1897 = vmatpush1.msra.mxu0 0.0
        %1898 = vmatprep.subr.mxu0 0.0
        %1899 = vmatpush1.msra.mxu0 0.0
        %1900 = vmatprep.subr.mxu0 0.0
        %1901 = vmatpush1.msra.mxu0 0.0
        %1902 = vmatprep.subr.mxu0 0.0
        %1903 = vmatpush1.msra.mxu0 0.0
        %1904 = vmatprep.subr.mxu0 0.0
        %1905 = vmatpush1.msra.mxu0 0.0
        %1906 = vmatprep.subr.mxu0 0.0
        %1907 = vmatpush1.msra.mxu0 0.0
        %1908 = vmatprep.subr.mxu0 0.0
        %1909 = vmatpush1.msra.mxu0 0.0
        %1910 = vmatprep.subr.mxu0 0.0
        %1911 = vmatpush1.msra.mxu0 0.0
        %1912 = vmatprep.subr.mxu0 0.0
        %1913 = vmatpush1.msra.mxu0 0.0
        %1914 = vmatprep.subr.mxu0 0.0
        %1915 = vmatpush1.msra.mxu0 0.0
        %1916 = vmatprep.subr.mxu0 0.0
        %1917 = vmatpush1.msra.mxu0 0.0
        %1918 = vmatprep.subr.mxu0 0.0
        %1919 = vmatpush1.msra.mxu0 0.0
        %1920 = vmatprep.subr.mxu0 0.0
        %1921 = vmatpush1.msra.mxu0 0.0
        %1922 = vmatprep.mubr.f32.mxu0 0.0
        %v1923 = vand.u32 %v1360, 4294901760
        %v1924 = vsub.f32 %v1360, %v1923
        %v1925 = vand.u32 %v1924, 4294901760
        %1926 = vmatmul.mubr.f32.gmra.mrb[0].mxu0 %v1925
        %v1927 = vpop.f32.mrb[0].mxu0
        %v1928 = vadd.f32 %v1790, %v1927
        %v1929 = vpop.f32.mrb[0].mxu0
        %v1930 = vadd.f32 %v1792, %v1929
        %1931 = vmatprep.mubr.f32.mxu0 0.0
        %v1932 = vand.u32 %v1363, 4294901760
        %v1933 = vsub.f32 %v1363, %v1932
        %v1934 = vand.u32 %v1933, 4294901760
        %1935 = vmatmul.mubr.f32.gmra.mrb[0].mxu0 %v1934
        %v1936 = vpop.f32.mrb[0].mxu0
        %v1937 = vadd.f32 %v1798, %v1936
        %v1938 = vpop.f32.mrb[0].mxu0
        %v1939 = vadd.f32 %v1800, %v1938
        %1940 = vmatprep.mubr.f32.mxu0 0.0
        %v1941 = vand.u32 %v1366, 4294901760
        %v1942 = vsub.f32 %v1366, %v1941
        %v1943 = vand.u32 %v1942, 4294901760
        %1944 = vmatmul.mubr.f32.gmra.mrb[0].mxu0 %v1943
        %v1945 = vpop.f32.mrb[0].mxu0
        %v1946 = vadd.f32 %v1806, %v1945
        %v1947 = vpop.f32.mrb[0].mxu0
        %v1948 = vadd.f32 %v1808, %v1947
        %1949 = vmatprep.mubr.f32.mxu0 0.0
        %v1950 = vand.u32 %v1369, 4294901760
        %v1951 = vsub.f32 %v1369, %v1950
        %v1952 = vand.u32 %v1951, 4294901760
        %1953 = vmatmul.mubr.f32.gmra.mrb[0].mxu0 %v1952
        %v1954 = vpop.f32.mrb[0].mxu0
        %v1955 = vadd.f32 %v1814, %v1954
        %v1956 = vpop.f32.mrb[0].mxu0
        %v1957 = vadd.f32 %v1816, %v1956
        %1958 = vmatprep.mubr.f32.mxu0 0.0
        %v1959 = vand.u32 %v1372, 4294901760
        %v1960 = vsub.f32 %v1372, %v1959
        %v1961 = vand.u32 %v1960, 4294901760
        %1962 = vmatmul.mubr.f32.gmra.mrb[0].mxu0 %v1961
        %v1963 = vpop.f32.mrb[0].mxu0
        %v1964 = vadd.f32 %v1822, %v1963
        %v1965 = vpop.f32.mrb[0].mxu0
        %v1966 = vadd.f32 %v1824, %v1965
        %1967 = vmatprep.mubr.f32.mxu0 0.0
        %v1968 = vand.u32 %v1375, 4294901760
        %v1969 = vsub.f32 %v1375, %v1968
        %v1970 = vand.u32 %v1969, 4294901760
        %1971 = vmatmul.mubr.f32.gmra.mrb[0].mxu0 %v1970
        %v1972 = vpop.f32.mrb[0].mxu0
        %v1973 = vadd.f32 %v1830, %v1972
        %v1974 = vpop.f32.mrb[0].mxu0
        %v1975 = vadd.f32 %v1832, %v1974
        %1976 = vmatprep.mubr.f32.mxu0 0.0
        %v1977 = vand.u32 %v1378, 4294901760
        %v1978 = vsub.f32 %v1378, %v1977
        %v1979 = vand.u32 %v1978, 4294901760
        %1980 = vmatmul.mubr.f32.gmra.mrb[0].mxu0 %v1979
        %v1981 = vpop.f32.mrb[0].mxu0
        %v1982 = vadd.f32 %v1838, %v1981
        %v1983 = vpop.f32.mrb[0].mxu0
        %v1984 = vadd.f32 %v1840, %v1983
        %1985 = vmatprep.mubr.f32.mxu0 0.0
        %v1986 = vand.u32 %v1381, 4294901760
        %v1987 = vsub.f32 %v1381, %v1986
        %v1988 = vand.u32 %v1987, 4294901760
        %1989 = vmatmul.mubr.f32.gmra.mrb[0].mxu0 %v1988
        %v1990 = vpop.f32.mrb[0].mxu0
        %v1991 = vadd.f32 %v1846, %v1990
        %v1992 = vpop.f32.mrb[0].mxu0
        %v1993 = vadd.f32 %v1848, %v1992
        %1994 = vdwg.mxu0
        %v1995 = vand.u32 %v310, 4294901760
        %v1996 = vsub.f32 %v310, %v1995
        %v1997 = vand.u32 %v1996, 4294901760
        %1998 = vmatprep.subr.mxu0 %v1997
        %v1999 = vand.u32 %v309, 4294901760
        %v2000 = vsub.f32 %v309, %v1999
        %v2001 = vand.u32 %v2000, 4294901760
        %2002 = vmatpush1.msra.mxu0 %v2001
        %v2003 = vand.u32 %v318, 4294901760
        %v2004 = vsub.f32 %v318, %v2003
        %v2005 = vand.u32 %v2004, 4294901760
        %2006 = vmatprep.subr.mxu0 %v2005
        %v2007 = vand.u32 %v317, 4294901760
        %v2008 = vsub.f32 %v317, %v2007
        %v2009 = vand.u32 %v2008, 4294901760
        %2010 = vmatpush1.msra.mxu0 %v2009
        %v2011 = vand.u32 %v326, 4294901760
        %v2012 = vsub.f32 %v326, %v2011
        %v2013 = vand.u32 %v2012, 4294901760
        %2014 = vmatprep.subr.mxu0 %v2013
        %v2015 = vand.u32 %v325, 4294901760
        %v2016 = vsub.f32 %v325, %v2015
        %v2017 = vand.u32 %v2016, 4294901760
        %2018 = vmatpush1.msra.mxu0 %v2017
        %v2019 = vand.u32 %v334, 4294901760
        %v2020 = vsub.f32 %v334, %v2019
        %v2021 = vand.u32 %v2020, 4294901760
        %2022 = vmatprep.subr.mxu0 %v2021
        %v2023 = vand.u32 %v333, 4294901760
        %v2024 = vsub.f32 %v333, %v2023
        %v2025 = vand.u32 %v2024, 4294901760
        %2026 = vmatpush1.msra.mxu0 %v2025
        %2027 = vmatprep.subr.mxu0 0.0
        %2028 = vmatpush1.msra.mxu0 0.0
        %2029 = vmatprep.subr.mxu0 0.0
        %2030 = vmatpush1.msra.mxu0 0.0
        %2031 = vmatprep.subr.mxu0 0.0
        %2032 = vmatpush1.msra.mxu0 0.0
        %2033 = vmatprep.subr.mxu0 0.0
        %2034 = vmatpush1.msra.mxu0 0.0
        %2035 = vmatprep.subr.mxu0 0.0
        %2036 = vmatpush1.msra.mxu0 0.0
        %2037 = vmatprep.subr.mxu0 0.0
        %2038 = vmatpush1.msra.mxu0 0.0
        %2039 = vmatprep.subr.mxu0 0.0
        %2040 = vmatpush1.msra.mxu0 0.0
        %2041 = vmatprep.subr.mxu0 0.0
        %2042 = vmatpush1.msra.mxu0 0.0
        %2043 = vmatprep.subr.mxu0 0.0
        %2044 = vmatpush1.msra.mxu0 0.0
        %2045 = vmatprep.subr.mxu0 0.0
        %2046 = vmatpush1.msra.mxu0 0.0
        %2047 = vmatprep.subr.mxu0 0.0
        %2048 = vmatpush1.msra.mxu0 0.0
        %2049 = vmatprep.subr.mxu0 0.0
        %2050 = vmatpush1.msra.mxu0 0.0
        %2051 = vmatprep.subr.mxu0 0.0
        %2052 = vmatpush1.msra.mxu0 0.0
        %2053 = vmatprep.subr.mxu0 0.0
        %2054 = vmatpush1.msra.mxu0 0.0
        %2055 = vmatprep.subr.mxu0 0.0
        %2056 = vmatpush1.msra.mxu0 0.0
        %2057 = vmatprep.subr.mxu0 0.0
        %2058 = vmatpush1.msra.mxu0 0.0
        %2059 = vmatprep.subr.mxu0 0.0
        %2060 = vmatpush1.msra.mxu0 0.0
        %2061 = vmatprep.subr.mxu0 0.0
        %2062 = vmatpush1.msra.mxu0 0.0
        %2063 = vmatprep.subr.mxu0 0.0
        %2064 = vmatpush1.msra.mxu0 0.0
        %2065 = vmatprep.subr.mxu0 0.0
        %2066 = vmatpush1.msra.mxu0 0.0
        %2067 = vmatprep.subr.mxu0 0.0
        %2068 = vmatpush1.msra.mxu0 0.0
        %2069 = vmatprep.subr.mxu0 0.0
        %2070 = vmatpush1.msra.mxu0 0.0
        %2071 = vmatprep.subr.mxu0 0.0
        %2072 = vmatpush1.msra.mxu0 0.0
        %2073 = vmatprep.subr.mxu0 0.0
        %2074 = vmatpush1.msra.mxu0 0.0
        %2075 = vmatprep.subr.mxu0 0.0
        %2076 = vmatpush1.msra.mxu0 0.0
        %2077 = vmatprep.subr.mxu0 0.0
        %2078 = vmatpush1.msra.mxu0 0.0
        %2079 = vmatprep.subr.mxu0 0.0
        %2080 = vmatpush1.msra.mxu0 0.0
        %2081 = vmatprep.subr.mxu0 0.0
        %2082 = vmatpush1.msra.mxu0 0.0
        %2083 = vmatprep.mubr.f32.mxu0 0.0
        %v2084 = vand.u32 %v1360, 4294901760
        %2085 = vmatmul.mubr.f32.gmra.mrb[0].mxu0 %v2084
        %v2086 = vpop.f32.mrb[0].mxu0
        %v2087 = vadd.f32 %v1928, %v2086
        %v2088 = vpop.f32.mrb[0].mxu0
        %v2089 = vadd.f32 %v1930, %v2088
        %2090 = vmatprep.mubr.f32.mxu0 0.0
        %v2091 = vand.u32 %v1363, 4294901760
        %2092 = vmatmul.mubr.f32.gmra.mrb[0].mxu0 %v2091
        %v2093 = vpop.f32.mrb[0].mxu0
        %v2094 = vadd.f32 %v1937, %v2093
        %v2095 = vpop.f32.mrb[0].mxu0
        %v2096 = vadd.f32 %v1939, %v2095
        %2097 = vmatprep.mubr.f32.mxu0 0.0
        %v2098 = vand.u32 %v1366, 4294901760
        %2099 = vmatmul.mubr.f32.gmra.mrb[0].mxu0 %v2098
        %v2100 = vpop.f32.mrb[0].mxu0
        %v2101 = vadd.f32 %v1946, %v2100
        %v2102 = vpop.f32.mrb[0].mxu0
        %v2103 = vadd.f32 %v1948, %v2102
        %2104 = vmatprep.mubr.f32.mxu0 0.0
        %v2105 = vand.u32 %v1369, 4294901760
        %2106 = vmatmul.mubr.f32.gmra.mrb[0].mxu0 %v2105
        %v2107 = vpop.f32.mrb[0].mxu0
        %v2108 = vadd.f32 %v1955, %v2107
        %v2109 = vpop.f32.mrb[0].mxu0
        %v2110 = vadd.f32 %v1957, %v2109
        %2111 = vmatprep.mubr.f32.mxu0 0.0
        %v2112 = vand.u32 %v1372, 4294901760
        %2113 = vmatmul.mubr.f32.gmra.mrb[0].mxu0 %v2112
        %v2114 = vpop.f32.mrb[0].mxu0
        %v2115 = vadd.f32 %v1964, %v2114
        %v2116 = vpop.f32.mrb[0].mxu0
        %v2117 = vadd.f32 %v1966, %v2116
        %2118 = vmatprep.mubr.f32.mxu0 0.0
        %v2119 = vand.u32 %v1375, 4294901760
        %2120 = vmatmul.mubr.f32.gmra.mrb[0].mxu0 %v2119
        %v2121 = vpop.f32.mrb[0].mxu0
        %v2122 = vadd.f32 %v1973, %v2121
        %v2123 = vpop.f32.mrb[0].mxu0
        %v2124 = vadd.f32 %v1975, %v2123
        %2125 = vmatprep.mubr.f32.mxu0 0.0
        %v2126 = vand.u32 %v1378, 4294901760
        %2127 = vmatmul.mubr.f32.gmra.mrb[0].mxu0 %v2126
        %v2128 = vpop.f32.mrb[0].mxu0
        %v2129 = vadd.f32 %v1982, %v2128
        %v2130 = vpop.f32.mrb[0].mxu0
        %v2131 = vadd.f32 %v1984, %v2130
        %2132 = vmatprep.mubr.f32.mxu0 0.0
        %v2133 = vand.u32 %v1381, 4294901760
        %2134 = vmatmul.mubr.f32.gmra.mrb[0].mxu0 %v2133
        %v2135 = vpop.f32.mrb[0].mxu0
        %v2136 = vadd.f32 %v1991, %v2135
        %v2137 = vpop.f32.mrb[0].mxu0
        %v2138 = vadd.f32 %v1993, %v2137
        %2139 = vdwg.mxu0
        %v2140 = vand.u32 %v310, 4294901760
        %2141 = vmatprep.subr.mxu0 %v2140
        %v2142 = vand.u32 %v309, 4294901760
        %2143 = vmatpush1.msra.mxu0 %v2142
        %v2144 = vand.u32 %v318, 4294901760
        %2145 = vmatprep.subr.mxu0 %v2144
        %v2146 = vand.u32 %v317, 4294901760
        %2147 = vmatpush1.msra.mxu0 %v2146
        %v2148 = vand.u32 %v326, 4294901760
        %2149 = vmatprep.subr.mxu0 %v2148
        %v2150 = vand.u32 %v325, 4294901760
        %2151 = vmatpush1.msra.mxu0 %v2150
        %v2152 = vand.u32 %v334, 4294901760
        %2153 = vmatprep.subr.mxu0 %v2152
        %v2154 = vand.u32 %v333, 4294901760
        %2155 = vmatpush1.msra.mxu0 %v2154
        %2156 = vmatprep.subr.mxu0 0.0
        %2157 = vmatpush1.msra.mxu0 0.0
        %2158 = vmatprep.subr.mxu0 0.0
        %2159 = vmatpush1.msra.mxu0 0.0
        %2160 = vmatprep.subr.mxu0 0.0
        %2161 = vmatpush1.msra.mxu0 0.0
        %2162 = vmatprep.subr.mxu0 0.0
        %2163 = vmatpush1.msra.mxu0 0.0
        %2164 = vmatprep.subr.mxu0 0.0
        %2165 = vmatpush1.msra.mxu0 0.0
        %2166 = vmatprep.subr.mxu0 0.0
        %2167 = vmatpush1.msra.mxu0 0.0
        %2168 = vmatprep.subr.mxu0 0.0
        %2169 = vmatpush1.msra.mxu0 0.0
        %2170 = vmatprep.subr.mxu0 0.0
        %2171 = vmatpush1.msra.mxu0 0.0
        %2172 = vmatprep.subr.mxu0 0.0
        %2173 = vmatpush1.msra.mxu0 0.0
        %2174 = vmatprep.subr.mxu0 0.0
        %2175 = vmatpush1.msra.mxu0 0.0
        %2176 = vmatprep.subr.mxu0 0.0
        %2177 = vmatpush1.msra.mxu0 0.0
        %2178 = vmatprep.subr.mxu0 0.0
        %2179 = vmatpush1.msra.mxu0 0.0
        %2180 = vmatprep.subr.mxu0 0.0
        %2181 = vmatpush1.msra.mxu0 0.0
        %2182 = vmatprep.subr.mxu0 0.0
        %2183 = vmatpush1.msra.mxu0 0.0
        %2184 = vmatprep.subr.mxu0 0.0
        %2185 = vmatpush1.msra.mxu0 0.0
        %2186 = vmatprep.subr.mxu0 0.0
        %2187 = vmatpush1.msra.mxu0 0.0
        %2188 = vmatprep.subr.mxu0 0.0
        %2189 = vmatpush1.msra.mxu0 0.0
        %2190 = vmatprep.subr.mxu0 0.0
        %2191 = vmatpush1.msra.mxu0 0.0
        %2192 = vmatprep.subr.mxu0 0.0
        %2193 = vmatpush1.msra.mxu0 0.0
        %2194 = vmatprep.subr.mxu0 0.0
        %2195 = vmatpush1.msra.mxu0 0.0
        %2196 = vmatprep.subr.mxu0 0.0
        %2197 = vmatpush1.msra.mxu0 0.0
        %2198 = vmatprep.subr.mxu0 0.0
        %2199 = vmatpush1.msra.mxu0 0.0
        %2200 = vmatprep.subr.mxu0 0.0
        %2201 = vmatpush1.msra.mxu0 0.0
        %2202 = vmatprep.subr.mxu0 0.0
        %2203 = vmatpush1.msra.mxu0 0.0
        %2204 = vmatprep.subr.mxu0 0.0
        %2205 = vmatpush1.msra.mxu0 0.0
        %2206 = vmatprep.subr.mxu0 0.0
        %2207 = vmatpush1.msra.mxu0 0.0
        %2208 = vmatprep.subr.mxu0 0.0
        %2209 = vmatpush1.msra.mxu0 0.0
        %2210 = vmatprep.subr.mxu0 0.0
        %2211 = vmatpush1.msra.mxu0 0.0
        %2212 = vmatprep.mubr.f32.mxu0 0.0
        %v2213 = vand.u32 %v1360, 4294901760
        %2214 = vmatmul.mubr.f32.gmra.mrb[0].mxu0 %v2213
        %v2215 = vpop.f32.mrb[0].mxu0
        %v2216 = vadd.f32 %v2087, %v2215
        %v2217 = vpop.f32.mrb[0].mxu0
        %v2218 = vadd.f32 %v2089, %v2217
        %2219 = vmatprep.mubr.f32.mxu0 0.0
        %v2220 = vand.u32 %v1363, 4294901760
        %2221 = vmatmul.mubr.f32.gmra.mrb[0].mxu0 %v2220
        %v2222 = vpop.f32.mrb[0].mxu0
        %v2223 = vadd.f32 %v2094, %v2222
        %v2224 = vpop.f32.mrb[0].mxu0
        %v2225 = vadd.f32 %v2096, %v2224
        %2226 = vmatprep.mubr.f32.mxu0 0.0
        %v2227 = vand.u32 %v1366, 4294901760
        %2228 = vmatmul.mubr.f32.gmra.mrb[0].mxu0 %v2227
        %v2229 = vpop.f32.mrb[0].mxu0
        %v2230 = vadd.f32 %v2101, %v2229
        %v2231 = vpop.f32.mrb[0].mxu0
        %v2232 = vadd.f32 %v2103, %v2231
        %2233 = vmatprep.mubr.f32.mxu0 0.0
        %v2234 = vand.u32 %v1369, 4294901760
        %2235 = vmatmul.mubr.f32.gmra.mrb[0].mxu0 %v2234
        %v2236 = vpop.f32.mrb[0].mxu0
        %v2237 = vadd.f32 %v2108, %v2236
        %v2238 = vpop.f32.mrb[0].mxu0
        %v2239 = vadd.f32 %v2110, %v2238
        %2240 = vmatprep.mubr.f32.mxu0 0.0
        %v2241 = vand.u32 %v1372, 4294901760
        %2242 = vmatmul.mubr.f32.gmra.mrb[0].mxu0 %v2241
        %v2243 = vpop.f32.mrb[0].mxu0
        %v2244 = vadd.f32 %v2115, %v2243
        %v2245 = vpop.f32.mrb[0].mxu0
        %v2246 = vadd.f32 %v2117, %v2245
        %2247 = vmatprep.mubr.f32.mxu0 0.0
        %v2248 = vand.u32 %v1375, 4294901760
        %2249 = vmatmul.mubr.f32.gmra.mrb[0].mxu0 %v2248
        %v2250 = vpop.f32.mrb[0].mxu0
        %v2251 = vadd.f32 %v2122, %v2250
        %v2252 = vpop.f32.mrb[0].mxu0
        %v2253 = vadd.f32 %v2124, %v2252
        %2254 = vmatprep.mubr.f32.mxu0 0.0
        %v2255 = vand.u32 %v1378, 4294901760
        %2256 = vmatmul.mubr.f32.gmra.mrb[0].mxu0 %v2255
        %v2257 = vpop.f32.mrb[0].mxu0
        %v2258 = vadd.f32 %v2129, %v2257
        %v2259 = vpop.f32.mrb[0].mxu0
        %v2260 = vadd.f32 %v2131, %v2259
        %2261 = vmatprep.mubr.f32.mxu0 0.0
        %v2262 = vand.u32 %v1381, 4294901760
        %2263 = vmatmul.mubr.f32.gmra.mrb[0].mxu0 %v2262
        %v2264 = vpop.f32.mrb[0].mxu0
        %v2265 = vadd.f32 %v2136, %v2264
        %v2266 = vpop.f32.mrb[0].mxu0
        %v2267 = vadd.f32 %v2138, %v2266
        %2268 = vdwg.mxu0
        %v2269 = vand.u32 %v312, 4294901760
        %2270 = vmatprep.subr.mxu0 %v2269
        %v2271 = vand.u32 %v311, 4294901760
        %2272 = vmatpush1.msra.mxu0 %v2271
        %v2273 = vand.u32 %v320, 4294901760
        %2274 = vmatprep.subr.mxu0 %v2273
        %v2275 = vand.u32 %v319, 4294901760
        %2276 = vmatpush1.msra.mxu0 %v2275
        %v2277 = vand.u32 %v328, 4294901760
        %2278 = vmatprep.subr.mxu0 %v2277
        %v2279 = vand.u32 %v327, 4294901760
        %2280 = vmatpush1.msra.mxu0 %v2279
        %v2281 = vand.u32 %v336, 4294901760
        %2282 = vmatprep.subr.mxu0 %v2281
        %v2283 = vand.u32 %v335, 4294901760
        %2284 = vmatpush1.msra.mxu0 %v2283
        %2285 = vmatprep.subr.mxu0 0.0
        %2286 = vmatpush1.msra.mxu0 0.0
        %2287 = vmatprep.subr.mxu0 0.0
        %2288 = vmatpush1.msra.mxu0 0.0
        %2289 = vmatprep.subr.mxu0 0.0
        %2290 = vmatpush1.msra.mxu0 0.0
        %2291 = vmatprep.subr.mxu0 0.0
        %2292 = vmatpush1.msra.mxu0 0.0
        %2293 = vmatprep.subr.mxu0 0.0
        %2294 = vmatpush1.msra.mxu0 0.0
        %2295 = vmatprep.subr.mxu0 0.0
        %2296 = vmatpush1.msra.mxu0 0.0
        %2297 = vmatprep.subr.mxu0 0.0
        %2298 = vmatpush1.msra.mxu0 0.0
        %2299 = vmatprep.subr.mxu0 0.0
        %2300 = vmatpush1.msra.mxu0 0.0
        %2301 = vmatprep.subr.mxu0 0.0
        %2302 = vmatpush1.msra.mxu0 0.0
        %2303 = vmatprep.subr.mxu0 0.0
        %2304 = vmatpush1.msra.mxu0 0.0
        %2305 = vmatprep.subr.mxu0 0.0
        %2306 = vmatpush1.msra.mxu0 0.0
        %2307 = vmatprep.subr.mxu0 0.0
        %2308 = vmatpush1.msra.mxu0 0.0
        %2309 = vmatprep.subr.mxu0 0.0
        %2310 = vmatpush1.msra.mxu0 0.0
        %2311 = vmatprep.subr.mxu0 0.0
        %2312 = vmatpush1.msra.mxu0 0.0
        %2313 = vmatprep.subr.mxu0 0.0
        %2314 = vmatpush1.msra.mxu0 0.0
        %2315 = vmatprep.subr.mxu0 0.0
        %2316 = vmatpush1.msra.mxu0 0.0
        %2317 = vmatprep.subr.mxu0 0.0
        %2318 = vmatpush1.msra.mxu0 0.0
        %2319 = vmatprep.subr.mxu0 0.0
        %2320 = vmatpush1.msra.mxu0 0.0
        %2321 = vmatprep.subr.mxu0 0.0
        %2322 = vmatpush1.msra.mxu0 0.0
        %2323 = vmatprep.subr.mxu0 0.0
        %2324 = vmatpush1.msra.mxu0 0.0
        %2325 = vmatprep.subr.mxu0 0.0
        %2326 = vmatpush1.msra.mxu0 0.0
        %2327 = vmatprep.subr.mxu0 0.0
        %2328 = vmatpush1.msra.mxu0 0.0
        %2329 = vmatprep.subr.mxu0 0.0
        %2330 = vmatpush1.msra.mxu0 0.0
        %2331 = vmatprep.subr.mxu0 0.0
        %2332 = vmatpush1.msra.mxu0 0.0
        %2333 = vmatprep.subr.mxu0 0.0
        %2334 = vmatpush1.msra.mxu0 0.0
        %2335 = vmatprep.subr.mxu0 0.0
        %2336 = vmatpush1.msra.mxu0 0.0
        %2337 = vmatprep.subr.mxu0 0.0
        %2338 = vmatpush1.msra.mxu0 0.0
        %2339 = vmatprep.subr.mxu0 0.0
        %2340 = vmatpush1.msra.mxu0 0.0
        %2341 = vmatprep.mubr.f32.mxu0 0.0
        %v2342 = vand.u32 %v1360, 4294901760
        %v2343 = vsub.f32 %v1360, %v2342
        %v2344 = vand.u32 %v2343, 4294901760
        %v2345 = vsub.f32 %v2343, %v2344
        %v2346 = vand.u32 %v2345, 4294901760
        %2347 = vmatmul.mubr.f32.gmra.mrb[0].mxu0 %v2346
        %v2348 = vpop.f32.mrb[0].mxu0
        %v2349 = vadd.f32 0.0, %v2348
        %v2350 = vpop.f32.mrb[0].mxu0
        %v2351 = vadd.f32 0.0, %v2350
        %2352 = vmatprep.mubr.f32.mxu0 0.0
        %v2353 = vand.u32 %v1363, 4294901760
        %v2354 = vsub.f32 %v1363, %v2353
        %v2355 = vand.u32 %v2354, 4294901760
        %v2356 = vsub.f32 %v2354, %v2355
        %v2357 = vand.u32 %v2356, 4294901760
        %2358 = vmatmul.mubr.f32.gmra.mrb[0].mxu0 %v2357
        %v2359 = vpop.f32.mrb[0].mxu0
        %v2360 = vadd.f32 0.0, %v2359
        %v2361 = vpop.f32.mrb[0].mxu0
        %v2362 = vadd.f32 0.0, %v2361
        %2363 = vmatprep.mubr.f32.mxu0 0.0
        %v2364 = vand.u32 %v1366, 4294901760
        %v2365 = vsub.f32 %v1366, %v2364
        %v2366 = vand.u32 %v2365, 4294901760
        %v2367 = vsub.f32 %v2365, %v2366
        %v2368 = vand.u32 %v2367, 4294901760
        %2369 = vmatmul.mubr.f32.gmra.mrb[0].mxu0 %v2368
        %v2370 = vpop.f32.mrb[0].mxu0
        %v2371 = vadd.f32 0.0, %v2370
        %v2372 = vpop.f32.mrb[0].mxu0
        %v2373 = vadd.f32 0.0, %v2372
        %2374 = vmatprep.mubr.f32.mxu0 0.0
        %v2375 = vand.u32 %v1369, 4294901760
        %v2376 = vsub.f32 %v1369, %v2375
        %v2377 = vand.u32 %v2376, 4294901760
        %v2378 = vsub.f32 %v2376, %v2377
        %v2379 = vand.u32 %v2378, 4294901760
        %2380 = vmatmul.mubr.f32.gmra.mrb[0].mxu0 %v2379
        %v2381 = vpop.f32.mrb[0].mxu0
        %v2382 = vadd.f32 0.0, %v2381
        %v2383 = vpop.f32.mrb[0].mxu0
        %v2384 = vadd.f32 0.0, %v2383
        %2385 = vmatprep.mubr.f32.mxu0 0.0
        %v2386 = vand.u32 %v1372, 4294901760
        %v2387 = vsub.f32 %v1372, %v2386
        %v2388 = vand.u32 %v2387, 4294901760
        %v2389 = vsub.f32 %v2387, %v2388
        %v2390 = vand.u32 %v2389, 4294901760
        %2391 = vmatmul.mubr.f32.gmra.mrb[0].mxu0 %v2390
        %v2392 = vpop.f32.mrb[0].mxu0
        %v2393 = vadd.f32 0.0, %v2392
        %v2394 = vpop.f32.mrb[0].mxu0
        %v2395 = vadd.f32 0.0, %v2394
        %2396 = vmatprep.mubr.f32.mxu0 0.0
        %v2397 = vand.u32 %v1375, 4294901760
        %v2398 = vsub.f32 %v1375, %v2397
        %v2399 = vand.u32 %v2398, 4294901760
        %v2400 = vsub.f32 %v2398, %v2399
        %v2401 = vand.u32 %v2400, 4294901760
        %2402 = vmatmul.mubr.f32.gmra.mrb[0].mxu0 %v2401
        %v2403 = vpop.f32.mrb[0].mxu0
        %v2404 = vadd.f32 0.0, %v2403
        %v2405 = vpop.f32.mrb[0].mxu0
        %v2406 = vadd.f32 0.0, %v2405
        %2407 = vmatprep.mubr.f32.mxu0 0.0
        %v2408 = vand.u32 %v1378, 4294901760
        %v2409 = vsub.f32 %v1378, %v2408
        %v2410 = vand.u32 %v2409, 4294901760
        %v2411 = vsub.f32 %v2409, %v2410
        %v2412 = vand.u32 %v2411, 4294901760
        %2413 = vmatmul.mubr.f32.gmra.mrb[0].mxu0 %v2412
        %v2414 = vpop.f32.mrb[0].mxu0
        %v2415 = vadd.f32 0.0, %v2414
        %v2416 = vpop.f32.mrb[0].mxu0
        %v2417 = vadd.f32 0.0, %v2416
        %2418 = vmatprep.mubr.f32.mxu0 0.0
        %v2419 = vand.u32 %v1381, 4294901760
        %v2420 = vsub.f32 %v1381, %v2419
        %v2421 = vand.u32 %v2420, 4294901760
        %v2422 = vsub.f32 %v2420, %v2421
        %v2423 = vand.u32 %v2422, 4294901760
        %2424 = vmatmul.mubr.f32.gmra.mrb[0].mxu0 %v2423
        %v2425 = vpop.f32.mrb[0].mxu0
        %v2426 = vadd.f32 0.0, %v2425
        %v2427 = vpop.f32.mrb[0].mxu0
        %v2428 = vadd.f32 0.0, %v2427
        %2429 = vdwg.mxu0
        %v2430 = vand.u32 %v312, 4294901760
        %v2431 = vsub.f32 %v312, %v2430
        %v2432 = vand.u32 %v2431, 4294901760
        %v2433 = vsub.f32 %v2431, %v2432
        %v2434 = vand.u32 %v2433, 4294901760
        %2435 = vmatprep.subr.mxu0 %v2434
        %v2436 = vand.u32 %v311, 4294901760
        %v2437 = vsub.f32 %v311, %v2436
        %v2438 = vand.u32 %v2437, 4294901760
        %v2439 = vsub.f32 %v2437, %v2438
        %v2440 = vand.u32 %v2439, 4294901760
        %2441 = vmatpush1.msra.mxu0 %v2440
        %v2442 = vand.u32 %v320, 4294901760
        %v2443 = vsub.f32 %v320, %v2442
        %v2444 = vand.u32 %v2443, 4294901760
        %v2445 = vsub.f32 %v2443, %v2444
        %v2446 = vand.u32 %v2445, 4294901760
        %2447 = vmatprep.subr.mxu0 %v2446
        %v2448 = vand.u32 %v319, 4294901760
        %v2449 = vsub.f32 %v319, %v2448
        %v2450 = vand.u32 %v2449, 4294901760
        %v2451 = vsub.f32 %v2449, %v2450
        %v2452 = vand.u32 %v2451, 4294901760
        %2453 = vmatpush1.msra.mxu0 %v2452
        %v2454 = vand.u32 %v328, 4294901760
        %v2455 = vsub.f32 %v328, %v2454
        %v2456 = vand.u32 %v2455, 4294901760
        %v2457 = vsub.f32 %v2455, %v2456
        %v2458 = vand.u32 %v2457, 4294901760
        %2459 = vmatprep.subr.mxu0 %v2458
        %v2460 = vand.u32 %v327, 4294901760
        %v2461 = vsub.f32 %v327, %v2460
        %v2462 = vand.u32 %v2461, 4294901760
        %v2463 = vsub.f32 %v2461, %v2462
        %v2464 = vand.u32 %v2463, 4294901760
        %2465 = vmatpush1.msra.mxu0 %v2464
        %v2466 = vand.u32 %v336, 4294901760
        %v2467 = vsub.f32 %v336, %v2466
        %v2468 = vand.u32 %v2467, 4294901760
        %v2469 = vsub.f32 %v2467, %v2468
        %v2470 = vand.u32 %v2469, 4294901760
        %2471 = vmatprep.subr.mxu0 %v2470
        %v2472 = vand.u32 %v335, 4294901760
        %v2473 = vsub.f32 %v335, %v2472
        %v2474 = vand.u32 %v2473, 4294901760
        %v2475 = vsub.f32 %v2473, %v2474
        %v2476 = vand.u32 %v2475, 4294901760
        %2477 = vmatpush1.msra.mxu0 %v2476
        %2478 = vmatprep.subr.mxu0 0.0
        %2479 = vmatpush1.msra.mxu0 0.0
        %2480 = vmatprep.subr.mxu0 0.0
        %2481 = vmatpush1.msra.mxu0 0.0
        %2482 = vmatprep.subr.mxu0 0.0
        %2483 = vmatpush1.msra.mxu0 0.0
        %2484 = vmatprep.subr.mxu0 0.0
        %2485 = vmatpush1.msra.mxu0 0.0
        %2486 = vmatprep.subr.mxu0 0.0
        %2487 = vmatpush1.msra.mxu0 0.0
        %2488 = vmatprep.subr.mxu0 0.0
        %2489 = vmatpush1.msra.mxu0 0.0
        %2490 = vmatprep.subr.mxu0 0.0
        %2491 = vmatpush1.msra.mxu0 0.0
        %2492 = vmatprep.subr.mxu0 0.0
        %2493 = vmatpush1.msra.mxu0 0.0
        %2494 = vmatprep.subr.mxu0 0.0
        %2495 = vmatpush1.msra.mxu0 0.0
        %2496 = vmatprep.subr.mxu0 0.0
        %2497 = vmatpush1.msra.mxu0 0.0
        %2498 = vmatprep.subr.mxu0 0.0
        %2499 = vmatpush1.msra.mxu0 0.0
        %2500 = vmatprep.subr.mxu0 0.0
        %2501 = vmatpush1.msra.mxu0 0.0
        %2502 = vmatprep.subr.mxu0 0.0
        %2503 = vmatpush1.msra.mxu0 0.0
        %2504 = vmatprep.subr.mxu0 0.0
        %2505 = vmatpush1.msra.mxu0 0.0
        %2506 = vmatprep.subr.mxu0 0.0
        %2507 = vmatpush1.msra.mxu0 0.0
        %2508 = vmatprep.subr.mxu0 0.0
        %2509 = vmatpush1.msra.mxu0 0.0
        %2510 = vmatprep.subr.mxu0 0.0
        %2511 = vmatpush1.msra.mxu0 0.0
        %2512 = vmatprep.subr.mxu0 0.0
        %2513 = vmatpush1.msra.mxu0 0.0
        %2514 = vmatprep.subr.mxu0 0.0
        %2515 = vmatpush1.msra.mxu0 0.0
        %2516 = vmatprep.subr.mxu0 0.0
        %2517 = vmatpush1.msra.mxu0 0.0
        %2518 = vmatprep.subr.mxu0 0.0
        %2519 = vmatpush1.msra.mxu0 0.0
        %2520 = vmatprep.subr.mxu0 0.0
        %2521 = vmatpush1.msra.mxu0 0.0
        %2522 = vmatprep.subr.mxu0 0.0
        %2523 = vmatpush1.msra.mxu0 0.0
        %2524 = vmatprep.subr.mxu0 0.0
        %2525 = vmatpush1.msra.mxu0 0.0
        %2526 = vmatprep.subr.mxu0 0.0
        %2527 = vmatpush1.msra.mxu0 0.0
        %2528 = vmatprep.subr.mxu0 0.0
        %2529 = vmatpush1.msra.mxu0 0.0
        %2530 = vmatprep.subr.mxu0 0.0
        %2531 = vmatpush1.msra.mxu0 0.0
        %2532 = vmatprep.subr.mxu0 0.0
        %2533 = vmatpush1.msra.mxu0 0.0
        %2534 = vmatprep.mubr.f32.mxu0 0.0
        %v2535 = vand.u32 %v1360, 4294901760
        %2536 = vmatmul.mubr.f32.gmra.mrb[0].mxu0 %v2535
        %v2537 = vpop.f32.mrb[0].mxu0
        %v2538 = vadd.f32 %v2349, %v2537
        %v2539 = vpop.f32.mrb[0].mxu0
        %v2540 = vadd.f32 %v2351, %v2539
        %2541 = vmatprep.mubr.f32.mxu0 0.0
        %v2542 = vand.u32 %v1363, 4294901760
        %2543 = vmatmul.mubr.f32.gmra.mrb[0].mxu0 %v2542
        %v2544 = vpop.f32.mrb[0].mxu0
        %v2545 = vadd.f32 %v2360, %v2544
        %v2546 = vpop.f32.mrb[0].mxu0
        %v2547 = vadd.f32 %v2362, %v2546
        %2548 = vmatprep.mubr.f32.mxu0 0.0
        %v2549 = vand.u32 %v1366, 4294901760
        %2550 = vmatmul.mubr.f32.gmra.mrb[0].mxu0 %v2549
        %v2551 = vpop.f32.mrb[0].mxu0
        %v2552 = vadd.f32 %v2371, %v2551
        %v2553 = vpop.f32.mrb[0].mxu0
        %v2554 = vadd.f32 %v2373, %v2553
        %2555 = vmatprep.mubr.f32.mxu0 0.0
        %v2556 = vand.u32 %v1369, 4294901760
        %2557 = vmatmul.mubr.f32.gmra.mrb[0].mxu0 %v2556
        %v2558 = vpop.f32.mrb[0].mxu0
        %v2559 = vadd.f32 %v2382, %v2558
        %v2560 = vpop.f32.mrb[0].mxu0
        %v2561 = vadd.f32 %v2384, %v2560
        %2562 = vmatprep.mubr.f32.mxu0 0.0
        %v2563 = vand.u32 %v1372, 4294901760
        %2564 = vmatmul.mubr.f32.gmra.mrb[0].mxu0 %v2563
        %v2565 = vpop.f32.mrb[0].mxu0
        %v2566 = vadd.f32 %v2393, %v2565
        %v2567 = vpop.f32.mrb[0].mxu0
        %v2568 = vadd.f32 %v2395, %v2567
        %2569 = vmatprep.mubr.f32.mxu0 0.0
        %v2570 = vand.u32 %v1375, 4294901760
        %2571 = vmatmul.mubr.f32.gmra.mrb[0].mxu0 %v2570
        %v2572 = vpop.f32.mrb[0].mxu0
        %v2573 = vadd.f32 %v2404, %v2572
        %v2574 = vpop.f32.mrb[0].mxu0
        %v2575 = vadd.f32 %v2406, %v2574
        %2576 = vmatprep.mubr.f32.mxu0 0.0
        %v2577 = vand.u32 %v1378, 4294901760
        %2578 = vmatmul.mubr.f32.gmra.mrb[0].mxu0 %v2577
        %v2579 = vpop.f32.mrb[0].mxu0
        %v2580 = vadd.f32 %v2415, %v2579
        %v2581 = vpop.f32.mrb[0].mxu0
        %v2582 = vadd.f32 %v2417, %v2581
        %2583 = vmatprep.mubr.f32.mxu0 0.0
        %v2584 = vand.u32 %v1381, 4294901760
        %2585 = vmatmul.mubr.f32.gmra.mrb[0].mxu0 %v2584
        %v2586 = vpop.f32.mrb[0].mxu0
        %v2587 = vadd.f32 %v2426, %v2586
        %v2588 = vpop.f32.mrb[0].mxu0
        %v2589 = vadd.f32 %v2428, %v2588
        %2590 = vdwg.mxu0
        %v2591 = vand.u32 %v312, 4294901760
        %v2592 = vsub.f32 %v312, %v2591
        %2593 = vmatprep.subr.mxu0 %v2592
        %v2594 = vand.u32 %v311, 4294901760
        %v2595 = vsub.f32 %v311, %v2594
        %2596 = vmatpush1.msra.mxu0 %v2595
        %v2597 = vand.u32 %v320, 4294901760
        %v2598 = vsub.f32 %v320, %v2597
        %2599 = vmatprep.subr.mxu0 %v2598
        %v2600 = vand.u32 %v319, 4294901760
        %v2601 = vsub.f32 %v319, %v2600
        %2602 = vmatpush1.msra.mxu0 %v2601
        %v2603 = vand.u32 %v328, 4294901760
        %v2604 = vsub.f32 %v328, %v2603
        %2605 = vmatprep.subr.mxu0 %v2604
        %v2606 = vand.u32 %v327, 4294901760
        %v2607 = vsub.f32 %v327, %v2606
        %2608 = vmatpush1.msra.mxu0 %v2607
        %v2609 = vand.u32 %v336, 4294901760
        %v2610 = vsub.f32 %v336, %v2609
        %2611 = vmatprep.subr.mxu0 %v2610
        %v2612 = vand.u32 %v335, 4294901760
        %v2613 = vsub.f32 %v335, %v2612
        %2614 = vmatpush1.msra.mxu0 %v2613
        %2615 = vmatprep.subr.mxu0 0.0
        %2616 = vmatpush1.msra.mxu0 0.0
        %2617 = vmatprep.subr.mxu0 0.0
        %2618 = vmatpush1.msra.mxu0 0.0
        %2619 = vmatprep.subr.mxu0 0.0
        %2620 = vmatpush1.msra.mxu0 0.0
        %2621 = vmatprep.subr.mxu0 0.0
        %2622 = vmatpush1.msra.mxu0 0.0
        %2623 = vmatprep.subr.mxu0 0.0
        %2624 = vmatpush1.msra.mxu0 0.0
        %2625 = vmatprep.subr.mxu0 0.0
        %2626 = vmatpush1.msra.mxu0 0.0
        %2627 = vmatprep.subr.mxu0 0.0
        %2628 = vmatpush1.msra.mxu0 0.0
        %2629 = vmatprep.subr.mxu0 0.0
        %2630 = vmatpush1.msra.mxu0 0.0
        %2631 = vmatprep.subr.mxu0 0.0
        %2632 = vmatpush1.msra.mxu0 0.0
        %2633 = vmatprep.subr.mxu0 0.0
        %2634 = vmatpush1.msra.mxu0 0.0
        %2635 = vmatprep.subr.mxu0 0.0
        %2636 = vmatpush1.msra.mxu0 0.0
        %2637 = vmatprep.subr.mxu0 0.0
        %2638 = vmatpush1.msra.mxu0 0.0
        %2639 = vmatprep.subr.mxu0 0.0
        %2640 = vmatpush1.msra.mxu0 0.0
        %2641 = vmatprep.subr.mxu0 0.0
        %2642 = vmatpush1.msra.mxu0 0.0
        %2643 = vmatprep.subr.mxu0 0.0
        %2644 = vmatpush1.msra.mxu0 0.0
        %2645 = vmatprep.subr.mxu0 0.0
        %2646 = vmatpush1.msra.mxu0 0.0
        %2647 = vmatprep.subr.mxu0 0.0
        %2648 = vmatpush1.msra.mxu0 0.0
        %2649 = vmatprep.subr.mxu0 0.0
        %2650 = vmatpush1.msra.mxu0 0.0
        %2651 = vmatprep.subr.mxu0 0.0
        %2652 = vmatpush1.msra.mxu0 0.0
        %2653 = vmatprep.subr.mxu0 0.0
        %2654 = vmatpush1.msra.mxu0 0.0
        %2655 = vmatprep.subr.mxu0 0.0
        %2656 = vmatpush1.msra.mxu0 0.0
        %2657 = vmatprep.subr.mxu0 0.0
        %2658 = vmatpush1.msra.mxu0 0.0
        %2659 = vmatprep.subr.mxu0 0.0
        %2660 = vmatpush1.msra.mxu0 0.0
        %2661 = vmatprep.subr.mxu0 0.0
        %2662 = vmatpush1.msra.mxu0 0.0
        %2663 = vmatprep.subr.mxu0 0.0
        %2664 = vmatpush1.msra.mxu0 0.0
        %2665 = vmatprep.subr.mxu0 0.0
        %2666 = vmatpush1.msra.mxu0 0.0
        %2667 = vmatprep.subr.mxu0 0.0
        %2668 = vmatpush1.msra.mxu0 0.0
        %2669 = vmatprep.subr.mxu0 0.0
        %2670 = vmatpush1.msra.mxu0 0.0
        %2671 = vmatprep.mubr.f32.mxu0 0.0
        %v2672 = vand.u32 %v1360, 4294901760
        %v2673 = vsub.f32 %v1360, %v2672
        %2674 = vmatmul.mubr.f32.gmra.mrb[0].mxu0 %v2673
        %v2675 = vpop.f32.mrb[0].mxu0
        %v2676 = vadd.f32 %v2538, %v2675
        %v2677 = vpop.f32.mrb[0].mxu0
        %v2678 = vadd.f32 %v2540, %v2677
        %2679 = vmatprep.mubr.f32.mxu0 0.0
        %v2680 = vand.u32 %v1363, 4294901760
        %v2681 = vsub.f32 %v1363, %v2680
        %2682 = vmatmul.mubr.f32.gmra.mrb[0].mxu0 %v2681
        %v2683 = vpop.f32.mrb[0].mxu0
        %v2684 = vadd.f32 %v2545, %v2683
        %v2685 = vpop.f32.mrb[0].mxu0
        %v2686 = vadd.f32 %v2547, %v2685
        %2687 = vmatprep.mubr.f32.mxu0 0.0
        %v2688 = vand.u32 %v1366, 4294901760
        %v2689 = vsub.f32 %v1366, %v2688
        %2690 = vmatmul.mubr.f32.gmra.mrb[0].mxu0 %v2689
        %v2691 = vpop.f32.mrb[0].mxu0
        %v2692 = vadd.f32 %v2552, %v2691
        %v2693 = vpop.f32.mrb[0].mxu0
        %v2694 = vadd.f32 %v2554, %v2693
        %2695 = vmatprep.mubr.f32.mxu0 0.0
        %v2696 = vand.u32 %v1369, 4294901760
        %v2697 = vsub.f32 %v1369, %v2696
        %2698 = vmatmul.mubr.f32.gmra.mrb[0].mxu0 %v2697
        %v2699 = vpop.f32.mrb[0].mxu0
        %v2700 = vadd.f32 %v2559, %v2699
        %v2701 = vpop.f32.mrb[0].mxu0
        %v2702 = vadd.f32 %v2561, %v2701
        %2703 = vmatprep.mubr.f32.mxu0 0.0
        %v2704 = vand.u32 %v1372, 4294901760
        %v2705 = vsub.f32 %v1372, %v2704
        %2706 = vmatmul.mubr.f32.gmra.mrb[0].mxu0 %v2705
        %v2707 = vpop.f32.mrb[0].mxu0
        %v2708 = vadd.f32 %v2566, %v2707
        %v2709 = vpop.f32.mrb[0].mxu0
        %v2710 = vadd.f32 %v2568, %v2709
        %2711 = vmatprep.mubr.f32.mxu0 0.0
        %v2712 = vand.u32 %v1375, 4294901760
        %v2713 = vsub.f32 %v1375, %v2712
        %2714 = vmatmul.mubr.f32.gmra.mrb[0].mxu0 %v2713
        %v2715 = vpop.f32.mrb[0].mxu0
        %v2716 = vadd.f32 %v2573, %v2715
        %v2717 = vpop.f32.mrb[0].mxu0
        %v2718 = vadd.f32 %v2575, %v2717
        %2719 = vmatprep.mubr.f32.mxu0 0.0
        %v2720 = vand.u32 %v1378, 4294901760
        %v2721 = vsub.f32 %v1378, %v2720
        %2722 = vmatmul.mubr.f32.gmra.mrb[0].mxu0 %v2721
        %v2723 = vpop.f32.mrb[0].mxu0
        %v2724 = vadd.f32 %v2580, %v2723
        %v2725 = vpop.f32.mrb[0].mxu0
        %v2726 = vadd.f32 %v2582, %v2725
        %2727 = vmatprep.mubr.f32.mxu0 0.0
        %v2728 = vand.u32 %v1381, 4294901760
        %v2729 = vsub.f32 %v1381, %v2728
        %2730 = vmatmul.mubr.f32.gmra.mrb[0].mxu0 %v2729
        %v2731 = vpop.f32.mrb[0].mxu0
        %v2732 = vadd.f32 %v2587, %v2731
        %v2733 = vpop.f32.mrb[0].mxu0
        %v2734 = vadd.f32 %v2589, %v2733
        %2735 = vdwg.mxu0
        %v2736 = vand.u32 %v312, 4294901760
        %2737 = vmatprep.subr.mxu0 %v2736
        %v2738 = vand.u32 %v311, 4294901760
        %2739 = vmatpush1.msra.mxu0 %v2738
        %v2740 = vand.u32 %v320, 4294901760
        %2741 = vmatprep.subr.mxu0 %v2740
        %v2742 = vand.u32 %v319, 4294901760
        %2743 = vmatpush1.msra.mxu0 %v2742
        %v2744 = vand.u32 %v328, 4294901760
        %2745 = vmatprep.subr.mxu0 %v2744
        %v2746 = vand.u32 %v327, 4294901760
        %2747 = vmatpush1.msra.mxu0 %v2746
        %v2748 = vand.u32 %v336, 4294901760
        %2749 = vmatprep.subr.mxu0 %v2748
        %v2750 = vand.u32 %v335, 4294901760
        %2751 = vmatpush1.msra.mxu0 %v2750
        %2752 = vmatprep.subr.mxu0 0.0
        %2753 = vmatpush1.msra.mxu0 0.0
        %2754 = vmatprep.subr.mxu0 0.0
        %2755 = vmatpush1.msra.mxu0 0.0
        %2756 = vmatprep.subr.mxu0 0.0
        %2757 = vmatpush1.msra.mxu0 0.0
        %2758 = vmatprep.subr.mxu0 0.0
        %2759 = vmatpush1.msra.mxu0 0.0
        %2760 = vmatprep.subr.mxu0 0.0
        %2761 = vmatpush1.msra.mxu0 0.0
        %2762 = vmatprep.subr.mxu0 0.0
        %2763 = vmatpush1.msra.mxu0 0.0
        %2764 = vmatprep.subr.mxu0 0.0
        %2765 = vmatpush1.msra.mxu0 0.0
        %2766 = vmatprep.subr.mxu0 0.0
        %2767 = vmatpush1.msra.mxu0 0.0
        %2768 = vmatprep.subr.mxu0 0.0
        %2769 = vmatpush1.msra.mxu0 0.0
        %2770 = vmatprep.subr.mxu0 0.0
        %2771 = vmatpush1.msra.mxu0 0.0
        %2772 = vmatprep.subr.mxu0 0.0
        %2773 = vmatpush1.msra.mxu0 0.0
        %2774 = vmatprep.subr.mxu0 0.0
        %2775 = vmatpush1.msra.mxu0 0.0
        %2776 = vmatprep.subr.mxu0 0.0
        %2777 = vmatpush1.msra.mxu0 0.0
        %2778 = vmatprep.subr.mxu0 0.0
        %2779 = vmatpush1.msra.mxu0 0.0
        %2780 = vmatprep.subr.mxu0 0.0
        %2781 = vmatpush1.msra.mxu0 0.0
        %2782 = vmatprep.subr.mxu0 0.0
        %2783 = vmatpush1.msra.mxu0 0.0
        %2784 = vmatprep.subr.mxu0 0.0
        %2785 = vmatpush1.msra.mxu0 0.0
        %2786 = vmatprep.subr.mxu0 0.0
        %2787 = vmatpush1.msra.mxu0 0.0
        %2788 = vmatprep.subr.mxu0 0.0
        %2789 = vmatpush1.msra.mxu0 0.0
        %2790 = vmatprep.subr.mxu0 0.0
        %2791 = vmatpush1.msra.mxu0 0.0
        %2792 = vmatprep.subr.mxu0 0.0
        %2793 = vmatpush1.msra.mxu0 0.0
        %2794 = vmatprep.subr.mxu0 0.0
        %2795 = vmatpush1.msra.mxu0 0.0
        %2796 = vmatprep.subr.mxu0 0.0
        %2797 = vmatpush1.msra.mxu0 0.0
        %2798 = vmatprep.subr.mxu0 0.0
        %2799 = vmatpush1.msra.mxu0 0.0
        %2800 = vmatprep.subr.mxu0 0.0
        %2801 = vmatpush1.msra.mxu0 0.0
        %2802 = vmatprep.subr.mxu0 0.0
        %2803 = vmatpush1.msra.mxu0 0.0
        %2804 = vmatprep.subr.mxu0 0.0
        %2805 = vmatpush1.msra.mxu0 0.0
        %2806 = vmatprep.subr.mxu0 0.0
        %2807 = vmatpush1.msra.mxu0 0.0
        %2808 = vmatprep.mubr.f32.mxu0 0.0
        %v2809 = vand.u32 %v1360, 4294901760
        %v2810 = vsub.f32 %v1360, %v2809
        %v2811 = vand.u32 %v2810, 4294901760
        %2812 = vmatmul.mubr.f32.gmra.mrb[0].mxu0 %v2811
        %v2813 = vpop.f32.mrb[0].mxu0
        %v2814 = vadd.f32 %v2676, %v2813
        %v2815 = vpop.f32.mrb[0].mxu0
        %v2816 = vadd.f32 %v2678, %v2815
        %2817 = vmatprep.mubr.f32.mxu0 0.0
        %v2818 = vand.u32 %v1363, 4294901760
        %v2819 = vsub.f32 %v1363, %v2818
        %v2820 = vand.u32 %v2819, 4294901760
        %2821 = vmatmul.mubr.f32.gmra.mrb[0].mxu0 %v2820
        %v2822 = vpop.f32.mrb[0].mxu0
        %v2823 = vadd.f32 %v2684, %v2822
        %v2824 = vpop.f32.mrb[0].mxu0
        %v2825 = vadd.f32 %v2686, %v2824
        %2826 = vmatprep.mubr.f32.mxu0 0.0
        %v2827 = vand.u32 %v1366, 4294901760
        %v2828 = vsub.f32 %v1366, %v2827
        %v2829 = vand.u32 %v2828, 4294901760
        %2830 = vmatmul.mubr.f32.gmra.mrb[0].mxu0 %v2829
        %v2831 = vpop.f32.mrb[0].mxu0
        %v2832 = vadd.f32 %v2692, %v2831
        %v2833 = vpop.f32.mrb[0].mxu0
        %v2834 = vadd.f32 %v2694, %v2833
        %2835 = vmatprep.mubr.f32.mxu0 0.0
        %v2836 = vand.u32 %v1369, 4294901760
        %v2837 = vsub.f32 %v1369, %v2836
        %v2838 = vand.u32 %v2837, 4294901760
        %2839 = vmatmul.mubr.f32.gmra.mrb[0].mxu0 %v2838
        %v2840 = vpop.f32.mrb[0].mxu0
        %v2841 = vadd.f32 %v2700, %v2840
        %v2842 = vpop.f32.mrb[0].mxu0
        %v2843 = vadd.f32 %v2702, %v2842
        %2844 = vmatprep.mubr.f32.mxu0 0.0
        %v2845 = vand.u32 %v1372, 4294901760
        %v2846 = vsub.f32 %v1372, %v2845
        %v2847 = vand.u32 %v2846, 4294901760
        %2848 = vmatmul.mubr.f32.gmra.mrb[0].mxu0 %v2847
        %v2849 = vpop.f32.mrb[0].mxu0
        %v2850 = vadd.f32 %v2708, %v2849
        %v2851 = vpop.f32.mrb[0].mxu0
        %v2852 = vadd.f32 %v2710, %v2851
        %2853 = vmatprep.mubr.f32.mxu0 0.0
        %v2854 = vand.u32 %v1375, 4294901760
        %v2855 = vsub.f32 %v1375, %v2854
        %v2856 = vand.u32 %v2855, 4294901760
        %2857 = vmatmul.mubr.f32.gmra.mrb[0].mxu0 %v2856
        %v2858 = vpop.f32.mrb[0].mxu0
        %v2859 = vadd.f32 %v2716, %v2858
        %v2860 = vpop.f32.mrb[0].mxu0
        %v2861 = vadd.f32 %v2718, %v2860
        %2862 = vmatprep.mubr.f32.mxu0 0.0
        %v2863 = vand.u32 %v1378, 4294901760
        %v2864 = vsub.f32 %v1378, %v2863
        %v2865 = vand.u32 %v2864, 4294901760
        %2866 = vmatmul.mubr.f32.gmra.mrb[0].mxu0 %v2865
        %v2867 = vpop.f32.mrb[0].mxu0
        %v2868 = vadd.f32 %v2724, %v2867
        %v2869 = vpop.f32.mrb[0].mxu0
        %v2870 = vadd.f32 %v2726, %v2869
        %2871 = vmatprep.mubr.f32.mxu0 0.0
        %v2872 = vand.u32 %v1381, 4294901760
        %v2873 = vsub.f32 %v1381, %v2872
        %v2874 = vand.u32 %v2873, 4294901760
        %2875 = vmatmul.mubr.f32.gmra.mrb[0].mxu0 %v2874
        %v2876 = vpop.f32.mrb[0].mxu0
        %v2877 = vadd.f32 %v2732, %v2876
        %v2878 = vpop.f32.mrb[0].mxu0
        %v2879 = vadd.f32 %v2734, %v2878
        %2880 = vdwg.mxu0
        %v2881 = vand.u32 %v312, 4294901760
        %v2882 = vsub.f32 %v312, %v2881
        %v2883 = vand.u32 %v2882, 4294901760
        %2884 = vmatprep.subr.mxu0 %v2883
        %v2885 = vand.u32 %v311, 4294901760
        %v2886 = vsub.f32 %v311, %v2885
        %v2887 = vand.u32 %v2886, 4294901760
        %2888 = vmatpush1.msra.mxu0 %v2887
        %v2889 = vand.u32 %v320, 4294901760
        %v2890 = vsub.f32 %v320, %v2889
        %v2891 = vand.u32 %v2890, 4294901760
        %2892 = vmatprep.subr.mxu0 %v2891
        %v2893 = vand.u32 %v319, 4294901760
        %v2894 = vsub.f32 %v319, %v2893
        %v2895 = vand.u32 %v2894, 4294901760
        %2896 = vmatpush1.msra.mxu0 %v2895
        %v2897 = vand.u32 %v328, 4294901760
        %v2898 = vsub.f32 %v328, %v2897
        %v2899 = vand.u32 %v2898, 4294901760
        %2900 = vmatprep.subr.mxu0 %v2899
        %v2901 = vand.u32 %v327, 4294901760
        %v2902 = vsub.f32 %v327, %v2901
        %v2903 = vand.u32 %v2902, 4294901760
        %2904 = vmatpush1.msra.mxu0 %v2903
        %v2905 = vand.u32 %v336, 4294901760
        %v2906 = vsub.f32 %v336, %v2905
        %v2907 = vand.u32 %v2906, 4294901760
        %2908 = vmatprep.subr.mxu0 %v2907
        %v2909 = vand.u32 %v335, 4294901760
        %v2910 = vsub.f32 %v335, %v2909
        %v2911 = vand.u32 %v2910, 4294901760
        %2912 = vmatpush1.msra.mxu0 %v2911
        %2913 = vmatprep.subr.mxu0 0.0
        %2914 = vmatpush1.msra.mxu0 0.0
        %2915 = vmatprep.subr.mxu0 0.0
        %2916 = vmatpush1.msra.mxu0 0.0
        %2917 = vmatprep.subr.mxu0 0.0
        %2918 = vmatpush1.msra.mxu0 0.0
        %2919 = vmatprep.subr.mxu0 0.0
        %2920 = vmatpush1.msra.mxu0 0.0
        %2921 = vmatprep.subr.mxu0 0.0
        %2922 = vmatpush1.msra.mxu0 0.0
        %2923 = vmatprep.subr.mxu0 0.0
        %2924 = vmatpush1.msra.mxu0 0.0
        %2925 = vmatprep.subr.mxu0 0.0
        %2926 = vmatpush1.msra.mxu0 0.0
        %2927 = vmatprep.subr.mxu0 0.0
        %2928 = vmatpush1.msra.mxu0 0.0
        %2929 = vmatprep.subr.mxu0 0.0
        %2930 = vmatpush1.msra.mxu0 0.0
        %2931 = vmatprep.subr.mxu0 0.0
        %2932 = vmatpush1.msra.mxu0 0.0
        %2933 = vmatprep.subr.mxu0 0.0
        %2934 = vmatpush1.msra.mxu0 0.0
        %2935 = vmatprep.subr.mxu0 0.0
        %2936 = vmatpush1.msra.mxu0 0.0
        %2937 = vmatprep.subr.mxu0 0.0
        %2938 = vmatpush1.msra.mxu0 0.0
        %2939 = vmatprep.subr.mxu0 0.0
        %2940 = vmatpush1.msra.mxu0 0.0
        %2941 = vmatprep.subr.mxu0 0.0
        %2942 = vmatpush1.msra.mxu0 0.0
        %2943 = vmatprep.subr.mxu0 0.0
        %2944 = vmatpush1.msra.mxu0 0.0
        %2945 = vmatprep.subr.mxu0 0.0
        %2946 = vmatpush1.msra.mxu0 0.0
        %2947 = vmatprep.subr.mxu0 0.0
        %2948 = vmatpush1.msra.mxu0 0.0
        %2949 = vmatprep.subr.mxu0 0.0
        %2950 = vmatpush1.msra.mxu0 0.0
        %2951 = vmatprep.subr.mxu0 0.0
        %2952 = vmatpush1.msra.mxu0 0.0
        %2953 = vmatprep.subr.mxu0 0.0
        %2954 = vmatpush1.msra.mxu0 0.0
        %2955 = vmatprep.subr.mxu0 0.0
        %2956 = vmatpush1.msra.mxu0 0.0
        %2957 = vmatprep.subr.mxu0 0.0
        %2958 = vmatpush1.msra.mxu0 0.0
        %2959 = vmatprep.subr.mxu0 0.0
        %2960 = vmatpush1.msra.mxu0 0.0
        %2961 = vmatprep.subr.mxu0 0.0
        %2962 = vmatpush1.msra.mxu0 0.0
        %2963 = vmatprep.subr.mxu0 0.0
        %2964 = vmatpush1.msra.mxu0 0.0
        %2965 = vmatprep.subr.mxu0 0.0
        %2966 = vmatpush1.msra.mxu0 0.0
        %2967 = vmatprep.subr.mxu0 0.0
        %2968 = vmatpush1.msra.mxu0 0.0
        %2969 = vmatprep.mubr.f32.mxu0 0.0
        %v2970 = vand.u32 %v1360, 4294901760
        %2971 = vmatmul.mubr.f32.gmra.mrb[0].mxu0 %v2970
        %v2972 = vpop.f32.mrb[0].mxu0
        %v2973 = vadd.f32 %v2814, %v2972
        %v2974 = vpop.f32.mrb[0].mxu0
        %v2975 = vadd.f32 %v2816, %v2974
        %2976 = vmatprep.mubr.f32.mxu0 0.0
        %v2977 = vand.u32 %v1363, 4294901760
        %2978 = vmatmul.mubr.f32.gmra.mrb[0].mxu0 %v2977
        %v2979 = vpop.f32.mrb[0].mxu0
        %v2980 = vadd.f32 %v2823, %v2979
        %v2981 = vpop.f32.mrb[0].mxu0
        %v2982 = vadd.f32 %v2825, %v2981
        %2983 = vmatprep.mubr.f32.mxu0 0.0
        %v2984 = vand.u32 %v1366, 4294901760
        %2985 = vmatmul.mubr.f32.gmra.mrb[0].mxu0 %v2984
        %v2986 = vpop.f32.mrb[0].mxu0
        %v2987 = vadd.f32 %v2832, %v2986
        %v2988 = vpop.f32.mrb[0].mxu0
        %v2989 = vadd.f32 %v2834, %v2988
        %2990 = vmatprep.mubr.f32.mxu0 0.0
        %v2991 = vand.u32 %v1369, 4294901760
        %2992 = vmatmul.mubr.f32.gmra.mrb[0].mxu0 %v2991
        %v2993 = vpop.f32.mrb[0].mxu0
        %v2994 = vadd.f32 %v2841, %v2993
        %v2995 = vpop.f32.mrb[0].mxu0
        %v2996 = vadd.f32 %v2843, %v2995
        %2997 = vmatprep.mubr.f32.mxu0 0.0
        %v2998 = vand.u32 %v1372, 4294901760
        %2999 = vmatmul.mubr.f32.gmra.mrb[0].mxu0 %v2998
        %v3000 = vpop.f32.mrb[0].mxu0
        %v3001 = vadd.f32 %v2850, %v3000
        %v3002 = vpop.f32.mrb[0].mxu0
        %v3003 = vadd.f32 %v2852, %v3002
        %3004 = vmatprep.mubr.f32.mxu0 0.0
        %v3005 = vand.u32 %v1375, 4294901760
        %3006 = vmatmul.mubr.f32.gmra.mrb[0].mxu0 %v3005
        %v3007 = vpop.f32.mrb[0].mxu0
        %v3008 = vadd.f32 %v2859, %v3007
        %v3009 = vpop.f32.mrb[0].mxu0
        %v3010 = vadd.f32 %v2861, %v3009
        %3011 = vmatprep.mubr.f32.mxu0 0.0
        %v3012 = vand.u32 %v1378, 4294901760
        %3013 = vmatmul.mubr.f32.gmra.mrb[0].mxu0 %v3012
        %v3014 = vpop.f32.mrb[0].mxu0
        %v3015 = vadd.f32 %v2868, %v3014
        %v3016 = vpop.f32.mrb[0].mxu0
        %v3017 = vadd.f32 %v2870, %v3016
        %3018 = vmatprep.mubr.f32.mxu0 0.0
        %v3019 = vand.u32 %v1381, 4294901760
        %3020 = vmatmul.mubr.f32.gmra.mrb[0].mxu0 %v3019
        %v3021 = vpop.f32.mrb[0].mxu0
        %v3022 = vadd.f32 %v2877, %v3021
        %v3023 = vpop.f32.mrb[0].mxu0
        %v3024 = vadd.f32 %v2879, %v3023
        %3025 = vdwg.mxu0
        %v3026 = vand.u32 %v312, 4294901760
        %3027 = vmatprep.subr.mxu0 %v3026
        %v3028 = vand.u32 %v311, 4294901760
        %3029 = vmatpush1.msra.mxu0 %v3028
        %v3030 = vand.u32 %v320, 4294901760
        %3031 = vmatprep.subr.mxu0 %v3030
        %v3032 = vand.u32 %v319, 4294901760
        %3033 = vmatpush1.msra.mxu0 %v3032
        %v3034 = vand.u32 %v328, 4294901760
        %3035 = vmatprep.subr.mxu0 %v3034
        %v3036 = vand.u32 %v327, 4294901760
        %3037 = vmatpush1.msra.mxu0 %v3036
        %v3038 = vand.u32 %v336, 4294901760
        %3039 = vmatprep.subr.mxu0 %v3038
        %v3040 = vand.u32 %v335, 4294901760
        %3041 = vmatpush1.msra.mxu0 %v3040
        %3042 = vmatprep.subr.mxu0 0.0
        %3043 = vmatpush1.msra.mxu0 0.0
        %3044 = vmatprep.subr.mxu0 0.0
        %3045 = vmatpush1.msra.mxu0 0.0
        %3046 = vmatprep.subr.mxu0 0.0
        %3047 = vmatpush1.msra.mxu0 0.0
        %3048 = vmatprep.subr.mxu0 0.0
        %3049 = vmatpush1.msra.mxu0 0.0
        %3050 = vmatprep.subr.mxu0 0.0
        %3051 = vmatpush1.msra.mxu0 0.0
        %3052 = vmatprep.subr.mxu0 0.0
        %3053 = vmatpush1.msra.mxu0 0.0
        %3054 = vmatprep.subr.mxu0 0.0
        %3055 = vmatpush1.msra.mxu0 0.0
        %3056 = vmatprep.subr.mxu0 0.0
        %3057 = vmatpush1.msra.mxu0 0.0
        %3058 = vmatprep.subr.mxu0 0.0
        %3059 = vmatpush1.msra.mxu0 0.0
        %3060 = vmatprep.subr.mxu0 0.0
        %3061 = vmatpush1.msra.mxu0 0.0
        %3062 = vmatprep.subr.mxu0 0.0
        %3063 = vmatpush1.msra.mxu0 0.0
        %3064 = vmatprep.subr.mxu0 0.0
        %3065 = vmatpush1.msra.mxu0 0.0
        %3066 = vmatprep.subr.mxu0 0.0
        %3067 = vmatpush1.msra.mxu0 0.0
        %3068 = vmatprep.subr.mxu0 0.0
        %3069 = vmatpush1.msra.mxu0 0.0
        %3070 = vmatprep.subr.mxu0 0.0
        %3071 = vmatpush1.msra.mxu0 0.0
        %3072 = vmatprep.subr.mxu0 0.0
        %3073 = vmatpush1.msra.mxu0 0.0
        %3074 = vmatprep.subr.mxu0 0.0
        %3075 = vmatpush1.msra.mxu0 0.0
        %3076 = vmatprep.subr.mxu0 0.0
        %3077 = vmatpush1.msra.mxu0 0.0
        %3078 = vmatprep.subr.mxu0 0.0
        %3079 = vmatpush1.msra.mxu0 0.0
        %3080 = vmatprep.subr.mxu0 0.0
        %3081 = vmatpush1.msra.mxu0 0.0
        %3082 = vmatprep.subr.mxu0 0.0
        %3083 = vmatpush1.msra.mxu0 0.0
        %3084 = vmatprep.subr.mxu0 0.0
        %3085 = vmatpush1.msra.mxu0 0.0
        %3086 = vmatprep.subr.mxu0 0.0
        %3087 = vmatpush1.msra.mxu0 0.0
        %3088 = vmatprep.subr.mxu0 0.0
        %3089 = vmatpush1.msra.mxu0 0.0
        %3090 = vmatprep.subr.mxu0 0.0
        %3091 = vmatpush1.msra.mxu0 0.0
        %3092 = vmatprep.subr.mxu0 0.0
        %3093 = vmatpush1.msra.mxu0 0.0
        %3094 = vmatprep.subr.mxu0 0.0
        %3095 = vmatpush1.msra.mxu0 0.0
        %3096 = vmatprep.subr.mxu0 0.0
        %3097 = vmatpush1.msra.mxu0 0.0
        %3098 = vmatprep.mubr.f32.mxu0 0.0
        %v3099 = vand.u32 %v1360, 4294901760
        %3100 = vmatmul.mubr.f32.gmra.mrb[0].mxu0 %v3099
        %v3101 = vpop.f32.mrb[0].mxu0
        %v3102 = vadd.f32 %v2973, %v3101
        %v3103 = vpop.f32.mrb[0].mxu0
        %v3104 = vadd.f32 %v2975, %v3103
        %3105 = vmatprep.mubr.f32.mxu0 0.0
        %v3106 = vand.u32 %v1363, 4294901760
        %3107 = vmatmul.mubr.f32.gmra.mrb[0].mxu0 %v3106
        %v3108 = vpop.f32.mrb[0].mxu0
        %v3109 = vadd.f32 %v2980, %v3108
        %v3110 = vpop.f32.mrb[0].mxu0
        %v3111 = vadd.f32 %v2982, %v3110
        %3112 = vmatprep.mubr.f32.mxu0 0.0
        %v3113 = vand.u32 %v1366, 4294901760
        %3114 = vmatmul.mubr.f32.gmra.mrb[0].mxu0 %v3113
        %v3115 = vpop.f32.mrb[0].mxu0
        %v3116 = vadd.f32 %v2987, %v3115
        %v3117 = vpop.f32.mrb[0].mxu0
        %v3118 = vadd.f32 %v2989, %v3117
        %3119 = vmatprep.mubr.f32.mxu0 0.0
        %v3120 = vand.u32 %v1369, 4294901760
        %3121 = vmatmul.mubr.f32.gmra.mrb[0].mxu0 %v3120
        %v3122 = vpop.f32.mrb[0].mxu0
        %v3123 = vadd.f32 %v2994, %v3122
        %v3124 = vpop.f32.mrb[0].mxu0
        %v3125 = vadd.f32 %v2996, %v3124
        %3126 = vmatprep.mubr.f32.mxu0 0.0
        %v3127 = vand.u32 %v1372, 4294901760
        %3128 = vmatmul.mubr.f32.gmra.mrb[0].mxu0 %v3127
        %v3129 = vpop.f32.mrb[0].mxu0
        %v3130 = vadd.f32 %v3001, %v3129
        %v3131 = vpop.f32.mrb[0].mxu0
        %v3132 = vadd.f32 %v3003, %v3131
        %3133 = vmatprep.mubr.f32.mxu0 0.0
        %v3134 = vand.u32 %v1375, 4294901760
        %3135 = vmatmul.mubr.f32.gmra.mrb[0].mxu0 %v3134
        %v3136 = vpop.f32.mrb[0].mxu0
        %v3137 = vadd.f32 %v3008, %v3136
        %v3138 = vpop.f32.mrb[0].mxu0
        %v3139 = vadd.f32 %v3010, %v3138
        %3140 = vmatprep.mubr.f32.mxu0 0.0
        %v3141 = vand.u32 %v1378, 4294901760
        %3142 = vmatmul.mubr.f32.gmra.mrb[0].mxu0 %v3141
        %v3143 = vpop.f32.mrb[0].mxu0
        %v3144 = vadd.f32 %v3015, %v3143
        %v3145 = vpop.f32.mrb[0].mxu0
        %v3146 = vadd.f32 %v3017, %v3145
        %3147 = vmatprep.mubr.f32.mxu0 0.0
        %v3148 = vand.u32 %v1381, 4294901760
        %3149 = vmatmul.mubr.f32.gmra.mrb[0].mxu0 %v3148
        %v3150 = vpop.f32.mrb[0].mxu0
        %v3151 = vadd.f32 %v3022, %v3150
        %v3152 = vpop.f32.mrb[0].mxu0
        %v3153 = vadd.f32 %v3024, %v3152
        %3154 = vdwg.mxu0
        %v3155 = vand.u32 %v314, 4294901760
        %3156 = vmatprep.subr.mxu0 %v3155
        %v3157 = vand.u32 %v313, 4294901760
        %3158 = vmatpush1.msra.mxu0 %v3157
        %v3159 = vand.u32 %v322, 4294901760
        %3160 = vmatprep.subr.mxu0 %v3159
        %v3161 = vand.u32 %v321, 4294901760
        %3162 = vmatpush1.msra.mxu0 %v3161
        %v3163 = vand.u32 %v330, 4294901760
        %3164 = vmatprep.subr.mxu0 %v3163
        %v3165 = vand.u32 %v329, 4294901760
        %3166 = vmatpush1.msra.mxu0 %v3165
        %v3167 = vand.u32 %v338, 4294901760
        %3168 = vmatprep.subr.mxu0 %v3167
        %v3169 = vand.u32 %v337, 4294901760
        %3170 = vmatpush1.msra.mxu0 %v3169
        %3171 = vmatprep.subr.mxu0 0.0
        %3172 = vmatpush1.msra.mxu0 0.0
        %3173 = vmatprep.subr.mxu0 0.0
        %3174 = vmatpush1.msra.mxu0 0.0
        %3175 = vmatprep.subr.mxu0 0.0
        %3176 = vmatpush1.msra.mxu0 0.0
        %3177 = vmatprep.subr.mxu0 0.0
        %3178 = vmatpush1.msra.mxu0 0.0
        %3179 = vmatprep.subr.mxu0 0.0
        %3180 = vmatpush1.msra.mxu0 0.0
        %3181 = vmatprep.subr.mxu0 0.0
        %3182 = vmatpush1.msra.mxu0 0.0
        %3183 = vmatprep.subr.mxu0 0.0
        %3184 = vmatpush1.msra.mxu0 0.0
        %3185 = vmatprep.subr.mxu0 0.0
        %3186 = vmatpush1.msra.mxu0 0.0
        %3187 = vmatprep.subr.mxu0 0.0
        %3188 = vmatpush1.msra.mxu0 0.0
        %3189 = vmatprep.subr.mxu0 0.0
        %3190 = vmatpush1.msra.mxu0 0.0
        %3191 = vmatprep.subr.mxu0 0.0
        %3192 = vmatpush1.msra.mxu0 0.0
        %3193 = vmatprep.subr.mxu0 0.0
        %3194 = vmatpush1.msra.mxu0 0.0
        %3195 = vmatprep.subr.mxu0 0.0
        %3196 = vmatpush1.msra.mxu0 0.0
        %3197 = vmatprep.subr.mxu0 0.0
        %3198 = vmatpush1.msra.mxu0 0.0
        %3199 = vmatprep.subr.mxu0 0.0
        %3200 = vmatpush1.msra.mxu0 0.0
        %3201 = vmatprep.subr.mxu0 0.0
        %3202 = vmatpush1.msra.mxu0 0.0
        %3203 = vmatprep.subr.mxu0 0.0
        %3204 = vmatpush1.msra.mxu0 0.0
        %3205 = vmatprep.subr.mxu0 0.0
        %3206 = vmatpush1.msra.mxu0 0.0
        %3207 = vmatprep.subr.mxu0 0.0
        %3208 = vmatpush1.msra.mxu0 0.0
        %3209 = vmatprep.subr.mxu0 0.0
        %3210 = vmatpush1.msra.mxu0 0.0
        %3211 = vmatprep.subr.mxu0 0.0
        %3212 = vmatpush1.msra.mxu0 0.0
        %3213 = vmatprep.subr.mxu0 0.0
        %3214 = vmatpush1.msra.mxu0 0.0
        %3215 = vmatprep.subr.mxu0 0.0
        %3216 = vmatpush1.msra.mxu0 0.0
        %3217 = vmatprep.subr.mxu0 0.0
        %3218 = vmatpush1.msra.mxu0 0.0
        %3219 = vmatprep.subr.mxu0 0.0
        %3220 = vmatpush1.msra.mxu0 0.0
        %3221 = vmatprep.subr.mxu0 0.0
        %3222 = vmatpush1.msra.mxu0 0.0
        %3223 = vmatprep.subr.mxu0 0.0
        %3224 = vmatpush1.msra.mxu0 0.0
        %3225 = vmatprep.subr.mxu0 0.0
        %3226 = vmatpush1.msra.mxu0 0.0
        %3227 = vmatprep.mubr.f32.mxu0 0.0
        %v3228 = vand.u32 %v1360, 4294901760
        %v3229 = vsub.f32 %v1360, %v3228
        %v3230 = vand.u32 %v3229, 4294901760
        %v3231 = vsub.f32 %v3229, %v3230
        %v3232 = vand.u32 %v3231, 4294901760
        %3233 = vmatmul.mubr.f32.gmra.mrb[0].mxu0 %v3232
        %v3234 = vpop.f32.mrb[0].mxu0
        %v3235 = vadd.f32 0.0, %v3234
        %v3236 = vpop.f32.mrb[0].mxu0
        %v3237 = vadd.f32 0.0, %v3236
        %3238 = vmatprep.mubr.f32.mxu0 0.0
        %v3239 = vand.u32 %v1363, 4294901760
        %v3240 = vsub.f32 %v1363, %v3239
        %v3241 = vand.u32 %v3240, 4294901760
        %v3242 = vsub.f32 %v3240, %v3241
        %v3243 = vand.u32 %v3242, 4294901760
        %3244 = vmatmul.mubr.f32.gmra.mrb[0].mxu0 %v3243
        %v3245 = vpop.f32.mrb[0].mxu0
        %v3246 = vadd.f32 0.0, %v3245
        %v3247 = vpop.f32.mrb[0].mxu0
        %v3248 = vadd.f32 0.0, %v3247
        %3249 = vmatprep.mubr.f32.mxu0 0.0
        %v3250 = vand.u32 %v1366, 4294901760
        %v3251 = vsub.f32 %v1366, %v3250
        %v3252 = vand.u32 %v3251, 4294901760
        %v3253 = vsub.f32 %v3251, %v3252
        %v3254 = vand.u32 %v3253, 4294901760
        %3255 = vmatmul.mubr.f32.gmra.mrb[0].mxu0 %v3254
        %v3256 = vpop.f32.mrb[0].mxu0
        %v3257 = vadd.f32 0.0, %v3256
        %v3258 = vpop.f32.mrb[0].mxu0
        %v3259 = vadd.f32 0.0, %v3258
        %3260 = vmatprep.mubr.f32.mxu0 0.0
        %v3261 = vand.u32 %v1369, 4294901760
        %v3262 = vsub.f32 %v1369, %v3261
        %v3263 = vand.u32 %v3262, 4294901760
        %v3264 = vsub.f32 %v3262, %v3263
        %v3265 = vand.u32 %v3264, 4294901760
        %3266 = vmatmul.mubr.f32.gmra.mrb[0].mxu0 %v3265
        %v3267 = vpop.f32.mrb[0].mxu0
        %v3268 = vadd.f32 0.0, %v3267
        %v3269 = vpop.f32.mrb[0].mxu0
        %v3270 = vadd.f32 0.0, %v3269
        %3271 = vmatprep.mubr.f32.mxu0 0.0
        %v3272 = vand.u32 %v1372, 4294901760
        %v3273 = vsub.f32 %v1372, %v3272
        %v3274 = vand.u32 %v3273, 4294901760
        %v3275 = vsub.f32 %v3273, %v3274
        %v3276 = vand.u32 %v3275, 4294901760
        %3277 = vmatmul.mubr.f32.gmra.mrb[0].mxu0 %v3276
        %v3278 = vpop.f32.mrb[0].mxu0
        %v3279 = vadd.f32 0.0, %v3278
        %v3280 = vpop.f32.mrb[0].mxu0
        %v3281 = vadd.f32 0.0, %v3280
        %3282 = vmatprep.mubr.f32.mxu0 0.0
        %v3283 = vand.u32 %v1375, 4294901760
        %v3284 = vsub.f32 %v1375, %v3283
        %v3285 = vand.u32 %v3284, 4294901760
        %v3286 = vsub.f32 %v3284, %v3285
        %v3287 = vand.u32 %v3286, 4294901760
        %3288 = vmatmul.mubr.f32.gmra.mrb[0].mxu0 %v3287
        %v3289 = vpop.f32.mrb[0].mxu0
        %v3290 = vadd.f32 0.0, %v3289
        %v3291 = vpop.f32.mrb[0].mxu0
        %v3292 = vadd.f32 0.0, %v3291
        %3293 = vmatprep.mubr.f32.mxu0 0.0
        %v3294 = vand.u32 %v1378, 4294901760
        %v3295 = vsub.f32 %v1378, %v3294
        %v3296 = vand.u32 %v3295, 4294901760
        %v3297 = vsub.f32 %v3295, %v3296
        %v3298 = vand.u32 %v3297, 4294901760
        %3299 = vmatmul.mubr.f32.gmra.mrb[0].mxu0 %v3298
        %v3300 = vpop.f32.mrb[0].mxu0
        %v3301 = vadd.f32 0.0, %v3300
        %v3302 = vpop.f32.mrb[0].mxu0
        %v3303 = vadd.f32 0.0, %v3302
        %3304 = vmatprep.mubr.f32.mxu0 0.0
        %v3305 = vand.u32 %v1381, 4294901760
        %v3306 = vsub.f32 %v1381, %v3305
        %v3307 = vand.u32 %v3306, 4294901760
        %v3308 = vsub.f32 %v3306, %v3307
        %v3309 = vand.u32 %v3308, 4294901760
        %3310 = vmatmul.mubr.f32.gmra.mrb[0].mxu0 %v3309
        %v3311 = vpop.f32.mrb[0].mxu0
        %v3312 = vadd.f32 0.0, %v3311
        %v3313 = vpop.f32.mrb[0].mxu0
        %v3314 = vadd.f32 0.0, %v3313
        %3315 = vdwg.mxu0
        %v3316 = vand.u32 %v314, 4294901760
        %v3317 = vsub.f32 %v314, %v3316
        %v3318 = vand.u32 %v3317, 4294901760
        %v3319 = vsub.f32 %v3317, %v3318
        %v3320 = vand.u32 %v3319, 4294901760
        %3321 = vmatprep.subr.mxu0 %v3320
        %v3322 = vand.u32 %v313, 4294901760
        %v3323 = vsub.f32 %v313, %v3322
        %v3324 = vand.u32 %v3323, 4294901760
        %v3325 = vsub.f32 %v3323, %v3324
        %v3326 = vand.u32 %v3325, 4294901760
        %3327 = vmatpush1.msra.mxu0 %v3326
        %v3328 = vand.u32 %v322, 4294901760
        %v3329 = vsub.f32 %v322, %v3328
        %v3330 = vand.u32 %v3329, 4294901760
        %v3331 = vsub.f32 %v3329, %v3330
        %v3332 = vand.u32 %v3331, 4294901760
        %3333 = vmatprep.subr.mxu0 %v3332
        %v3334 = vand.u32 %v321, 4294901760
        %v3335 = vsub.f32 %v321, %v3334
        %v3336 = vand.u32 %v3335, 4294901760
        %v3337 = vsub.f32 %v3335, %v3336
        %v3338 = vand.u32 %v3337, 4294901760
        %3339 = vmatpush1.msra.mxu0 %v3338
        %v3340 = vand.u32 %v330, 4294901760
        %v3341 = vsub.f32 %v330, %v3340
        %v3342 = vand.u32 %v3341, 4294901760
        %v3343 = vsub.f32 %v3341, %v3342
        %v3344 = vand.u32 %v3343, 4294901760
        %3345 = vmatprep.subr.mxu0 %v3344
        %v3346 = vand.u32 %v329, 4294901760
        %v3347 = vsub.f32 %v329, %v3346
        %v3348 = vand.u32 %v3347, 4294901760
        %v3349 = vsub.f32 %v3347, %v3348
        %v3350 = vand.u32 %v3349, 4294901760
        %3351 = vmatpush1.msra.mxu0 %v3350
        %v3352 = vand.u32 %v338, 4294901760
        %v3353 = vsub.f32 %v338, %v3352
        %v3354 = vand.u32 %v3353, 4294901760
        %v3355 = vsub.f32 %v3353, %v3354
        %v3356 = vand.u32 %v3355, 4294901760
        %3357 = vmatprep.subr.mxu0 %v3356
        %v3358 = vand.u32 %v337, 4294901760
        %v3359 = vsub.f32 %v337, %v3358
        %v3360 = vand.u32 %v3359, 4294901760
        %v3361 = vsub.f32 %v3359, %v3360
        %v3362 = vand.u32 %v3361, 4294901760
        %3363 = vmatpush1.msra.mxu0 %v3362
        %3364 = vmatprep.subr.mxu0 0.0
        %3365 = vmatpush1.msra.mxu0 0.0
        %3366 = vmatprep.subr.mxu0 0.0
        %3367 = vmatpush1.msra.mxu0 0.0
        %3368 = vmatprep.subr.mxu0 0.0
        %3369 = vmatpush1.msra.mxu0 0.0
        %3370 = vmatprep.subr.mxu0 0.0
        %3371 = vmatpush1.msra.mxu0 0.0
        %3372 = vmatprep.subr.mxu0 0.0
        %3373 = vmatpush1.msra.mxu0 0.0
        %3374 = vmatprep.subr.mxu0 0.0
        %3375 = vmatpush1.msra.mxu0 0.0
        %3376 = vmatprep.subr.mxu0 0.0
        %3377 = vmatpush1.msra.mxu0 0.0
        %3378 = vmatprep.subr.mxu0 0.0
        %3379 = vmatpush1.msra.mxu0 0.0
        %3380 = vmatprep.subr.mxu0 0.0
        %3381 = vmatpush1.msra.mxu0 0.0
        %3382 = vmatprep.subr.mxu0 0.0
        %3383 = vmatpush1.msra.mxu0 0.0
        %3384 = vmatprep.subr.mxu0 0.0
        %3385 = vmatpush1.msra.mxu0 0.0
        %3386 = vmatprep.subr.mxu0 0.0
        %3387 = vmatpush1.msra.mxu0 0.0
        %3388 = vmatprep.subr.mxu0 0.0
        %3389 = vmatpush1.msra.mxu0 0.0
        %3390 = vmatprep.subr.mxu0 0.0
        %3391 = vmatpush1.msra.mxu0 0.0
        %3392 = vmatprep.subr.mxu0 0.0
        %3393 = vmatpush1.msra.mxu0 0.0
        %3394 = vmatprep.subr.mxu0 0.0
        %3395 = vmatpush1.msra.mxu0 0.0
        %3396 = vmatprep.subr.mxu0 0.0
        %3397 = vmatpush1.msra.mxu0 0.0
        %3398 = vmatprep.subr.mxu0 0.0
        %3399 = vmatpush1.msra.mxu0 0.0
        %3400 = vmatprep.subr.mxu0 0.0
        %3401 = vmatpush1.msra.mxu0 0.0
        %3402 = vmatprep.subr.mxu0 0.0
        %3403 = vmatpush1.msra.mxu0 0.0
        %3404 = vmatprep.subr.mxu0 0.0
        %3405 = vmatpush1.msra.mxu0 0.0
        %3406 = vmatprep.subr.mxu0 0.0
        %3407 = vmatpush1.msra.mxu0 0.0
        %3408 = vmatprep.subr.mxu0 0.0
        %3409 = vmatpush1.msra.mxu0 0.0
        %3410 = vmatprep.subr.mxu0 0.0
        %3411 = vmatpush1.msra.mxu0 0.0
        %3412 = vmatprep.subr.mxu0 0.0
        %3413 = vmatpush1.msra.mxu0 0.0
        %3414 = vmatprep.subr.mxu0 0.0
        %3415 = vmatpush1.msra.mxu0 0.0
        %3416 = vmatprep.subr.mxu0 0.0
        %3417 = vmatpush1.msra.mxu0 0.0
        %3418 = vmatprep.subr.mxu0 0.0
        %3419 = vmatpush1.msra.mxu0 0.0
        %3420 = vmatprep.mubr.f32.mxu0 0.0
        %v3421 = vand.u32 %v1360, 4294901760
        %3422 = vmatmul.mubr.f32.gmra.mrb[0].mxu0 %v3421
        %v3423 = vpop.f32.mrb[0].mxu0
        %v3424 = vadd.f32 %v3235, %v3423
        %v3425 = vpop.f32.mrb[0].mxu0
        %v3426 = vadd.f32 %v3237, %v3425
        %3427 = vmatprep.mubr.f32.mxu0 0.0
        %v3428 = vand.u32 %v1363, 4294901760
        %3429 = vmatmul.mubr.f32.gmra.mrb[0].mxu0 %v3428
        %v3430 = vpop.f32.mrb[0].mxu0
        %v3431 = vadd.f32 %v3246, %v3430
        %v3432 = vpop.f32.mrb[0].mxu0
        %v3433 = vadd.f32 %v3248, %v3432
        %3434 = vmatprep.mubr.f32.mxu0 0.0
        %v3435 = vand.u32 %v1366, 4294901760
        %3436 = vmatmul.mubr.f32.gmra.mrb[0].mxu0 %v3435
        %v3437 = vpop.f32.mrb[0].mxu0
        %v3438 = vadd.f32 %v3257, %v3437
        %v3439 = vpop.f32.mrb[0].mxu0
        %v3440 = vadd.f32 %v3259, %v3439
        %3441 = vmatprep.mubr.f32.mxu0 0.0
        %v3442 = vand.u32 %v1369, 4294901760
        %3443 = vmatmul.mubr.f32.gmra.mrb[0].mxu0 %v3442
        %v3444 = vpop.f32.mrb[0].mxu0
        %v3445 = vadd.f32 %v3268, %v3444
        %v3446 = vpop.f32.mrb[0].mxu0
        %v3447 = vadd.f32 %v3270, %v3446
        %3448 = vmatprep.mubr.f32.mxu0 0.0
        %v3449 = vand.u32 %v1372, 4294901760
        %3450 = vmatmul.mubr.f32.gmra.mrb[0].mxu0 %v3449
        %v3451 = vpop.f32.mrb[0].mxu0
        %v3452 = vadd.f32 %v3279, %v3451
        %v3453 = vpop.f32.mrb[0].mxu0
        %v3454 = vadd.f32 %v3281, %v3453
        %3455 = vmatprep.mubr.f32.mxu0 0.0
        %v3456 = vand.u32 %v1375, 4294901760
        %3457 = vmatmul.mubr.f32.gmra.mrb[0].mxu0 %v3456
        %v3458 = vpop.f32.mrb[0].mxu0
        %v3459 = vadd.f32 %v3290, %v3458
        %v3460 = vpop.f32.mrb[0].mxu0
        %v3461 = vadd.f32 %v3292, %v3460
        %3462 = vmatprep.mubr.f32.mxu0 0.0
        %v3463 = vand.u32 %v1378, 4294901760
        %3464 = vmatmul.mubr.f32.gmra.mrb[0].mxu0 %v3463
        %v3465 = vpop.f32.mrb[0].mxu0
        %v3466 = vadd.f32 %v3301, %v3465
        %v3467 = vpop.f32.mrb[0].mxu0
        %v3468 = vadd.f32 %v3303, %v3467
        %3469 = vmatprep.mubr.f32.mxu0 0.0
        %v3470 = vand.u32 %v1381, 4294901760
        %3471 = vmatmul.mubr.f32.gmra.mrb[0].mxu0 %v3470
        %v3472 = vpop.f32.mrb[0].mxu0
        %v3473 = vadd.f32 %v3312, %v3472
        %v3474 = vpop.f32.mrb[0].mxu0
        %v3475 = vadd.f32 %v3314, %v3474
        %3476 = vdwg.mxu0
        %v3477 = vand.u32 %v314, 4294901760
        %v3478 = vsub.f32 %v314, %v3477
        %3479 = vmatprep.subr.mxu0 %v3478
        %v3480 = vand.u32 %v313, 4294901760
        %v3481 = vsub.f32 %v313, %v3480
        %3482 = vmatpush1.msra.mxu0 %v3481
        %v3483 = vand.u32 %v322, 4294901760
        %v3484 = vsub.f32 %v322, %v3483
        %3485 = vmatprep.subr.mxu0 %v3484
        %v3486 = vand.u32 %v321, 4294901760
        %v3487 = vsub.f32 %v321, %v3486
        %3488 = vmatpush1.msra.mxu0 %v3487
        %v3489 = vand.u32 %v330, 4294901760
        %v3490 = vsub.f32 %v330, %v3489
        %3491 = vmatprep.subr.mxu0 %v3490
        %v3492 = vand.u32 %v329, 4294901760
        %v3493 = vsub.f32 %v329, %v3492
        %3494 = vmatpush1.msra.mxu0 %v3493
        %v3495 = vand.u32 %v338, 4294901760
        %v3496 = vsub.f32 %v338, %v3495
        %3497 = vmatprep.subr.mxu0 %v3496
        %v3498 = vand.u32 %v337, 4294901760
        %v3499 = vsub.f32 %v337, %v3498
        %3500 = vmatpush1.msra.mxu0 %v3499
        %3501 = vmatprep.subr.mxu0 0.0
        %3502 = vmatpush1.msra.mxu0 0.0
        %3503 = vmatprep.subr.mxu0 0.0
        %3504 = vmatpush1.msra.mxu0 0.0
        %3505 = vmatprep.subr.mxu0 0.0
        %3506 = vmatpush1.msra.mxu0 0.0
        %3507 = vmatprep.subr.mxu0 0.0
        %3508 = vmatpush1.msra.mxu0 0.0
        %3509 = vmatprep.subr.mxu0 0.0
        %3510 = vmatpush1.msra.mxu0 0.0
        %3511 = vmatprep.subr.mxu0 0.0
        %3512 = vmatpush1.msra.mxu0 0.0
        %3513 = vmatprep.subr.mxu0 0.0
        %3514 = vmatpush1.msra.mxu0 0.0
        %3515 = vmatprep.subr.mxu0 0.0
        %3516 = vmatpush1.msra.mxu0 0.0
        %3517 = vmatprep.subr.mxu0 0.0
        %3518 = vmatpush1.msra.mxu0 0.0
        %3519 = vmatprep.subr.mxu0 0.0
        %3520 = vmatpush1.msra.mxu0 0.0
        %3521 = vmatprep.subr.mxu0 0.0
        %3522 = vmatpush1.msra.mxu0 0.0
        %3523 = vmatprep.subr.mxu0 0.0
        %3524 = vmatpush1.msra.mxu0 0.0
        %3525 = vmatprep.subr.mxu0 0.0
        %3526 = vmatpush1.msra.mxu0 0.0
        %3527 = vmatprep.subr.mxu0 0.0
        %3528 = vmatpush1.msra.mxu0 0.0
        %3529 = vmatprep.subr.mxu0 0.0
        %3530 = vmatpush1.msra.mxu0 0.0
        %3531 = vmatprep.subr.mxu0 0.0
        %3532 = vmatpush1.msra.mxu0 0.0
        %3533 = vmatprep.subr.mxu0 0.0
        %3534 = vmatpush1.msra.mxu0 0.0
        %3535 = vmatprep.subr.mxu0 0.0
        %3536 = vmatpush1.msra.mxu0 0.0
        %3537 = vmatprep.subr.mxu0 0.0
        %3538 = vmatpush1.msra.mxu0 0.0
        %3539 = vmatprep.subr.mxu0 0.0
        %3540 = vmatpush1.msra.mxu0 0.0
        %3541 = vmatprep.subr.mxu0 0.0
        %3542 = vmatpush1.msra.mxu0 0.0
        %3543 = vmatprep.subr.mxu0 0.0
        %3544 = vmatpush1.msra.mxu0 0.0
        %3545 = vmatprep.subr.mxu0 0.0
        %3546 = vmatpush1.msra.mxu0 0.0
        %3547 = vmatprep.subr.mxu0 0.0
        %3548 = vmatpush1.msra.mxu0 0.0
        %3549 = vmatprep.subr.mxu0 0.0
        %3550 = vmatpush1.msra.mxu0 0.0
        %3551 = vmatprep.subr.mxu0 0.0
        %3552 = vmatpush1.msra.mxu0 0.0
        %3553 = vmatprep.subr.mxu0 0.0
        %3554 = vmatpush1.msra.mxu0 0.0
        %3555 = vmatprep.subr.mxu0 0.0
        %3556 = vmatpush1.msra.mxu0 0.0
        %3557 = vmatprep.mubr.f32.mxu0 0.0
        %v3558 = vand.u32 %v1360, 4294901760
        %v3559 = vsub.f32 %v1360, %v3558
        %3560 = vmatmul.mubr.f32.gmra.mrb[0].mxu0 %v3559
        %v3561 = vpop.f32.mrb[0].mxu0
        %v3562 = vadd.f32 %v3424, %v3561
        %v3563 = vpop.f32.mrb[0].mxu0
        %v3564 = vadd.f32 %v3426, %v3563
        %3565 = vmatprep.mubr.f32.mxu0 0.0
        %v3566 = vand.u32 %v1363, 4294901760
        %v3567 = vsub.f32 %v1363, %v3566
        %3568 = vmatmul.mubr.f32.gmra.mrb[0].mxu0 %v3567
        %v3569 = vpop.f32.mrb[0].mxu0
        %v3570 = vadd.f32 %v3431, %v3569
        %v3571 = vpop.f32.mrb[0].mxu0
        %v3572 = vadd.f32 %v3433, %v3571
        %3573 = vmatprep.mubr.f32.mxu0 0.0
        %v3574 = vand.u32 %v1366, 4294901760
        %v3575 = vsub.f32 %v1366, %v3574
        %3576 = vmatmul.mubr.f32.gmra.mrb[0].mxu0 %v3575
        %v3577 = vpop.f32.mrb[0].mxu0
        %v3578 = vadd.f32 %v3438, %v3577
        %v3579 = vpop.f32.mrb[0].mxu0
        %v3580 = vadd.f32 %v3440, %v3579
        %3581 = vmatprep.mubr.f32.mxu0 0.0
        %v3582 = vand.u32 %v1369, 4294901760
        %v3583 = vsub.f32 %v1369, %v3582
        %3584 = vmatmul.mubr.f32.gmra.mrb[0].mxu0 %v3583
        %v3585 = vpop.f32.mrb[0].mxu0
        %v3586 = vadd.f32 %v3445, %v3585
        %v3587 = vpop.f32.mrb[0].mxu0
        %v3588 = vadd.f32 %v3447, %v3587
        %3589 = vmatprep.mubr.f32.mxu0 0.0
        %v3590 = vand.u32 %v1372, 4294901760
        %v3591 = vsub.f32 %v1372, %v3590
        %3592 = vmatmul.mubr.f32.gmra.mrb[0].mxu0 %v3591
        %v3593 = vpop.f32.mrb[0].mxu0
        %v3594 = vadd.f32 %v3452, %v3593
        %v3595 = vpop.f32.mrb[0].mxu0
        %v3596 = vadd.f32 %v3454, %v3595
        %3597 = vmatprep.mubr.f32.mxu0 0.0
        %v3598 = vand.u32 %v1375, 4294901760
        %v3599 = vsub.f32 %v1375, %v3598
        %3600 = vmatmul.mubr.f32.gmra.mrb[0].mxu0 %v3599
        %v3601 = vpop.f32.mrb[0].mxu0
        %v3602 = vadd.f32 %v3459, %v3601
        %v3603 = vpop.f32.mrb[0].mxu0
        %v3604 = vadd.f32 %v3461, %v3603
        %3605 = vmatprep.mubr.f32.mxu0 0.0
        %v3606 = vand.u32 %v1378, 4294901760
        %v3607 = vsub.f32 %v1378, %v3606
        %3608 = vmatmul.mubr.f32.gmra.mrb[0].mxu0 %v3607
        %v3609 = vpop.f32.mrb[0].mxu0
        %v3610 = vadd.f32 %v3466, %v3609
        %v3611 = vpop.f32.mrb[0].mxu0
        %v3612 = vadd.f32 %v3468, %v3611
        %3613 = vmatprep.mubr.f32.mxu0 0.0
        %v3614 = vand.u32 %v1381, 4294901760
        %v3615 = vsub.f32 %v1381, %v3614
        %3616 = vmatmul.mubr.f32.gmra.mrb[0].mxu0 %v3615
        %v3617 = vpop.f32.mrb[0].mxu0
        %v3618 = vadd.f32 %v3473, %v3617
        %v3619 = vpop.f32.mrb[0].mxu0
        %v3620 = vadd.f32 %v3475, %v3619
        %3621 = vdwg.mxu0
        %v3622 = vand.u32 %v314, 4294901760
        %3623 = vmatprep.subr.mxu0 %v3622
        %v3624 = vand.u32 %v313, 4294901760
        %3625 = vmatpush1.msra.mxu0 %v3624
        %v3626 = vand.u32 %v322, 4294901760
        %3627 = vmatprep.subr.mxu0 %v3626
        %v3628 = vand.u32 %v321, 4294901760
        %3629 = vmatpush1.msra.mxu0 %v3628
        %v3630 = vand.u32 %v330, 4294901760
        %3631 = vmatprep.subr.mxu0 %v3630
        %v3632 = vand.u32 %v329, 4294901760
        %3633 = vmatpush1.msra.mxu0 %v3632
        %v3634 = vand.u32 %v338, 4294901760
        %3635 = vmatprep.subr.mxu0 %v3634
        %v3636 = vand.u32 %v337, 4294901760
        %3637 = vmatpush1.msra.mxu0 %v3636
        %3638 = vmatprep.subr.mxu0 0.0
        %3639 = vmatpush1.msra.mxu0 0.0
        %3640 = vmatprep.subr.mxu0 0.0
        %3641 = vmatpush1.msra.mxu0 0.0
        %3642 = vmatprep.subr.mxu0 0.0
        %3643 = vmatpush1.msra.mxu0 0.0
        %3644 = vmatprep.subr.mxu0 0.0
        %3645 = vmatpush1.msra.mxu0 0.0
        %3646 = vmatprep.subr.mxu0 0.0
        %3647 = vmatpush1.msra.mxu0 0.0
        %3648 = vmatprep.subr.mxu0 0.0
        %3649 = vmatpush1.msra.mxu0 0.0
        %3650 = vmatprep.subr.mxu0 0.0
        %3651 = vmatpush1.msra.mxu0 0.0
        %3652 = vmatprep.subr.mxu0 0.0
        %3653 = vmatpush1.msra.mxu0 0.0
        %3654 = vmatprep.subr.mxu0 0.0
        %3655 = vmatpush1.msra.mxu0 0.0
        %3656 = vmatprep.subr.mxu0 0.0
        %3657 = vmatpush1.msra.mxu0 0.0
        %3658 = vmatprep.subr.mxu0 0.0
        %3659 = vmatpush1.msra.mxu0 0.0
        %3660 = vmatprep.subr.mxu0 0.0
        %3661 = vmatpush1.msra.mxu0 0.0
        %3662 = vmatprep.subr.mxu0 0.0
        %3663 = vmatpush1.msra.mxu0 0.0
        %3664 = vmatprep.subr.mxu0 0.0
        %3665 = vmatpush1.msra.mxu0 0.0
        %3666 = vmatprep.subr.mxu0 0.0
        %3667 = vmatpush1.msra.mxu0 0.0
        %3668 = vmatprep.subr.mxu0 0.0
        %3669 = vmatpush1.msra.mxu0 0.0
        %3670 = vmatprep.subr.mxu0 0.0
        %3671 = vmatpush1.msra.mxu0 0.0
        %3672 = vmatprep.subr.mxu0 0.0
        %3673 = vmatpush1.msra.mxu0 0.0
        %3674 = vmatprep.subr.mxu0 0.0
        %3675 = vmatpush1.msra.mxu0 0.0
        %3676 = vmatprep.subr.mxu0 0.0
        %3677 = vmatpush1.msra.mxu0 0.0
        %3678 = vmatprep.subr.mxu0 0.0
        %3679 = vmatpush1.msra.mxu0 0.0
        %3680 = vmatprep.subr.mxu0 0.0
        %3681 = vmatpush1.msra.mxu0 0.0
        %3682 = vmatprep.subr.mxu0 0.0
        %3683 = vmatpush1.msra.mxu0 0.0
        %3684 = vmatprep.subr.mxu0 0.0
        %3685 = vmatpush1.msra.mxu0 0.0
        %3686 = vmatprep.subr.mxu0 0.0
        %3687 = vmatpush1.msra.mxu0 0.0
        %3688 = vmatprep.subr.mxu0 0.0
        %3689 = vmatpush1.msra.mxu0 0.0
        %3690 = vmatprep.subr.mxu0 0.0
        %3691 = vmatpush1.msra.mxu0 0.0
        %3692 = vmatprep.subr.mxu0 0.0
        %3693 = vmatpush1.msra.mxu0 0.0
        %3694 = vmatprep.mubr.f32.mxu0 0.0
        %v3695 = vand.u32 %v1360, 4294901760
        %v3696 = vsub.f32 %v1360, %v3695
        %v3697 = vand.u32 %v3696, 4294901760
        %3698 = vmatmul.mubr.f32.gmra.mrb[0].mxu0 %v3697
        %v3699 = vpop.f32.mrb[0].mxu0
        %v3700 = vadd.f32 %v3562, %v3699
        %v3701 = vpop.f32.mrb[0].mxu0
        %v3702 = vadd.f32 %v3564, %v3701
        %3703 = vmatprep.mubr.f32.mxu0 0.0
        %v3704 = vand.u32 %v1363, 4294901760
        %v3705 = vsub.f32 %v1363, %v3704
        %v3706 = vand.u32 %v3705, 4294901760
        %3707 = vmatmul.mubr.f32.gmra.mrb[0].mxu0 %v3706
        %v3708 = vpop.f32.mrb[0].mxu0
        %v3709 = vadd.f32 %v3570, %v3708
        %v3710 = vpop.f32.mrb[0].mxu0
        %v3711 = vadd.f32 %v3572, %v3710
        %3712 = vmatprep.mubr.f32.mxu0 0.0
        %v3713 = vand.u32 %v1366, 4294901760
        %v3714 = vsub.f32 %v1366, %v3713
        %v3715 = vand.u32 %v3714, 4294901760
        %3716 = vmatmul.mubr.f32.gmra.mrb[0].mxu0 %v3715
        %v3717 = vpop.f32.mrb[0].mxu0
        %v3718 = vadd.f32 %v3578, %v3717
        %v3719 = vpop.f32.mrb[0].mxu0
        %v3720 = vadd.f32 %v3580, %v3719
        %3721 = vmatprep.mubr.f32.mxu0 0.0
        %v3722 = vand.u32 %v1369, 4294901760
        %v3723 = vsub.f32 %v1369, %v3722
        %v3724 = vand.u32 %v3723, 4294901760
        %3725 = vmatmul.mubr.f32.gmra.mrb[0].mxu0 %v3724
        %v3726 = vpop.f32.mrb[0].mxu0
        %v3727 = vadd.f32 %v3586, %v3726
        %v3728 = vpop.f32.mrb[0].mxu0
        %v3729 = vadd.f32 %v3588, %v3728
        %3730 = vmatprep.mubr.f32.mxu0 0.0
        %v3731 = vand.u32 %v1372, 4294901760
        %v3732 = vsub.f32 %v1372, %v3731
        %v3733 = vand.u32 %v3732, 4294901760
        %3734 = vmatmul.mubr.f32.gmra.mrb[0].mxu0 %v3733
        %v3735 = vpop.f32.mrb[0].mxu0
        %v3736 = vadd.f32 %v3594, %v3735
        %v3737 = vpop.f32.mrb[0].mxu0
        %v3738 = vadd.f32 %v3596, %v3737
        %3739 = vmatprep.mubr.f32.mxu0 0.0
        %v3740 = vand.u32 %v1375, 4294901760
        %v3741 = vsub.f32 %v1375, %v3740
        %v3742 = vand.u32 %v3741, 4294901760
        %3743 = vmatmul.mubr.f32.gmra.mrb[0].mxu0 %v3742
        %v3744 = vpop.f32.mrb[0].mxu0
        %v3745 = vadd.f32 %v3602, %v3744
        %v3746 = vpop.f32.mrb[0].mxu0
        %v3747 = vadd.f32 %v3604, %v3746
        %3748 = vmatprep.mubr.f32.mxu0 0.0
        %v3749 = vand.u32 %v1378, 4294901760
        %v3750 = vsub.f32 %v1378, %v3749
        %v3751 = vand.u32 %v3750, 4294901760
        %3752 = vmatmul.mubr.f32.gmra.mrb[0].mxu0 %v3751
        %v3753 = vpop.f32.mrb[0].mxu0
        %v3754 = vadd.f32 %v3610, %v3753
        %v3755 = vpop.f32.mrb[0].mxu0
        %v3756 = vadd.f32 %v3612, %v3755
        %3757 = vmatprep.mubr.f32.mxu0 0.0
        %v3758 = vand.u32 %v1381, 4294901760
        %v3759 = vsub.f32 %v1381, %v3758
        %v3760 = vand.u32 %v3759, 4294901760
        %3761 = vmatmul.mubr.f32.gmra.mrb[0].mxu0 %v3760
        %v3762 = vpop.f32.mrb[0].mxu0
        %v3763 = vadd.f32 %v3618, %v3762
        %v3764 = vpop.f32.mrb[0].mxu0
        %v3765 = vadd.f32 %v3620, %v3764
        %3766 = vdwg.mxu0
        %v3767 = vand.u32 %v314, 4294901760
        %v3768 = vsub.f32 %v314, %v3767
        %v3769 = vand.u32 %v3768, 4294901760
        %3770 = vmatprep.subr.mxu0 %v3769
        %v3771 = vand.u32 %v313, 4294901760
        %v3772 = vsub.f32 %v313, %v3771
        %v3773 = vand.u32 %v3772, 4294901760
        %3774 = vmatpush1.msra.mxu0 %v3773
        %v3775 = vand.u32 %v322, 4294901760
        %v3776 = vsub.f32 %v322, %v3775
        %v3777 = vand.u32 %v3776, 4294901760
        %3778 = vmatprep.subr.mxu0 %v3777
        %v3779 = vand.u32 %v321, 4294901760
        %v3780 = vsub.f32 %v321, %v3779
        %v3781 = vand.u32 %v3780, 4294901760
        %3782 = vmatpush1.msra.mxu0 %v3781
        %v3783 = vand.u32 %v330, 4294901760
        %v3784 = vsub.f32 %v330, %v3783
        %v3785 = vand.u32 %v3784, 4294901760
        %3786 = vmatprep.subr.mxu0 %v3785
        %v3787 = vand.u32 %v329, 4294901760
        %v3788 = vsub.f32 %v329, %v3787
        %v3789 = vand.u32 %v3788, 4294901760
        %3790 = vmatpush1.msra.mxu0 %v3789
        %v3791 = vand.u32 %v338, 4294901760
        %v3792 = vsub.f32 %v338, %v3791
        %v3793 = vand.u32 %v3792, 4294901760
        %3794 = vmatprep.subr.mxu0 %v3793
        %v3795 = vand.u32 %v337, 4294901760
        %v3796 = vsub.f32 %v337, %v3795
        %v3797 = vand.u32 %v3796, 4294901760
        %3798 = vmatpush1.msra.mxu0 %v3797
        %3799 = vmatprep.subr.mxu0 0.0
        %3800 = vmatpush1.msra.mxu0 0.0
        %3801 = vmatprep.subr.mxu0 0.0
        %3802 = vmatpush1.msra.mxu0 0.0
        %3803 = vmatprep.subr.mxu0 0.0
        %3804 = vmatpush1.msra.mxu0 0.0
        %3805 = vmatprep.subr.mxu0 0.0
        %3806 = vmatpush1.msra.mxu0 0.0
        %3807 = vmatprep.subr.mxu0 0.0
        %3808 = vmatpush1.msra.mxu0 0.0
        %3809 = vmatprep.subr.mxu0 0.0
        %3810 = vmatpush1.msra.mxu0 0.0
        %3811 = vmatprep.subr.mxu0 0.0
        %3812 = vmatpush1.msra.mxu0 0.0
        %3813 = vmatprep.subr.mxu0 0.0
        %3814 = vmatpush1.msra.mxu0 0.0
        %3815 = vmatprep.subr.mxu0 0.0
        %3816 = vmatpush1.msra.mxu0 0.0
        %3817 = vmatprep.subr.mxu0 0.0
        %3818 = vmatpush1.msra.mxu0 0.0
        %3819 = vmatprep.subr.mxu0 0.0
        %3820 = vmatpush1.msra.mxu0 0.0
        %3821 = vmatprep.subr.mxu0 0.0
        %3822 = vmatpush1.msra.mxu0 0.0
        %3823 = vmatprep.subr.mxu0 0.0
        %3824 = vmatpush1.msra.mxu0 0.0
        %3825 = vmatprep.subr.mxu0 0.0
        %3826 = vmatpush1.msra.mxu0 0.0
        %3827 = vmatprep.subr.mxu0 0.0
        %3828 = vmatpush1.msra.mxu0 0.0
        %3829 = vmatprep.subr.mxu0 0.0
        %3830 = vmatpush1.msra.mxu0 0.0
        %3831 = vmatprep.subr.mxu0 0.0
        %3832 = vmatpush1.msra.mxu0 0.0
        %3833 = vmatprep.subr.mxu0 0.0
        %3834 = vmatpush1.msra.mxu0 0.0
        %3835 = vmatprep.subr.mxu0 0.0
        %3836 = vmatpush1.msra.mxu0 0.0
        %3837 = vmatprep.subr.mxu0 0.0
        %3838 = vmatpush1.msra.mxu0 0.0
        %3839 = vmatprep.subr.mxu0 0.0
        %3840 = vmatpush1.msra.mxu0 0.0
        %3841 = vmatprep.subr.mxu0 0.0
        %3842 = vmatpush1.msra.mxu0 0.0
        %3843 = vmatprep.subr.mxu0 0.0
        %3844 = vmatpush1.msra.mxu0 0.0
        %3845 = vmatprep.subr.mxu0 0.0
        %3846 = vmatpush1.msra.mxu0 0.0
        %3847 = vmatprep.subr.mxu0 0.0
        %3848 = vmatpush1.msra.mxu0 0.0
        %3849 = vmatprep.subr.mxu0 0.0
        %3850 = vmatpush1.msra.mxu0 0.0
        %3851 = vmatprep.subr.mxu0 0.0
        %3852 = vmatpush1.msra.mxu0 0.0
        %3853 = vmatprep.subr.mxu0 0.0
        %3854 = vmatpush1.msra.mxu0 0.0
        %3855 = vmatprep.mubr.f32.mxu0 0.0
        %v3856 = vand.u32 %v1360, 4294901760
        %3857 = vmatmul.mubr.f32.gmra.mrb[0].mxu0 %v3856
        %v3858 = vpop.f32.mrb[0].mxu0
        %v3859 = vadd.f32 %v3700, %v3858
        %v3860 = vpop.f32.mrb[0].mxu0
        %v3861 = vadd.f32 %v3702, %v3860
        %3862 = vmatprep.mubr.f32.mxu0 0.0
        %v3863 = vand.u32 %v1363, 4294901760
        %3864 = vmatmul.mubr.f32.gmra.mrb[0].mxu0 %v3863
        %v3865 = vpop.f32.mrb[0].mxu0
        %v3866 = vadd.f32 %v3709, %v3865
        %v3867 = vpop.f32.mrb[0].mxu0
        %v3868 = vadd.f32 %v3711, %v3867
        %3869 = vmatprep.mubr.f32.mxu0 0.0
        %v3870 = vand.u32 %v1366, 4294901760
        %3871 = vmatmul.mubr.f32.gmra.mrb[0].mxu0 %v3870
        %v3872 = vpop.f32.mrb[0].mxu0
        %v3873 = vadd.f32 %v3718, %v3872
        %v3874 = vpop.f32.mrb[0].mxu0
        %v3875 = vadd.f32 %v3720, %v3874
        %3876 = vmatprep.mubr.f32.mxu0 0.0
        %v3877 = vand.u32 %v1369, 4294901760
        %3878 = vmatmul.mubr.f32.gmra.mrb[0].mxu0 %v3877
        %v3879 = vpop.f32.mrb[0].mxu0
        %v3880 = vadd.f32 %v3727, %v3879
        %v3881 = vpop.f32.mrb[0].mxu0
        %v3882 = vadd.f32 %v3729, %v3881
        %3883 = vmatprep.mubr.f32.mxu0 0.0
        %v3884 = vand.u32 %v1372, 4294901760
        %3885 = vmatmul.mubr.f32.gmra.mrb[0].mxu0 %v3884
        %v3886 = vpop.f32.mrb[0].mxu0
        %v3887 = vadd.f32 %v3736, %v3886
        %v3888 = vpop.f32.mrb[0].mxu0
        %v3889 = vadd.f32 %v3738, %v3888
        %3890 = vmatprep.mubr.f32.mxu0 0.0
        %v3891 = vand.u32 %v1375, 4294901760
        %3892 = vmatmul.mubr.f32.gmra.mrb[0].mxu0 %v3891
        %v3893 = vpop.f32.mrb[0].mxu0
        %v3894 = vadd.f32 %v3745, %v3893
        %v3895 = vpop.f32.mrb[0].mxu0
        %v3896 = vadd.f32 %v3747, %v3895
        %3897 = vmatprep.mubr.f32.mxu0 0.0
        %v3898 = vand.u32 %v1378, 4294901760
        %3899 = vmatmul.mubr.f32.gmra.mrb[0].mxu0 %v3898
        %v3900 = vpop.f32.mrb[0].mxu0
        %v3901 = vadd.f32 %v3754, %v3900
        %v3902 = vpop.f32.mrb[0].mxu0
        %v3903 = vadd.f32 %v3756, %v3902
        %3904 = vmatprep.mubr.f32.mxu0 0.0
        %v3905 = vand.u32 %v1381, 4294901760
        %3906 = vmatmul.mubr.f32.gmra.mrb[0].mxu0 %v3905
        %v3907 = vpop.f32.mrb[0].mxu0
        %v3908 = vadd.f32 %v3763, %v3907
        %v3909 = vpop.f32.mrb[0].mxu0
        %v3910 = vadd.f32 %v3765, %v3909
        %3911 = vdwg.mxu0
        %v3912 = vand.u32 %v314, 4294901760
        %3913 = vmatprep.subr.mxu0 %v3912
        %v3914 = vand.u32 %v313, 4294901760
        %3915 = vmatpush1.msra.mxu0 %v3914
        %v3916 = vand.u32 %v322, 4294901760
        %3917 = vmatprep.subr.mxu0 %v3916
        %v3918 = vand.u32 %v321, 4294901760
        %3919 = vmatpush1.msra.mxu0 %v3918
        %v3920 = vand.u32 %v330, 4294901760
        %3921 = vmatprep.subr.mxu0 %v3920
        %v3922 = vand.u32 %v329, 4294901760
        %3923 = vmatpush1.msra.mxu0 %v3922
        %v3924 = vand.u32 %v338, 4294901760
        %3925 = vmatprep.subr.mxu0 %v3924
        %v3926 = vand.u32 %v337, 4294901760
        %3927 = vmatpush1.msra.mxu0 %v3926
        %3928 = vmatprep.subr.mxu0 0.0
        %3929 = vmatpush1.msra.mxu0 0.0
        %3930 = vmatprep.subr.mxu0 0.0
        %3931 = vmatpush1.msra.mxu0 0.0
        %3932 = vmatprep.subr.mxu0 0.0
        %3933 = vmatpush1.msra.mxu0 0.0
        %3934 = vmatprep.subr.mxu0 0.0
        %3935 = vmatpush1.msra.mxu0 0.0
        %3936 = vmatprep.subr.mxu0 0.0
        %3937 = vmatpush1.msra.mxu0 0.0
        %3938 = vmatprep.subr.mxu0 0.0
        %3939 = vmatpush1.msra.mxu0 0.0
        %3940 = vmatprep.subr.mxu0 0.0
        %3941 = vmatpush1.msra.mxu0 0.0
        %3942 = vmatprep.subr.mxu0 0.0
        %3943 = vmatpush1.msra.mxu0 0.0
        %3944 = vmatprep.subr.mxu0 0.0
        %3945 = vmatpush1.msra.mxu0 0.0
        %3946 = vmatprep.subr.mxu0 0.0
        %3947 = vmatpush1.msra.mxu0 0.0
        %3948 = vmatprep.subr.mxu0 0.0
        %3949 = vmatpush1.msra.mxu0 0.0
        %3950 = vmatprep.subr.mxu0 0.0
        %3951 = vmatpush1.msra.mxu0 0.0
        %3952 = vmatprep.subr.mxu0 0.0
        %3953 = vmatpush1.msra.mxu0 0.0
        %3954 = vmatprep.subr.mxu0 0.0
        %3955 = vmatpush1.msra.mxu0 0.0
        %3956 = vmatprep.subr.mxu0 0.0
        %3957 = vmatpush1.msra.mxu0 0.0
        %3958 = vmatprep.subr.mxu0 0.0
        %3959 = vmatpush1.msra.mxu0 0.0
        %3960 = vmatprep.subr.mxu0 0.0
        %3961 = vmatpush1.msra.mxu0 0.0
        %3962 = vmatprep.subr.mxu0 0.0
        %3963 = vmatpush1.msra.mxu0 0.0
        %3964 = vmatprep.subr.mxu0 0.0
        %3965 = vmatpush1.msra.mxu0 0.0
        %3966 = vmatprep.subr.mxu0 0.0
        %3967 = vmatpush1.msra.mxu0 0.0
        %3968 = vmatprep.subr.mxu0 0.0
        %3969 = vmatpush1.msra.mxu0 0.0
        %3970 = vmatprep.subr.mxu0 0.0
        %3971 = vmatpush1.msra.mxu0 0.0
        %3972 = vmatprep.subr.mxu0 0.0
        %3973 = vmatpush1.msra.mxu0 0.0
        %3974 = vmatprep.subr.mxu0 0.0
        %3975 = vmatpush1.msra.mxu0 0.0
        %3976 = vmatprep.subr.mxu0 0.0
        %3977 = vmatpush1.msra.mxu0 0.0
        %3978 = vmatprep.subr.mxu0 0.0
        %3979 = vmatpush1.msra.mxu0 0.0
        %3980 = vmatprep.subr.mxu0 0.0
        %3981 = vmatpush1.msra.mxu0 0.0
        %3982 = vmatprep.subr.mxu0 0.0
        %3983 = vmatpush1.msra.mxu0 0.0
        %3984 = vmatprep.mubr.f32.mxu0 0.0
        %v3985 = vand.u32 %v1360, 4294901760
        %3986 = vmatmul.mubr.f32.gmra.mrb[0].mxu0 %v3985
        %v3987 = vpop.f32.mrb[0].mxu0
        %v3988 = vadd.f32 %v3859, %v3987
        %v3989 = vpop.f32.mrb[0].mxu0
        %v3990 = vadd.f32 %v3861, %v3989
        %3991 = vmatprep.mubr.f32.mxu0 0.0
        %v3992 = vand.u32 %v1363, 4294901760
        %3993 = vmatmul.mubr.f32.gmra.mrb[0].mxu0 %v3992
        %v3994 = vpop.f32.mrb[0].mxu0
        %v3995 = vadd.f32 %v3866, %v3994
        %v3996 = vpop.f32.mrb[0].mxu0
        %v3997 = vadd.f32 %v3868, %v3996
        %3998 = vmatprep.mubr.f32.mxu0 0.0
        %v3999 = vand.u32 %v1366, 4294901760
        %4000 = vmatmul.mubr.f32.gmra.mrb[0].mxu0 %v3999
        %v4001 = vpop.f32.mrb[0].mxu0
        %v4002 = vadd.f32 %v3873, %v4001
        %v4003 = vpop.f32.mrb[0].mxu0
        %v4004 = vadd.f32 %v3875, %v4003
        %4005 = vmatprep.mubr.f32.mxu0 0.0
        %v4006 = vand.u32 %v1369, 4294901760
        %4007 = vmatmul.mubr.f32.gmra.mrb[0].mxu0 %v4006
        %v4008 = vpop.f32.mrb[0].mxu0
        %v4009 = vadd.f32 %v3880, %v4008
        %v4010 = vpop.f32.mrb[0].mxu0
        %v4011 = vadd.f32 %v3882, %v4010
        %4012 = vmatprep.mubr.f32.mxu0 0.0
        %v4013 = vand.u32 %v1372, 4294901760
        %4014 = vmatmul.mubr.f32.gmra.mrb[0].mxu0 %v4013
        %v4015 = vpop.f32.mrb[0].mxu0
        %v4016 = vadd.f32 %v3887, %v4015
        %v4017 = vpop.f32.mrb[0].mxu0
        %v4018 = vadd.f32 %v3889, %v4017
        %4019 = vmatprep.mubr.f32.mxu0 0.0
        %v4020 = vand.u32 %v1375, 4294901760
        %4021 = vmatmul.mubr.f32.gmra.mrb[0].mxu0 %v4020
        %v4022 = vpop.f32.mrb[0].mxu0
        %v4023 = vadd.f32 %v3894, %v4022
        %v4024 = vpop.f32.mrb[0].mxu0
        %v4025 = vadd.f32 %v3896, %v4024
        %4026 = vmatprep.mubr.f32.mxu0 0.0
        %v4027 = vand.u32 %v1378, 4294901760
        %4028 = vmatmul.mubr.f32.gmra.mrb[0].mxu0 %v4027
        %v4029 = vpop.f32.mrb[0].mxu0
        %v4030 = vadd.f32 %v3901, %v4029
        %v4031 = vpop.f32.mrb[0].mxu0
        %v4032 = vadd.f32 %v3903, %v4031
        %4033 = vmatprep.mubr.f32.mxu0 0.0
        %v4034 = vand.u32 %v1381, 4294901760
        %4035 = vmatmul.mubr.f32.gmra.mrb[0].mxu0 %v4034
        %v4036 = vpop.f32.mrb[0].mxu0
        %v4037 = vadd.f32 %v3908, %v4036
        %v4038 = vpop.f32.mrb[0].mxu0
        %v4039 = vadd.f32 %v3910, %v4038
        %4040 = vdwg.mxu0
        %v4041 = vand.u32 %v316, 4294901760
        %4042 = vmatprep.subr.mxu0 %v4041
        %v4043 = vand.u32 %v315, 4294901760
        %4044 = vmatpush1.msra.mxu0 %v4043
        %v4045 = vand.u32 %v324, 4294901760
        %4046 = vmatprep.subr.mxu0 %v4045
        %v4047 = vand.u32 %v323, 4294901760
        %4048 = vmatpush1.msra.mxu0 %v4047
        %v4049 = vand.u32 %v332, 4294901760
        %4050 = vmatprep.subr.mxu0 %v4049
        %v4051 = vand.u32 %v331, 4294901760
        %4052 = vmatpush1.msra.mxu0 %v4051
        %v4053 = vand.u32 %v340, 4294901760
        %4054 = vmatprep.subr.mxu0 %v4053
        %v4055 = vand.u32 %v339, 4294901760
        %4056 = vmatpush1.msra.mxu0 %v4055
        %4057 = vmatprep.subr.mxu0 0.0
        %4058 = vmatpush1.msra.mxu0 0.0
        %4059 = vmatprep.subr.mxu0 0.0
        %4060 = vmatpush1.msra.mxu0 0.0
        %4061 = vmatprep.subr.mxu0 0.0
        %4062 = vmatpush1.msra.mxu0 0.0
        %4063 = vmatprep.subr.mxu0 0.0
        %4064 = vmatpush1.msra.mxu0 0.0
        %4065 = vmatprep.subr.mxu0 0.0
        %4066 = vmatpush1.msra.mxu0 0.0
        %4067 = vmatprep.subr.mxu0 0.0
        %4068 = vmatpush1.msra.mxu0 0.0
        %4069 = vmatprep.subr.mxu0 0.0
        %4070 = vmatpush1.msra.mxu0 0.0
        %4071 = vmatprep.subr.mxu0 0.0
        %4072 = vmatpush1.msra.mxu0 0.0
        %4073 = vmatprep.subr.mxu0 0.0
        %4074 = vmatpush1.msra.mxu0 0.0
        %4075 = vmatprep.subr.mxu0 0.0
        %4076 = vmatpush1.msra.mxu0 0.0
        %4077 = vmatprep.subr.mxu0 0.0
        %4078 = vmatpush1.msra.mxu0 0.0
        %4079 = vmatprep.subr.mxu0 0.0
        %4080 = vmatpush1.msra.mxu0 0.0
        %4081 = vmatprep.subr.mxu0 0.0
        %4082 = vmatpush1.msra.mxu0 0.0
        %4083 = vmatprep.subr.mxu0 0.0
        %4084 = vmatpush1.msra.mxu0 0.0
        %4085 = vmatprep.subr.mxu0 0.0
        %4086 = vmatpush1.msra.mxu0 0.0
        %4087 = vmatprep.subr.mxu0 0.0
        %4088 = vmatpush1.msra.mxu0 0.0
        %4089 = vmatprep.subr.mxu0 0.0
        %4090 = vmatpush1.msra.mxu0 0.0
        %4091 = vmatprep.subr.mxu0 0.0
        %4092 = vmatpush1.msra.mxu0 0.0
        %4093 = vmatprep.subr.mxu0 0.0
        %4094 = vmatpush1.msra.mxu0 0.0
        %4095 = vmatprep.subr.mxu0 0.0
        %4096 = vmatpush1.msra.mxu0 0.0
        %4097 = vmatprep.subr.mxu0 0.0
        %4098 = vmatpush1.msra.mxu0 0.0
        %4099 = vmatprep.subr.mxu0 0.0
        %4100 = vmatpush1.msra.mxu0 0.0
        %4101 = vmatprep.subr.mxu0 0.0
        %4102 = vmatpush1.msra.mxu0 0.0
        %4103 = vmatprep.subr.mxu0 0.0
        %4104 = vmatpush1.msra.mxu0 0.0
        %4105 = vmatprep.subr.mxu0 0.0
        %4106 = vmatpush1.msra.mxu0 0.0
        %4107 = vmatprep.subr.mxu0 0.0
        %4108 = vmatpush1.msra.mxu0 0.0
        %4109 = vmatprep.subr.mxu0 0.0
        %4110 = vmatpush1.msra.mxu0 0.0
        %4111 = vmatprep.subr.mxu0 0.0
        %4112 = vmatpush1.msra.mxu0 0.0
        %4113 = vmatprep.mubr.f32.mxu0 0.0
        %v4114 = vand.u32 %v1360, 4294901760
        %v4115 = vsub.f32 %v1360, %v4114
        %v4116 = vand.u32 %v4115, 4294901760
        %v4117 = vsub.f32 %v4115, %v4116
        %v4118 = vand.u32 %v4117, 4294901760
        %4119 = vmatmul.mubr.f32.gmra.mrb[0].mxu0 %v4118
        %v4120 = vpop.f32.mrb[0].mxu0
        %v4121 = vadd.f32 0.0, %v4120
        %v4122 = vpop.f32.mrb[0].mxu0
        %v4123 = vadd.f32 0.0, %v4122
        %4124 = vmatprep.mubr.f32.mxu0 0.0
        %v4125 = vand.u32 %v1363, 4294901760
        %v4126 = vsub.f32 %v1363, %v4125
        %v4127 = vand.u32 %v4126, 4294901760
        %v4128 = vsub.f32 %v4126, %v4127
        %v4129 = vand.u32 %v4128, 4294901760
        %4130 = vmatmul.mubr.f32.gmra.mrb[0].mxu0 %v4129
        %v4131 = vpop.f32.mrb[0].mxu0
        %v4132 = vadd.f32 0.0, %v4131
        %v4133 = vpop.f32.mrb[0].mxu0
        %v4134 = vadd.f32 0.0, %v4133
        %4135 = vmatprep.mubr.f32.mxu0 0.0
        %v4136 = vand.u32 %v1366, 4294901760
        %v4137 = vsub.f32 %v1366, %v4136
        %v4138 = vand.u32 %v4137, 4294901760
        %v4139 = vsub.f32 %v4137, %v4138
        %v4140 = vand.u32 %v4139, 4294901760
        %4141 = vmatmul.mubr.f32.gmra.mrb[0].mxu0 %v4140
        %v4142 = vpop.f32.mrb[0].mxu0
        %v4143 = vadd.f32 0.0, %v4142
        %v4144 = vpop.f32.mrb[0].mxu0
        %v4145 = vadd.f32 0.0, %v4144
        %4146 = vmatprep.mubr.f32.mxu0 0.0
        %v4147 = vand.u32 %v1369, 4294901760
        %v4148 = vsub.f32 %v1369, %v4147
        %v4149 = vand.u32 %v4148, 4294901760
        %v4150 = vsub.f32 %v4148, %v4149
        %v4151 = vand.u32 %v4150, 4294901760
        %4152 = vmatmul.mubr.f32.gmra.mrb[0].mxu0 %v4151
        %v4153 = vpop.f32.mrb[0].mxu0
        %v4154 = vadd.f32 0.0, %v4153
        %v4155 = vpop.f32.mrb[0].mxu0
        %v4156 = vadd.f32 0.0, %v4155
        %4157 = vmatprep.mubr.f32.mxu0 0.0
        %v4158 = vand.u32 %v1372, 4294901760
        %v4159 = vsub.f32 %v1372, %v4158
        %v4160 = vand.u32 %v4159, 4294901760
        %v4161 = vsub.f32 %v4159, %v4160
        %v4162 = vand.u32 %v4161, 4294901760
        %4163 = vmatmul.mubr.f32.gmra.mrb[0].mxu0 %v4162
        %v4164 = vpop.f32.mrb[0].mxu0
        %v4165 = vadd.f32 0.0, %v4164
        %v4166 = vpop.f32.mrb[0].mxu0
        %v4167 = vadd.f32 0.0, %v4166
        %4168 = vmatprep.mubr.f32.mxu0 0.0
        %v4169 = vand.u32 %v1375, 4294901760
        %v4170 = vsub.f32 %v1375, %v4169
        %v4171 = vand.u32 %v4170, 4294901760
        %v4172 = vsub.f32 %v4170, %v4171
        %v4173 = vand.u32 %v4172, 4294901760
        %4174 = vmatmul.mubr.f32.gmra.mrb[0].mxu0 %v4173
        %v4175 = vpop.f32.mrb[0].mxu0
        %v4176 = vadd.f32 0.0, %v4175
        %v4177 = vpop.f32.mrb[0].mxu0
        %v4178 = vadd.f32 0.0, %v4177
        %4179 = vmatprep.mubr.f32.mxu0 0.0
        %v4180 = vand.u32 %v1378, 4294901760
        %v4181 = vsub.f32 %v1378, %v4180
        %v4182 = vand.u32 %v4181, 4294901760
        %v4183 = vsub.f32 %v4181, %v4182
        %v4184 = vand.u32 %v4183, 4294901760
        %4185 = vmatmul.mubr.f32.gmra.mrb[0].mxu0 %v4184
        %v4186 = vpop.f32.mrb[0].mxu0
        %v4187 = vadd.f32 0.0, %v4186
        %v4188 = vpop.f32.mrb[0].mxu0
        %v4189 = vadd.f32 0.0, %v4188
        %4190 = vmatprep.mubr.f32.mxu0 0.0
        %v4191 = vand.u32 %v1381, 4294901760
        %v4192 = vsub.f32 %v1381, %v4191
        %v4193 = vand.u32 %v4192, 4294901760
        %v4194 = vsub.f32 %v4192, %v4193
        %v4195 = vand.u32 %v4194, 4294901760
        %4196 = vmatmul.mubr.f32.gmra.mrb[0].mxu0 %v4195
        %v4197 = vpop.f32.mrb[0].mxu0
        %v4198 = vadd.f32 0.0, %v4197
        %v4199 = vpop.f32.mrb[0].mxu0
        %v4200 = vadd.f32 0.0, %v4199
        %4201 = vdwg.mxu0
        %v4202 = vand.u32 %v316, 4294901760
        %v4203 = vsub.f32 %v316, %v4202
        %v4204 = vand.u32 %v4203, 4294901760
        %v4205 = vsub.f32 %v4203, %v4204
        %v4206 = vand.u32 %v4205, 4294901760
        %4207 = vmatprep.subr.mxu0 %v4206
        %v4208 = vand.u32 %v315, 4294901760
        %v4209 = vsub.f32 %v315, %v4208
        %v4210 = vand.u32 %v4209, 4294901760
        %v4211 = vsub.f32 %v4209, %v4210
        %v4212 = vand.u32 %v4211, 4294901760
        %4213 = vmatpush1.msra.mxu0 %v4212
        %v4214 = vand.u32 %v324, 4294901760
        %v4215 = vsub.f32 %v324, %v4214
        %v4216 = vand.u32 %v4215, 4294901760
        %v4217 = vsub.f32 %v4215, %v4216
        %v4218 = vand.u32 %v4217, 4294901760
        %4219 = vmatprep.subr.mxu0 %v4218
        %v4220 = vand.u32 %v323, 4294901760
        %v4221 = vsub.f32 %v323, %v4220
        %v4222 = vand.u32 %v4221, 4294901760
        %v4223 = vsub.f32 %v4221, %v4222
        %v4224 = vand.u32 %v4223, 4294901760
        %4225 = vmatpush1.msra.mxu0 %v4224
        %v4226 = vand.u32 %v332, 4294901760
        %v4227 = vsub.f32 %v332, %v4226
        %v4228 = vand.u32 %v4227, 4294901760
        %v4229 = vsub.f32 %v4227, %v4228
        %v4230 = vand.u32 %v4229, 4294901760
        %4231 = vmatprep.subr.mxu0 %v4230
        %v4232 = vand.u32 %v331, 4294901760
        %v4233 = vsub.f32 %v331, %v4232
        %v4234 = vand.u32 %v4233, 4294901760
        %v4235 = vsub.f32 %v4233, %v4234
        %v4236 = vand.u32 %v4235, 4294901760
        %4237 = vmatpush1.msra.mxu0 %v4236
        %v4238 = vand.u32 %v340, 4294901760
        %v4239 = vsub.f32 %v340, %v4238
        %v4240 = vand.u32 %v4239, 4294901760
        %v4241 = vsub.f32 %v4239, %v4240
        %v4242 = vand.u32 %v4241, 4294901760
        %4243 = vmatprep.subr.mxu0 %v4242
        %v4244 = vand.u32 %v339, 4294901760
        %v4245 = vsub.f32 %v339, %v4244
        %v4246 = vand.u32 %v4245, 4294901760
        %v4247 = vsub.f32 %v4245, %v4246
        %v4248 = vand.u32 %v4247, 4294901760
        %4249 = vmatpush1.msra.mxu0 %v4248
        %4250 = vmatprep.subr.mxu0 0.0
        %4251 = vmatpush1.msra.mxu0 0.0
        %4252 = vmatprep.subr.mxu0 0.0
        %4253 = vmatpush1.msra.mxu0 0.0
        %4254 = vmatprep.subr.mxu0 0.0
        %4255 = vmatpush1.msra.mxu0 0.0
        %4256 = vmatprep.subr.mxu0 0.0
        %4257 = vmatpush1.msra.mxu0 0.0
        %4258 = vmatprep.subr.mxu0 0.0
        %4259 = vmatpush1.msra.mxu0 0.0
        %4260 = vmatprep.subr.mxu0 0.0
        %4261 = vmatpush1.msra.mxu0 0.0
        %4262 = vmatprep.subr.mxu0 0.0
        %4263 = vmatpush1.msra.mxu0 0.0
        %4264 = vmatprep.subr.mxu0 0.0
        %4265 = vmatpush1.msra.mxu0 0.0
        %4266 = vmatprep.subr.mxu0 0.0
        %4267 = vmatpush1.msra.mxu0 0.0
        %4268 = vmatprep.subr.mxu0 0.0
        %4269 = vmatpush1.msra.mxu0 0.0
        %4270 = vmatprep.subr.mxu0 0.0
        %4271 = vmatpush1.msra.mxu0 0.0
        %4272 = vmatprep.subr.mxu0 0.0
        %4273 = vmatpush1.msra.mxu0 0.0
        %4274 = vmatprep.subr.mxu0 0.0
        %4275 = vmatpush1.msra.mxu0 0.0
        %4276 = vmatprep.subr.mxu0 0.0
        %4277 = vmatpush1.msra.mxu0 0.0
        %4278 = vmatprep.subr.mxu0 0.0
        %4279 = vmatpush1.msra.mxu0 0.0
        %4280 = vmatprep.subr.mxu0 0.0
        %4281 = vmatpush1.msra.mxu0 0.0
        %4282 = vmatprep.subr.mxu0 0.0
        %4283 = vmatpush1.msra.mxu0 0.0
        %4284 = vmatprep.subr.mxu0 0.0
        %4285 = vmatpush1.msra.mxu0 0.0
        %4286 = vmatprep.subr.mxu0 0.0
        %4287 = vmatpush1.msra.mxu0 0.0
        %4288 = vmatprep.subr.mxu0 0.0
        %4289 = vmatpush1.msra.mxu0 0.0
        %4290 = vmatprep.subr.mxu0 0.0
        %4291 = vmatpush1.msra.mxu0 0.0
        %4292 = vmatprep.subr.mxu0 0.0
        %4293 = vmatpush1.msra.mxu0 0.0
        %4294 = vmatprep.subr.mxu0 0.0
        %4295 = vmatpush1.msra.mxu0 0.0
        %4296 = vmatprep.subr.mxu0 0.0
        %4297 = vmatpush1.msra.mxu0 0.0
        %4298 = vmatprep.subr.mxu0 0.0
        %4299 = vmatpush1.msra.mxu0 0.0
        %4300 = vmatprep.subr.mxu0 0.0
        %4301 = vmatpush1.msra.mxu0 0.0
        %4302 = vmatprep.subr.mxu0 0.0
        %4303 = vmatpush1.msra.mxu0 0.0
        %4304 = vmatprep.subr.mxu0 0.0
        %4305 = vmatpush1.msra.mxu0 0.0
        %4306 = vmatprep.mubr.f32.mxu0 0.0
        %v4307 = vand.u32 %v1360, 4294901760
        %4308 = vmatmul.mubr.f32.gmra.mrb[0].mxu0 %v4307
        %v4309 = vpop.f32.mrb[0].mxu0
        %v4310 = vadd.f32 %v4121, %v4309
        %v4311 = vpop.f32.mrb[0].mxu0
        %v4312 = vadd.f32 %v4123, %v4311
        %4313 = vmatprep.mubr.f32.mxu0 0.0
        %v4314 = vand.u32 %v1363, 4294901760
        %4315 = vmatmul.mubr.f32.gmra.mrb[0].mxu0 %v4314
        %v4316 = vpop.f32.mrb[0].mxu0
        %v4317 = vadd.f32 %v4132, %v4316
        %v4318 = vpop.f32.mrb[0].mxu0
        %v4319 = vadd.f32 %v4134, %v4318
        %4320 = vmatprep.mubr.f32.mxu0 0.0
        %v4321 = vand.u32 %v1366, 4294901760
        %4322 = vmatmul.mubr.f32.gmra.mrb[0].mxu0 %v4321
        %v4323 = vpop.f32.mrb[0].mxu0
        %v4324 = vadd.f32 %v4143, %v4323
        %v4325 = vpop.f32.mrb[0].mxu0
        %v4326 = vadd.f32 %v4145, %v4325
        %4327 = vmatprep.mubr.f32.mxu0 0.0
        %v4328 = vand.u32 %v1369, 4294901760
        %4329 = vmatmul.mubr.f32.gmra.mrb[0].mxu0 %v4328
        %v4330 = vpop.f32.mrb[0].mxu0
        %v4331 = vadd.f32 %v4154, %v4330
        %v4332 = vpop.f32.mrb[0].mxu0
        %v4333 = vadd.f32 %v4156, %v4332
        %4334 = vmatprep.mubr.f32.mxu0 0.0
        %v4335 = vand.u32 %v1372, 4294901760
        %4336 = vmatmul.mubr.f32.gmra.mrb[0].mxu0 %v4335
        %v4337 = vpop.f32.mrb[0].mxu0
        %v4338 = vadd.f32 %v4165, %v4337
        %v4339 = vpop.f32.mrb[0].mxu0
        %v4340 = vadd.f32 %v4167, %v4339
        %4341 = vmatprep.mubr.f32.mxu0 0.0
        %v4342 = vand.u32 %v1375, 4294901760
        %4343 = vmatmul.mubr.f32.gmra.mrb[0].mxu0 %v4342
        %v4344 = vpop.f32.mrb[0].mxu0
        %v4345 = vadd.f32 %v4176, %v4344
        %v4346 = vpop.f32.mrb[0].mxu0
        %v4347 = vadd.f32 %v4178, %v4346
        %4348 = vmatprep.mubr.f32.mxu0 0.0
        %v4349 = vand.u32 %v1378, 4294901760
        %4350 = vmatmul.mubr.f32.gmra.mrb[0].mxu0 %v4349
        %v4351 = vpop.f32.mrb[0].mxu0
        %v4352 = vadd.f32 %v4187, %v4351
        %v4353 = vpop.f32.mrb[0].mxu0
        %v4354 = vadd.f32 %v4189, %v4353
        %4355 = vmatprep.mubr.f32.mxu0 0.0
        %v4356 = vand.u32 %v1381, 4294901760
        %4357 = vmatmul.mubr.f32.gmra.mrb[0].mxu0 %v4356
        %v4358 = vpop.f32.mrb[0].mxu0
        %v4359 = vadd.f32 %v4198, %v4358
        %v4360 = vpop.f32.mrb[0].mxu0
        %v4361 = vadd.f32 %v4200, %v4360
        %4362 = vdwg.mxu0
        %v4363 = vand.u32 %v316, 4294901760
        %v4364 = vsub.f32 %v316, %v4363
        %4365 = vmatprep.subr.mxu0 %v4364
        %v4366 = vand.u32 %v315, 4294901760
        %v4367 = vsub.f32 %v315, %v4366
        %4368 = vmatpush1.msra.mxu0 %v4367
        %v4369 = vand.u32 %v324, 4294901760
        %v4370 = vsub.f32 %v324, %v4369
        %4371 = vmatprep.subr.mxu0 %v4370
        %v4372 = vand.u32 %v323, 4294901760
        %v4373 = vsub.f32 %v323, %v4372
        %4374 = vmatpush1.msra.mxu0 %v4373
        %v4375 = vand.u32 %v332, 4294901760
        %v4376 = vsub.f32 %v332, %v4375
        %4377 = vmatprep.subr.mxu0 %v4376
        %v4378 = vand.u32 %v331, 4294901760
        %v4379 = vsub.f32 %v331, %v4378
        %4380 = vmatpush1.msra.mxu0 %v4379
        %v4381 = vand.u32 %v340, 4294901760
        %v4382 = vsub.f32 %v340, %v4381
        %4383 = vmatprep.subr.mxu0 %v4382
        %v4384 = vand.u32 %v339, 4294901760
        %v4385 = vsub.f32 %v339, %v4384
        %4386 = vmatpush1.msra.mxu0 %v4385
        %4387 = vmatprep.subr.mxu0 0.0
        %4388 = vmatpush1.msra.mxu0 0.0
        %4389 = vmatprep.subr.mxu0 0.0
        %4390 = vmatpush1.msra.mxu0 0.0
        %4391 = vmatprep.subr.mxu0 0.0
        %4392 = vmatpush1.msra.mxu0 0.0
        %4393 = vmatprep.subr.mxu0 0.0
        %4394 = vmatpush1.msra.mxu0 0.0
        %4395 = vmatprep.subr.mxu0 0.0
        %4396 = vmatpush1.msra.mxu0 0.0
        %4397 = vmatprep.subr.mxu0 0.0
        %4398 = vmatpush1.msra.mxu0 0.0
        %4399 = vmatprep.subr.mxu0 0.0
        %4400 = vmatpush1.msra.mxu0 0.0
        %4401 = vmatprep.subr.mxu0 0.0
        %4402 = vmatpush1.msra.mxu0 0.0
        %4403 = vmatprep.subr.mxu0 0.0
        %4404 = vmatpush1.msra.mxu0 0.0
        %4405 = vmatprep.subr.mxu0 0.0
        %4406 = vmatpush1.msra.mxu0 0.0
        %4407 = vmatprep.subr.mxu0 0.0
        %4408 = vmatpush1.msra.mxu0 0.0
        %4409 = vmatprep.subr.mxu0 0.0
        %4410 = vmatpush1.msra.mxu0 0.0
        %4411 = vmatprep.subr.mxu0 0.0
        %4412 = vmatpush1.msra.mxu0 0.0
        %4413 = vmatprep.subr.mxu0 0.0
        %4414 = vmatpush1.msra.mxu0 0.0
        %4415 = vmatprep.subr.mxu0 0.0
        %4416 = vmatpush1.msra.mxu0 0.0
        %4417 = vmatprep.subr.mxu0 0.0
        %4418 = vmatpush1.msra.mxu0 0.0
        %4419 = vmatprep.subr.mxu0 0.0
        %4420 = vmatpush1.msra.mxu0 0.0
        %4421 = vmatprep.subr.mxu0 0.0
        %4422 = vmatpush1.msra.mxu0 0.0
        %4423 = vmatprep.subr.mxu0 0.0
        %4424 = vmatpush1.msra.mxu0 0.0
        %4425 = vmatprep.subr.mxu0 0.0
        %4426 = vmatpush1.msra.mxu0 0.0
        %4427 = vmatprep.subr.mxu0 0.0
        %4428 = vmatpush1.msra.mxu0 0.0
        %4429 = vmatprep.subr.mxu0 0.0
        %4430 = vmatpush1.msra.mxu0 0.0
        %4431 = vmatprep.subr.mxu0 0.0
        %4432 = vmatpush1.msra.mxu0 0.0
        %4433 = vmatprep.subr.mxu0 0.0
        %4434 = vmatpush1.msra.mxu0 0.0
        %4435 = vmatprep.subr.mxu0 0.0
        %4436 = vmatpush1.msra.mxu0 0.0
        %4437 = vmatprep.subr.mxu0 0.0
        %4438 = vmatpush1.msra.mxu0 0.0
        %4439 = vmatprep.subr.mxu0 0.0
        %4440 = vmatpush1.msra.mxu0 0.0
        %4441 = vmatprep.subr.mxu0 0.0
        %4442 = vmatpush1.msra.mxu0 0.0
        %4443 = vmatprep.mubr.f32.mxu0 0.0
        %v4444 = vand.u32 %v1360, 4294901760
        %v4445 = vsub.f32 %v1360, %v4444
        %4446 = vmatmul.mubr.f32.gmra.mrb[0].mxu0 %v4445
        %v4447 = vpop.f32.mrb[0].mxu0
        %v4448 = vadd.f32 %v4310, %v4447
        %v4449 = vpop.f32.mrb[0].mxu0
        %v4450 = vadd.f32 %v4312, %v4449
        %4451 = vmatprep.mubr.f32.mxu0 0.0
        %v4452 = vand.u32 %v1363, 4294901760
        %v4453 = vsub.f32 %v1363, %v4452
        %4454 = vmatmul.mubr.f32.gmra.mrb[0].mxu0 %v4453
        %v4455 = vpop.f32.mrb[0].mxu0
        %v4456 = vadd.f32 %v4317, %v4455
        %v4457 = vpop.f32.mrb[0].mxu0
        %v4458 = vadd.f32 %v4319, %v4457
        %4459 = vmatprep.mubr.f32.mxu0 0.0
        %v4460 = vand.u32 %v1366, 4294901760
        %v4461 = vsub.f32 %v1366, %v4460
        %4462 = vmatmul.mubr.f32.gmra.mrb[0].mxu0 %v4461
        %v4463 = vpop.f32.mrb[0].mxu0
        %v4464 = vadd.f32 %v4324, %v4463
        %v4465 = vpop.f32.mrb[0].mxu0
        %v4466 = vadd.f32 %v4326, %v4465
        %4467 = vmatprep.mubr.f32.mxu0 0.0
        %v4468 = vand.u32 %v1369, 4294901760
        %v4469 = vsub.f32 %v1369, %v4468
        %4470 = vmatmul.mubr.f32.gmra.mrb[0].mxu0 %v4469
        %v4471 = vpop.f32.mrb[0].mxu0
        %v4472 = vadd.f32 %v4331, %v4471
        %v4473 = vpop.f32.mrb[0].mxu0
        %v4474 = vadd.f32 %v4333, %v4473
        %4475 = vmatprep.mubr.f32.mxu0 0.0
        %v4476 = vand.u32 %v1372, 4294901760
        %v4477 = vsub.f32 %v1372, %v4476
        %4478 = vmatmul.mubr.f32.gmra.mrb[0].mxu0 %v4477
        %v4479 = vpop.f32.mrb[0].mxu0
        %v4480 = vadd.f32 %v4338, %v4479
        %v4481 = vpop.f32.mrb[0].mxu0
        %v4482 = vadd.f32 %v4340, %v4481
        %4483 = vmatprep.mubr.f32.mxu0 0.0
        %v4484 = vand.u32 %v1375, 4294901760
        %v4485 = vsub.f32 %v1375, %v4484
        %4486 = vmatmul.mubr.f32.gmra.mrb[0].mxu0 %v4485
        %v4487 = vpop.f32.mrb[0].mxu0
        %v4488 = vadd.f32 %v4345, %v4487
        %v4489 = vpop.f32.mrb[0].mxu0
        %v4490 = vadd.f32 %v4347, %v4489
        %4491 = vmatprep.mubr.f32.mxu0 0.0
        %v4492 = vand.u32 %v1378, 4294901760
        %v4493 = vsub.f32 %v1378, %v4492
        %4494 = vmatmul.mubr.f32.gmra.mrb[0].mxu0 %v4493
        %v4495 = vpop.f32.mrb[0].mxu0
        %v4496 = vadd.f32 %v4352, %v4495
        %v4497 = vpop.f32.mrb[0].mxu0
        %v4498 = vadd.f32 %v4354, %v4497
        %4499 = vmatprep.mubr.f32.mxu0 0.0
        %v4500 = vand.u32 %v1381, 4294901760
        %v4501 = vsub.f32 %v1381, %v4500
        %4502 = vmatmul.mubr.f32.gmra.mrb[0].mxu0 %v4501
        %v4503 = vpop.f32.mrb[0].mxu0
        %v4504 = vadd.f32 %v4359, %v4503
        %v4505 = vpop.f32.mrb[0].mxu0
        %v4506 = vadd.f32 %v4361, %v4505
        %4507 = vdwg.mxu0
        %v4508 = vand.u32 %v316, 4294901760
        %4509 = vmatprep.subr.mxu0 %v4508
        %v4510 = vand.u32 %v315, 4294901760
        %4511 = vmatpush1.msra.mxu0 %v4510
        %v4512 = vand.u32 %v324, 4294901760
        %4513 = vmatprep.subr.mxu0 %v4512
        %v4514 = vand.u32 %v323, 4294901760
        %4515 = vmatpush1.msra.mxu0 %v4514
        %v4516 = vand.u32 %v332, 4294901760
        %4517 = vmatprep.subr.mxu0 %v4516
        %v4518 = vand.u32 %v331, 4294901760
        %4519 = vmatpush1.msra.mxu0 %v4518
        %v4520 = vand.u32 %v340, 4294901760
        %4521 = vmatprep.subr.mxu0 %v4520
        %v4522 = vand.u32 %v339, 4294901760
        %4523 = vmatpush1.msra.mxu0 %v4522
        %4524 = vmatprep.subr.mxu0 0.0
        %4525 = vmatpush1.msra.mxu0 0.0
        %4526 = vmatprep.subr.mxu0 0.0
        %4527 = vmatpush1.msra.mxu0 0.0
        %4528 = vmatprep.subr.mxu0 0.0
        %4529 = vmatpush1.msra.mxu0 0.0
        %4530 = vmatprep.subr.mxu0 0.0
        %4531 = vmatpush1.msra.mxu0 0.0
        %4532 = vmatprep.subr.mxu0 0.0
        %4533 = vmatpush1.msra.mxu0 0.0
        %4534 = vmatprep.subr.mxu0 0.0
        %4535 = vmatpush1.msra.mxu0 0.0
        %4536 = vmatprep.subr.mxu0 0.0
        %4537 = vmatpush1.msra.mxu0 0.0
        %4538 = vmatprep.subr.mxu0 0.0
        %4539 = vmatpush1.msra.mxu0 0.0
        %4540 = vmatprep.subr.mxu0 0.0
        %4541 = vmatpush1.msra.mxu0 0.0
        %4542 = vmatprep.subr.mxu0 0.0
        %4543 = vmatpush1.msra.mxu0 0.0
        %4544 = vmatprep.subr.mxu0 0.0
        %4545 = vmatpush1.msra.mxu0 0.0
        %4546 = vmatprep.subr.mxu0 0.0
        %4547 = vmatpush1.msra.mxu0 0.0
        %4548 = vmatprep.subr.mxu0 0.0
        %4549 = vmatpush1.msra.mxu0 0.0
        %4550 = vmatprep.subr.mxu0 0.0
        %4551 = vmatpush1.msra.mxu0 0.0
        %4552 = vmatprep.subr.mxu0 0.0
        %4553 = vmatpush1.msra.mxu0 0.0
        %4554 = vmatprep.subr.mxu0 0.0
        %4555 = vmatpush1.msra.mxu0 0.0
        %4556 = vmatprep.subr.mxu0 0.0
        %4557 = vmatpush1.msra.mxu0 0.0
        %4558 = vmatprep.subr.mxu0 0.0
        %4559 = vmatpush1.msra.mxu0 0.0
        %4560 = vmatprep.subr.mxu0 0.0
        %4561 = vmatpush1.msra.mxu0 0.0
        %4562 = vmatprep.subr.mxu0 0.0
        %4563 = vmatpush1.msra.mxu0 0.0
        %4564 = vmatprep.subr.mxu0 0.0
        %4565 = vmatpush1.msra.mxu0 0.0
        %4566 = vmatprep.subr.mxu0 0.0
        %4567 = vmatpush1.msra.mxu0 0.0
        %4568 = vmatprep.subr.mxu0 0.0
        %4569 = vmatpush1.msra.mxu0 0.0
        %4570 = vmatprep.subr.mxu0 0.0
        %4571 = vmatpush1.msra.mxu0 0.0
        %4572 = vmatprep.subr.mxu0 0.0
        %4573 = vmatpush1.msra.mxu0 0.0
        %4574 = vmatprep.subr.mxu0 0.0
        %4575 = vmatpush1.msra.mxu0 0.0
        %4576 = vmatprep.subr.mxu0 0.0
        %4577 = vmatpush1.msra.mxu0 0.0
        %4578 = vmatprep.subr.mxu0 0.0
        %4579 = vmatpush1.msra.mxu0 0.0
        %4580 = vmatprep.mubr.f32.mxu0 0.0
        %v4581 = vand.u32 %v1360, 4294901760
        %v4582 = vsub.f32 %v1360, %v4581
        %v4583 = vand.u32 %v4582, 4294901760
        %4584 = vmatmul.mubr.f32.gmra.mrb[0].mxu0 %v4583
        %v4585 = vpop.f32.mrb[0].mxu0
        %v4586 = vadd.f32 %v4448, %v4585
        %v4587 = vpop.f32.mrb[0].mxu0
        %v4588 = vadd.f32 %v4450, %v4587
        %4589 = vmatprep.mubr.f32.mxu0 0.0
        %v4590 = vand.u32 %v1363, 4294901760
        %v4591 = vsub.f32 %v1363, %v4590
        %v4592 = vand.u32 %v4591, 4294901760
        %4593 = vmatmul.mubr.f32.gmra.mrb[0].mxu0 %v4592
        %v4594 = vpop.f32.mrb[0].mxu0
        %v4595 = vadd.f32 %v4456, %v4594
        %v4596 = vpop.f32.mrb[0].mxu0
        %v4597 = vadd.f32 %v4458, %v4596
        %4598 = vmatprep.mubr.f32.mxu0 0.0
        %v4599 = vand.u32 %v1366, 4294901760
        %v4600 = vsub.f32 %v1366, %v4599
        %v4601 = vand.u32 %v4600, 4294901760
        %4602 = vmatmul.mubr.f32.gmra.mrb[0].mxu0 %v4601
        %v4603 = vpop.f32.mrb[0].mxu0
        %v4604 = vadd.f32 %v4464, %v4603
        %v4605 = vpop.f32.mrb[0].mxu0
        %v4606 = vadd.f32 %v4466, %v4605
        %4607 = vmatprep.mubr.f32.mxu0 0.0
        %v4608 = vand.u32 %v1369, 4294901760
        %v4609 = vsub.f32 %v1369, %v4608
        %v4610 = vand.u32 %v4609, 4294901760
        %4611 = vmatmul.mubr.f32.gmra.mrb[0].mxu0 %v4610
        %v4612 = vpop.f32.mrb[0].mxu0
        %v4613 = vadd.f32 %v4472, %v4612
        %v4614 = vpop.f32.mrb[0].mxu0
        %v4615 = vadd.f32 %v4474, %v4614
        %4616 = vmatprep.mubr.f32.mxu0 0.0
        %v4617 = vand.u32 %v1372, 4294901760
        %v4618 = vsub.f32 %v1372, %v4617
        %v4619 = vand.u32 %v4618, 4294901760
        %4620 = vmatmul.mubr.f32.gmra.mrb[0].mxu0 %v4619
        %v4621 = vpop.f32.mrb[0].mxu0
        %v4622 = vadd.f32 %v4480, %v4621
        %v4623 = vpop.f32.mrb[0].mxu0
        %v4624 = vadd.f32 %v4482, %v4623
        %4625 = vmatprep.mubr.f32.mxu0 0.0
        %v4626 = vand.u32 %v1375, 4294901760
        %v4627 = vsub.f32 %v1375, %v4626
        %v4628 = vand.u32 %v4627, 4294901760
        %4629 = vmatmul.mubr.f32.gmra.mrb[0].mxu0 %v4628
        %v4630 = vpop.f32.mrb[0].mxu0
        %v4631 = vadd.f32 %v4488, %v4630
        %v4632 = vpop.f32.mrb[0].mxu0
        %v4633 = vadd.f32 %v4490, %v4632
        %4634 = vmatprep.mubr.f32.mxu0 0.0
        %v4635 = vand.u32 %v1378, 4294901760
        %v4636 = vsub.f32 %v1378, %v4635
        %v4637 = vand.u32 %v4636, 4294901760
        %4638 = vmatmul.mubr.f32.gmra.mrb[0].mxu0 %v4637
        %v4639 = vpop.f32.mrb[0].mxu0
        %v4640 = vadd.f32 %v4496, %v4639
        %v4641 = vpop.f32.mrb[0].mxu0
        %v4642 = vadd.f32 %v4498, %v4641
        %4643 = vmatprep.mubr.f32.mxu0 0.0
        %v4644 = vand.u32 %v1381, 4294901760
        %v4645 = vsub.f32 %v1381, %v4644
        %v4646 = vand.u32 %v4645, 4294901760
        %4647 = vmatmul.mubr.f32.gmra.mrb[0].mxu0 %v4646
        %v4648 = vpop.f32.mrb[0].mxu0
        %v4649 = vadd.f32 %v4504, %v4648
        %v4650 = vpop.f32.mrb[0].mxu0
        %v4651 = vadd.f32 %v4506, %v4650
        %4652 = vdwg.mxu0
        %v4653 = vand.u32 %v316, 4294901760
        %v4654 = vsub.f32 %v316, %v4653
        %v4655 = vand.u32 %v4654, 4294901760
        %4656 = vmatprep.subr.mxu0 %v4655
        %v4657 = vand.u32 %v315, 4294901760
        %v4658 = vsub.f32 %v315, %v4657
        %v4659 = vand.u32 %v4658, 4294901760
        %4660 = vmatpush1.msra.mxu0 %v4659
        %v4661 = vand.u32 %v324, 4294901760
        %v4662 = vsub.f32 %v324, %v4661
        %v4663 = vand.u32 %v4662, 4294901760
        %4664 = vmatprep.subr.mxu0 %v4663
        %v4665 = vand.u32 %v323, 4294901760
        %v4666 = vsub.f32 %v323, %v4665
        %v4667 = vand.u32 %v4666, 4294901760
        %4668 = vmatpush1.msra.mxu0 %v4667
        %v4669 = vand.u32 %v332, 4294901760
        %v4670 = vsub.f32 %v332, %v4669
        %v4671 = vand.u32 %v4670, 4294901760
        %4672 = vmatprep.subr.mxu0 %v4671
        %v4673 = vand.u32 %v331, 4294901760
        %v4674 = vsub.f32 %v331, %v4673
        %v4675 = vand.u32 %v4674, 4294901760
        %4676 = vmatpush1.msra.mxu0 %v4675
        %v4677 = vand.u32 %v340, 4294901760
        %v4678 = vsub.f32 %v340, %v4677
        %v4679 = vand.u32 %v4678, 4294901760
        %4680 = vmatprep.subr.mxu0 %v4679
        %v4681 = vand.u32 %v339, 4294901760
        %v4682 = vsub.f32 %v339, %v4681
        %v4683 = vand.u32 %v4682, 4294901760
        %4684 = vmatpush1.msra.mxu0 %v4683
        %4685 = vmatprep.subr.mxu0 0.0
        %4686 = vmatpush1.msra.mxu0 0.0
        %4687 = vmatprep.subr.mxu0 0.0
        %4688 = vmatpush1.msra.mxu0 0.0
        %4689 = vmatprep.subr.mxu0 0.0
        %4690 = vmatpush1.msra.mxu0 0.0
        %4691 = vmatprep.subr.mxu0 0.0
        %4692 = vmatpush1.msra.mxu0 0.0
        %4693 = vmatprep.subr.mxu0 0.0
        %4694 = vmatpush1.msra.mxu0 0.0
        %4695 = vmatprep.subr.mxu0 0.0
        %4696 = vmatpush1.msra.mxu0 0.0
        %4697 = vmatprep.subr.mxu0 0.0
        %4698 = vmatpush1.msra.mxu0 0.0
        %4699 = vmatprep.subr.mxu0 0.0
        %4700 = vmatpush1.msra.mxu0 0.0
        %4701 = vmatprep.subr.mxu0 0.0
        %4702 = vmatpush1.msra.mxu0 0.0
        %4703 = vmatprep.subr.mxu0 0.0
        %4704 = vmatpush1.msra.mxu0 0.0
        %4705 = vmatprep.subr.mxu0 0.0
        %4706 = vmatpush1.msra.mxu0 0.0
        %4707 = vmatprep.subr.mxu0 0.0
        %4708 = vmatpush1.msra.mxu0 0.0
        %4709 = vmatprep.subr.mxu0 0.0
        %4710 = vmatpush1.msra.mxu0 0.0
        %4711 = vmatprep.subr.mxu0 0.0
        %4712 = vmatpush1.msra.mxu0 0.0
        %4713 = vmatprep.subr.mxu0 0.0
        %4714 = vmatpush1.msra.mxu0 0.0
        %4715 = vmatprep.subr.mxu0 0.0
        %4716 = vmatpush1.msra.mxu0 0.0
        %4717 = vmatprep.subr.mxu0 0.0
        %4718 = vmatpush1.msra.mxu0 0.0
        %4719 = vmatprep.subr.mxu0 0.0
        %4720 = vmatpush1.msra.mxu0 0.0
        %4721 = vmatprep.subr.mxu0 0.0
        %4722 = vmatpush1.msra.mxu0 0.0
        %4723 = vmatprep.subr.mxu0 0.0
        %4724 = vmatpush1.msra.mxu0 0.0
        %4725 = vmatprep.subr.mxu0 0.0
        %4726 = vmatpush1.msra.mxu0 0.0
        %4727 = vmatprep.subr.mxu0 0.0
        %4728 = vmatpush1.msra.mxu0 0.0
        %4729 = vmatprep.subr.mxu0 0.0
        %4730 = vmatpush1.msra.mxu0 0.0
        %4731 = vmatprep.subr.mxu0 0.0
        %4732 = vmatpush1.msra.mxu0 0.0
        %4733 = vmatprep.subr.mxu0 0.0
        %4734 = vmatpush1.msra.mxu0 0.0
        %4735 = vmatprep.subr.mxu0 0.0
        %4736 = vmatpush1.msra.mxu0 0.0
        %4737 = vmatprep.subr.mxu0 0.0
        %4738 = vmatpush1.msra.mxu0 0.0
        %4739 = vmatprep.subr.mxu0 0.0
        %4740 = vmatpush1.msra.mxu0 0.0
        %4741 = vmatprep.mubr.f32.mxu0 0.0
        %v4742 = vand.u32 %v1360, 4294901760
        %4743 = vmatmul.mubr.f32.gmra.mrb[0].mxu0 %v4742
        %v4744 = vpop.f32.mrb[0].mxu0
        %v4745 = vadd.f32 %v4586, %v4744
        %v4746 = vpop.f32.mrb[0].mxu0
        %v4747 = vadd.f32 %v4588, %v4746
        %4748 = vmatprep.mubr.f32.mxu0 0.0
        %v4749 = vand.u32 %v1363, 4294901760
        %4750 = vmatmul.mubr.f32.gmra.mrb[0].mxu0 %v4749
        %v4751 = vpop.f32.mrb[0].mxu0
        %v4752 = vadd.f32 %v4595, %v4751
        %v4753 = vpop.f32.mrb[0].mxu0
        %v4754 = vadd.f32 %v4597, %v4753
        %4755 = vmatprep.mubr.f32.mxu0 0.0
        %v4756 = vand.u32 %v1366, 4294901760
        %4757 = vmatmul.mubr.f32.gmra.mrb[0].mxu0 %v4756
        %v4758 = vpop.f32.mrb[0].mxu0
        %v4759 = vadd.f32 %v4604, %v4758
        %v4760 = vpop.f32.mrb[0].mxu0
        %v4761 = vadd.f32 %v4606, %v4760
        %4762 = vmatprep.mubr.f32.mxu0 0.0
        %v4763 = vand.u32 %v1369, 4294901760
        %4764 = vmatmul.mubr.f32.gmra.mrb[0].mxu0 %v4763
        %v4765 = vpop.f32.mrb[0].mxu0
        %v4766 = vadd.f32 %v4613, %v4765
        %v4767 = vpop.f32.mrb[0].mxu0
        %v4768 = vadd.f32 %v4615, %v4767
        %4769 = vmatprep.mubr.f32.mxu0 0.0
        %v4770 = vand.u32 %v1372, 4294901760
        %4771 = vmatmul.mubr.f32.gmra.mrb[0].mxu0 %v4770
        %v4772 = vpop.f32.mrb[0].mxu0
        %v4773 = vadd.f32 %v4622, %v4772
        %v4774 = vpop.f32.mrb[0].mxu0
        %v4775 = vadd.f32 %v4624, %v4774
        %4776 = vmatprep.mubr.f32.mxu0 0.0
        %v4777 = vand.u32 %v1375, 4294901760
        %4778 = vmatmul.mubr.f32.gmra.mrb[0].mxu0 %v4777
        %v4779 = vpop.f32.mrb[0].mxu0
        %v4780 = vadd.f32 %v4631, %v4779
        %v4781 = vpop.f32.mrb[0].mxu0
        %v4782 = vadd.f32 %v4633, %v4781
        %4783 = vmatprep.mubr.f32.mxu0 0.0
        %v4784 = vand.u32 %v1378, 4294901760
        %4785 = vmatmul.mubr.f32.gmra.mrb[0].mxu0 %v4784
        %v4786 = vpop.f32.mrb[0].mxu0
        %v4787 = vadd.f32 %v4640, %v4786
        %v4788 = vpop.f32.mrb[0].mxu0
        %v4789 = vadd.f32 %v4642, %v4788
        %4790 = vmatprep.mubr.f32.mxu0 0.0
        %v4791 = vand.u32 %v1381, 4294901760
        %4792 = vmatmul.mubr.f32.gmra.mrb[0].mxu0 %v4791
        %v4793 = vpop.f32.mrb[0].mxu0
        %v4794 = vadd.f32 %v4649, %v4793
        %v4795 = vpop.f32.mrb[0].mxu0
        %v4796 = vadd.f32 %v4651, %v4795
        %4797 = vdwg.mxu0
        %v4798 = vand.u32 %v316, 4294901760
        %4799 = vmatprep.subr.mxu0 %v4798
        %v4800 = vand.u32 %v315, 4294901760
        %4801 = vmatpush1.msra.mxu0 %v4800
        %v4802 = vand.u32 %v324, 4294901760
        %4803 = vmatprep.subr.mxu0 %v4802
        %v4804 = vand.u32 %v323, 4294901760
        %4805 = vmatpush1.msra.mxu0 %v4804
        %v4806 = vand.u32 %v332, 4294901760
        %4807 = vmatprep.subr.mxu0 %v4806
        %v4808 = vand.u32 %v331, 4294901760
        %4809 = vmatpush1.msra.mxu0 %v4808
        %v4810 = vand.u32 %v340, 4294901760
        %4811 = vmatprep.subr.mxu0 %v4810
        %v4812 = vand.u32 %v339, 4294901760
        %4813 = vmatpush1.msra.mxu0 %v4812
        %4814 = vmatprep.subr.mxu0 0.0
        %4815 = vmatpush1.msra.mxu0 0.0
        %4816 = vmatprep.subr.mxu0 0.0
        %4817 = vmatpush1.msra.mxu0 0.0
        %4818 = vmatprep.subr.mxu0 0.0
        %4819 = vmatpush1.msra.mxu0 0.0
        %4820 = vmatprep.subr.mxu0 0.0
        %4821 = vmatpush1.msra.mxu0 0.0
        %4822 = vmatprep.subr.mxu0 0.0
        %4823 = vmatpush1.msra.mxu0 0.0
        %4824 = vmatprep.subr.mxu0 0.0
        %4825 = vmatpush1.msra.mxu0 0.0
        %4826 = vmatprep.subr.mxu0 0.0
        %4827 = vmatpush1.msra.mxu0 0.0
        %4828 = vmatprep.subr.mxu0 0.0
        %4829 = vmatpush1.msra.mxu0 0.0
        %4830 = vmatprep.subr.mxu0 0.0
        %4831 = vmatpush1.msra.mxu0 0.0
        %4832 = vmatprep.subr.mxu0 0.0
        %4833 = vmatpush1.msra.mxu0 0.0
        %4834 = vmatprep.subr.mxu0 0.0
        %4835 = vmatpush1.msra.mxu0 0.0
        %4836 = vmatprep.subr.mxu0 0.0
        %4837 = vmatpush1.msra.mxu0 0.0
        %4838 = vmatprep.subr.mxu0 0.0
        %4839 = vmatpush1.msra.mxu0 0.0
        %4840 = vmatprep.subr.mxu0 0.0
        %4841 = vmatpush1.msra.mxu0 0.0
        %4842 = vmatprep.subr.mxu0 0.0
        %4843 = vmatpush1.msra.mxu0 0.0
        %4844 = vmatprep.subr.mxu0 0.0
        %4845 = vmatpush1.msra.mxu0 0.0
        %4846 = vmatprep.subr.mxu0 0.0
        %4847 = vmatpush1.msra.mxu0 0.0
        %4848 = vmatprep.subr.mxu0 0.0
        %4849 = vmatpush1.msra.mxu0 0.0
        %4850 = vmatprep.subr.mxu0 0.0
        %4851 = vmatpush1.msra.mxu0 0.0
        %4852 = vmatprep.subr.mxu0 0.0
        %4853 = vmatpush1.msra.mxu0 0.0
        %4854 = vmatprep.subr.mxu0 0.0
        %4855 = vmatpush1.msra.mxu0 0.0
        %4856 = vmatprep.subr.mxu0 0.0
        %4857 = vmatpush1.msra.mxu0 0.0
        %4858 = vmatprep.subr.mxu0 0.0
        %4859 = vmatpush1.msra.mxu0 0.0
        %4860 = vmatprep.subr.mxu0 0.0
        %4861 = vmatpush1.msra.mxu0 0.0
        %4862 = vmatprep.subr.mxu0 0.0
        %4863 = vmatpush1.msra.mxu0 0.0
        %4864 = vmatprep.subr.mxu0 0.0
        %4865 = vmatpush1.msra.mxu0 0.0
        %4866 = vmatprep.subr.mxu0 0.0
        %4867 = vmatpush1.msra.mxu0 0.0
        %4868 = vmatprep.subr.mxu0 0.0
        %4869 = vmatpush1.msra.mxu0 0.0
        %4870 = vmatprep.mubr.f32.mxu0 0.0
        %v4871 = vand.u32 %v1360, 4294901760
        %4872 = vmatmul.mubr.f32.gmra.mrb[0].mxu0 %v4871
        %v4873 = vpop.f32.mrb[0].mxu0
        %v4874 = vadd.f32 %v4745, %v4873
        %v4875 = vpop.f32.mrb[0].mxu0
        %v4876 = vadd.f32 %v4747, %v4875
        %4877 = vmatprep.mubr.f32.mxu0 0.0
        %v4878 = vand.u32 %v1363, 4294901760
        %4879 = vmatmul.mubr.f32.gmra.mrb[0].mxu0 %v4878
        %v4880 = vpop.f32.mrb[0].mxu0
        %v4881 = vadd.f32 %v4752, %v4880
        %v4882 = vpop.f32.mrb[0].mxu0
        %v4883 = vadd.f32 %v4754, %v4882
        %4884 = vmatprep.mubr.f32.mxu0 0.0
        %v4885 = vand.u32 %v1366, 4294901760
        %4886 = vmatmul.mubr.f32.gmra.mrb[0].mxu0 %v4885
        %v4887 = vpop.f32.mrb[0].mxu0
        %v4888 = vadd.f32 %v4759, %v4887
        %v4889 = vpop.f32.mrb[0].mxu0
        %v4890 = vadd.f32 %v4761, %v4889
        %4891 = vmatprep.mubr.f32.mxu0 0.0
        %v4892 = vand.u32 %v1369, 4294901760
        %4893 = vmatmul.mubr.f32.gmra.mrb[0].mxu0 %v4892
        %v4894 = vpop.f32.mrb[0].mxu0
        %v4895 = vadd.f32 %v4766, %v4894
        %v4896 = vpop.f32.mrb[0].mxu0
        %v4897 = vadd.f32 %v4768, %v4896
        %4898 = vmatprep.mubr.f32.mxu0 0.0
        %v4899 = vand.u32 %v1372, 4294901760
        %4900 = vmatmul.mubr.f32.gmra.mrb[0].mxu0 %v4899
        %v4901 = vpop.f32.mrb[0].mxu0
        %v4902 = vadd.f32 %v4773, %v4901
        %v4903 = vpop.f32.mrb[0].mxu0
        %v4904 = vadd.f32 %v4775, %v4903
        %4905 = vmatprep.mubr.f32.mxu0 0.0
        %v4906 = vand.u32 %v1375, 4294901760
        %4907 = vmatmul.mubr.f32.gmra.mrb[0].mxu0 %v4906
        %v4908 = vpop.f32.mrb[0].mxu0
        %v4909 = vadd.f32 %v4780, %v4908
        %v4910 = vpop.f32.mrb[0].mxu0
        %v4911 = vadd.f32 %v4782, %v4910
        %4912 = vmatprep.mubr.f32.mxu0 0.0
        %v4913 = vand.u32 %v1378, 4294901760
        %4914 = vmatmul.mubr.f32.gmra.mrb[0].mxu0 %v4913
        %v4915 = vpop.f32.mrb[0].mxu0
        %v4916 = vadd.f32 %v4787, %v4915
        %v4917 = vpop.f32.mrb[0].mxu0
        %v4918 = vadd.f32 %v4789, %v4917
        %4919 = vmatprep.mubr.f32.mxu0 0.0
        %v4920 = vand.u32 %v1381, 4294901760
        %4921 = vmatmul.mubr.f32.gmra.mrb[0].mxu0 %v4920
        %v4922 = vpop.f32.mrb[0].mxu0
        %v4923 = vadd.f32 %v4794, %v4922
        %v4924 = vpop.f32.mrb[0].mxu0
        %v4925 = vadd.f32 %v4796, %v4924
        %4926 = vdwg.mxu0
        %4927 = vst [vmem:[%s269] sm:$0xff] %v2216
        %4928 = vst [vmem:[%s269 + $0x8] sm:$0xff] %v2218
        %4929 = vst [vmem:[%s269 + $0x10] sm:$0xff] %v3102
        %4930 = vst [vmem:[%s269 + $0x18] sm:$0xff] %v3104
        %4931 = vst [vmem:[%s269 + $0x20] sm:$0xff] %v3988
        %4932 = vst [vmem:[%s269 + $0x28] sm:$0xff] %v3990
        %4933 = vst [vmem:[%s269 + $0x30] sm:$0xff] %v4874
        %4934 = vst [vmem:[%s269 + $0x38] sm:$0xff] %v4876
        %4935 = vst [vmem:[%s269 + $0x40] sm:$0xff] %v2223
        %4936 = vst [vmem:[%s269 + $0x48] sm:$0xff] %v2225
        %4937 = vst [vmem:[%s269 + $0x50] sm:$0xff] %v3109
        %4938 = vst [vmem:[%s269 + $0x58] sm:$0xff] %v3111
        %4939 = vst [vmem:[%s269 + $0x60] sm:$0xff] %v3995
        %4940 = vst [vmem:[%s269 + $0x68] sm:$0xff] %v3997
        %4941 = vst [vmem:[%s269 + $0x70] sm:$0xff] %v4881
        %4942 = vst [vmem:[%s269 + $0x78] sm:$0xff] %v4883
        %4943 = vst [vmem:[%s269 + $0x80] sm:$0xff] %v2230
        %4944 = vst [vmem:[%s269 + $0x88] sm:$0xff] %v2232
        %4945 = vst [vmem:[%s269 + $0x90] sm:$0xff] %v3116
        %4946 = vst [vmem:[%s269 + $0x98] sm:$0xff] %v3118
        %4947 = vst [vmem:[%s269 + $0xa0] sm:$0xff] %v4002
        %4948 = vst [vmem:[%s269 + $0xa8] sm:$0xff] %v4004
        %4949 = vst [vmem:[%s269 + $0xb0] sm:$0xff] %v4888
        %4950 = vst [vmem:[%s269 + $0xb8] sm:$0xff] %v4890
        %4951 = vst [vmem:[%s269 + $0xc0] sm:$0xff] %v2237
        %4952 = vst [vmem:[%s269 + $0xc8] sm:$0xff] %v2239
        %4953 = vst [vmem:[%s269 + $0xd0] sm:$0xff] %v3123
        %4954 = vst [vmem:[%s269 + $0xd8] sm:$0xff] %v3125
        %4955 = vst [vmem:[%s269 + $0xe0] sm:$0xff] %v4009
        %4956 = vst [vmem:[%s269 + $0xe8] sm:$0xff] %v4011
        %4957 = vst [vmem:[%s269 + $0xf0] sm:$0xff] %v4895
        %4958 = vst [vmem:[%s269 + $0xf8] sm:$0xff] %v4897
        %4959 = vst [vmem:[%s269 + $0x100] sm:$0xff] %v2244
        %4960 = vst [vmem:[%s269 + $0x108] sm:$0xff] %v2246
        %4961 = vst [vmem:[%s269 + $0x110] sm:$0xff] %v3130
        %4962 = vst [vmem:[%s269 + $0x118] sm:$0xff] %v3132
        %4963 = vst [vmem:[%s269 + $0x120] sm:$0xff] %v4016
        %4964 = vst [vmem:[%s269 + $0x128] sm:$0xff] %v4018
        %4965 = vst [vmem:[%s269 + $0x130] sm:$0xff] %v4902
        %4966 = vst [vmem:[%s269 + $0x138] sm:$0xff] %v4904
        %4967 = vst [vmem:[%s269 + $0x140] sm:$0xff] %v2251
        %4968 = vst [vmem:[%s269 + $0x148] sm:$0xff] %v2253
        %4969 = vst [vmem:[%s269 + $0x150] sm:$0xff] %v3137
        %4970 = vst [vmem:[%s269 + $0x158] sm:$0xff] %v3139
        %4971 = vst [vmem:[%s269 + $0x160] sm:$0xff] %v4023
        %4972 = vst [vmem:[%s269 + $0x168] sm:$0xff] %v4025
        %4973 = vst [vmem:[%s269 + $0x170] sm:$0xff] %v4909
        %4974 = vst [vmem:[%s269 + $0x178] sm:$0xff] %v4911
        %4975 = vst [vmem:[%s269 + $0x180] sm:$0xff] %v2258
        %4976 = vst [vmem:[%s269 + $0x188] sm:$0xff] %v2260
        %4977 = vst [vmem:[%s269 + $0x190] sm:$0xff] %v3144
        %4978 = vst [vmem:[%s269 + $0x198] sm:$0xff] %v3146
        %4979 = vst [vmem:[%s269 + $0x1a0] sm:$0xff] %v4030
        %4980 = vst [vmem:[%s269 + $0x1a8] sm:$0xff] %v4032
        %4981 = vst [vmem:[%s269 + $0x1b0] sm:$0xff] %v4916
        %4982 = vst [vmem:[%s269 + $0x1b8] sm:$0xff] %v4918
        %4983 = vst [vmem:[%s269 + $0x1c0] sm:$0xff] %v2265
        %4984 = vst [vmem:[%s269 + $0x1c8] sm:$0xff] %v2267
        %4985 = vst [vmem:[%s269 + $0x1d0] sm:$0xff] %v3151
        %4986 = vst [vmem:[%s269 + $0x1d8] sm:$0xff] %v3153
        %4987 = vst [vmem:[%s269 + $0x1e0] sm:$0xff] %v4037
        %4988 = vst [vmem:[%s269 + $0x1e8] sm:$0xff] %v4039
        %4989 = vst [vmem:[%s269 + $0x1f0] sm:$0xff] %v4923
        %4990 = vst [vmem:[%s269 + $0x1f8] sm:$0xff] %v4925
        %s4991 = smul.u32 8, %s21
        %p4992 = scmp.lt.s32.totalorder %s4991, 15
        %s4993 = scalar_select %p4992, %s4991, 15
        %s4994 = smul.addr %s4993, 8
        %s4995 = scalar_lea.vmem %s5, %s4994
        %s4996 = sand.u32 %s170, 1
        %s4997 = scalar_lea.sflag [#allocation3], %s4996
        %s4998 = sand.u32 %s170, 1
        %s4999 = smul.addr %s4998, 512
        %s5000 = scalar_lea.vmem [#allocation2], %s4999
        // Predicated region
        $region41: #{tpu_custom_call.1} parent=39 // pred_check
          %p5001 = pneg %p154
        $region42: #{tpu_custom_call.1} parent=39 // pred_check_branch
          %5003 = sbr.rel (%p5001) target = $region44
        $region43: #{tpu_custom_call.1} parent=39 // pred_region
          %s5004 = smul.u32 8, %s21
        $region44: #{tpu_custom_call.1} parent=39 // pred_fallthru
          _
        // Predicated region
        $region45: #{tpu_custom_call.1} parent=39 // pred_check
          %p5005 = pneg %p180
        $region46: #{tpu_custom_call.1} parent=39 // pred_check_branch
          %5007 = sbr.rel (%p5005) target = $region48
        $region47: #{tpu_custom_call.1} parent=39 // pred_region
          %s5008 = smul.u32 8, %s21
          %s5010 = ssub.s32 8192, 8192
          %5011 = vsyncadd %s4997, %s5010
          %s5012 = smul.addr %s5008, 8
          %s5013 = smul.addr %s5012, 128
          %s5014 = scalar_lea.hbm %s6, %s5013
          %s5015 = sshll.u32 %s5000, 4
          %s5016 = int_to_ptr.vmem [resolvable:$true] %s5015
          %5021 = dma.vmem_to_hbm [thread:$0]  %s5016, 8192, %s5014, %s4997, 1024, 1024, 64
        $region48: #{tpu_custom_call.1} parent=39 // pred_fallthru
          _
      $region40: #{tpu_custom_call.1} parent=5 // pred_fallthru
        _
      %p5022 = scmp.le.s32.totalorder 2, %s16
      // Predicated region
      $region49: #{tpu_custom_call.1} parent=5 // pred_check
        %p5023 = pneg %p5022
      $region50: #{tpu_custom_call.1} parent=5 // pred_check_branch
        %5025 = sbr.rel (%p5023) target = $region52
      $region51: #{tpu_custom_call.1} parent=5 // pred_region
        %s5026 = ssub.s32 %s16, 2
        // Predicated region
        $region53: #{tpu_custom_call.1} parent=51 // pred_check
          %p5027 = pneg %p160
        $region54: #{tpu_custom_call.1} parent=51 // pred_check_branch
          %5029 = sbr.rel (%p5027) target = $region56
        $region55: #{tpu_custom_call.1} parent=51 // pred_region
          %s5030 = smul.u32 8, %s22
          %p5031 = scmp.lt.s32.totalorder %s5030, 15
          %s5032 = scalar_select %p5031, %s5030, 15
          %s5033 = smul.addr %s5032, 8
          %s5034 = scalar_lea.vmem %s5, %s5033
        $region56: #{tpu_custom_call.1} parent=51 // pred_fallthru
          _
        // Predicated region
        $region57: #{tpu_custom_call.1} parent=51 // pred_check
          %p5035 = pneg %p186
        $region58: #{tpu_custom_call.1} parent=51 // pred_check_branch
          %5037 = sbr.rel (%p5035) target = $region60
        $region59: #{tpu_custom_call.1} parent=51 // pred_region
          %s5038 = sand.u32 %s171, 1
          %s5039 = scalar_lea.sflag [#allocation3], %s5038
          %s5040 = sand.u32 %s171, 1
          %s5041 = smul.addr %s5040, 512
          %s5042 = scalar_lea.vmem [#allocation2], %s5041
          %5043 = dma.done %s5039, 8192
        $region60: #{tpu_custom_call.1} parent=51 // pred_fallthru
          _
      $region52: #{tpu_custom_call.1} parent=5 // pred_fallthru
        _
    $region6: #{tpu_custom_call.1} parent=1 // loop_footer
      %s20 = sadd.s32 1, %s16
    $region7: #{tpu_custom_call.1} parent=1 // loop_footer_branch
      %15 = sbr.rel target = $region3
    $region8: #{tpu_custom_call.1} parent=1 // loop_exit
      _
    %5044 = vsyncpa [#allocation3], 1
    %s5045 = scalar_lea.sflag [#allocation3], 1
    %5046 = vsyncpa %s5045, 1

</llo_original>
